<compile_context>
chip_gen: v6e
topology: v6e:2x2x1
jax: 0.10.0
libtpu: 0.0.40
codegen_flags: <defaults>
</compile_context>

<pallas_src>
import jax
import jax.numpy as jnp
from jax.experimental import pallas as pl
from jax.experimental.pallas import tpu as pltpu

# ---- model hyperparameters ----
LATENT_DIM = 32
CHANNELS = 4
IMG_SIZE = 16
IMG_FLAT = CHANNELS * IMG_SIZE * IMG_SIZE  # 1024
HIDDEN = (128, 256, 512, 1024)
BN_EPS = 0.8
LRELU_SLOPE = 0.2

_DIMS = (LATENT_DIM,) + HIDDEN + (IMG_FLAT,)


def _aux_layout():
    """Packed layout of all (1, F) params: b1 | b2 g2 be2 | b3 g3 be3 | b4 g4 be4 | b5.

    Every F is a multiple of 128, so every offset is lane-aligned.
    """
    offsets = {}
    off = 0
    for i in range(len(_DIMS) - 1):
        fan_out = _DIMS[i + 1]
        names = [f"b{i + 1}"]
        if 0 < i < len(_DIMS) - 2:          # BN on hidden blocks 2..4 only
            names += [f"g{i + 1}", f"be{i + 1}"]
        for n in names:
            offsets[n] = (off, fan_out)
            off += fan_out
    return offsets, off


_AUX_OFF, AUX_TOTAL = _aux_layout()  # AUX_TOTAL = 6528 = 51 * 128


def _leaky_relu(x):
    return jnp.where(x > 0, x, LRELU_SLOPE * x)


def _batchnorm_train(x, gamma, beta):
    # x: (B, F) f32; gamma/beta: (1, F) f32. Biased variance, training-mode BN.
    mean = jnp.mean(x, axis=0, keepdims=True)
    diff = x - mean
    var = jnp.mean(diff * diff, axis=0, keepdims=True)
    return diff * jax.lax.rsqrt(var + BN_EPS) * gamma + beta


def _aux(aux_ref, name):
    off, size = _AUX_OFF[name]
    # Static, 128-lane-aligned slice of the packed parameter vector.
    return aux_ref[:, off:off + size]   # (1, size) f32


def generator_kernel(z_ref, w1_ref, w2_ref, w3_ref, w4_ref, w5_ref, aux_ref, out_ref):
    def mxu(x_f32, w_ref):
        # bf16 x bf16 MXU matmul, f32 accumulation.
        return jnp.dot(x_f32.astype(jnp.bfloat16), w_ref[...],
                       preferred_element_type=jnp.float32)

    # block 1: Linear -> LeakyReLU (no BN)
    h = _leaky_relu(mxu(z_ref[...], w1_ref) + _aux(aux_ref, "b1"))

    # block 2: Linear -> BN(train) -> LeakyReLU
    h = mxu(h, w2_ref) + _aux(aux_ref, "b2")
    h = _leaky_relu(_batchnorm_train(h, _aux(aux_ref, "g2"), _aux(aux_ref, "be2")))

    # block 3
    h = mxu(h, w3_ref) + _aux(aux_ref, "b3")
    h = _leaky_relu(_batchnorm_train(h, _aux(aux_ref, "g3"), _aux(aux_ref, "be3")))

    # block 4
    h = mxu(h, w4_ref) + _aux(aux_ref, "b4")
    h = _leaky_relu(_batchnorm_train(h, _aux(aux_ref, "g4"), _aux(aux_ref, "be4")))

    # head: Linear -> Tanh (EUP, f32)
    h = mxu(h, w5_ref) + _aux(aux_ref, "b5")
    out_ref[...] = jnp.tanh(h)


def init_params(key):
    """Parameters matching nn.Linear / nn.BatchNorm1d shapes & default-style init.

    Weights are (in_feat, out_feat) bfloat16 (kernel computes x @ W on the MXU).
    All 1-D params are packed into one (1, AUX_TOTAL) float32 array.
    """
    weights = []
    aux_parts = []
    for i in range(len(_DIMS) - 1):
        fan_in, fan_out = _DIMS[i], _DIMS[i + 1]
        key, kw, kb = jax.random.split(key, 3)
        bound = 1.0 / (fan_in ** 0.5)
        w = jax.random.uniform(kw, (fan_in, fan_out), jnp.float32, -bound, bound)
        b = jax.random.uniform(kb, (1, fan_out), jnp.float32, -bound, bound)
        weights.append(w.astype(jnp.bfloat16))
        aux_parts.append(b)
        if 0 < i < len(_DIMS) - 2:
            aux_parts.append(jnp.ones((1, fan_out), jnp.float32))    # gamma
            aux_parts.append(jnp.zeros((1, fan_out), jnp.float32))   # beta
    aux = jnp.concatenate(aux_parts, axis=1)
    assert aux.shape == (1, AUX_TOTAL)
    return weights, aux


def generator_forward(z, weights, aux):
    """z: (B, LATENT_DIM) float32 -> image (B, CHANNELS, IMG_SIZE, IMG_SIZE)."""
    B = z.shape[0]
    vmem = pl.BlockSpec(memory_space=pltpu.MemorySpace.VMEM)
    n_in = 1 + len(weights) + 1  # z, w1..w5, packed aux
    flat = pl.pallas_call(
        generator_kernel,
        out_shape=jax.ShapeDtypeStruct((B, IMG_FLAT), jnp.float32),
        in_specs=[vmem] * n_in,
        out_specs=vmem,
        compiler_params=pltpu.CompilerParams(vmem_limit_bytes=16 << 20),
    )(z, *weights, aux)
    # Lane-dense (B, 1024) store inside the kernel; NCHW reshape done outside.
    return flat.reshape(B, CHANNELS, IMG_SIZE, IMG_SIZE)


if __name__ == "__main__":
    key = jax.random.PRNGKey(0)
    key_p, key_z = jax.random.split(key)
    weights, aux = init_params(key_p)

    batch = 2
    z = jax.random.normal(key_z, (batch, LATENT_DIM), dtype=jnp.float32)

    img = generator_forward(z, weights, aux)
    img = jax.block_until_ready(img)

    assert img.shape == (batch, CHANNELS, IMG_SIZE, IMG_SIZE), img.shape
    assert img.dtype == jnp.float32
    assert bool(jnp.all(jnp.isfinite(img)))
    assert bool(jnp.all(jnp.abs(img) <= 1.0))  # tanh output range

    print("KERNEL_OK")
</pallas_src>

<mosaic_0001>
module attributes {stable_mosaic.version = 11 : i64} {
  func.func @generator_kernel(%arg0: memref<2x32xf32, #tpu.memory_space<vmem>>, %arg1: memref<32x128xbf16, #tpu.memory_space<vmem>>, %arg2: memref<128x256xbf16, #tpu.memory_space<vmem>>, %arg3: memref<256x512xbf16, #tpu.memory_space<vmem>>, %arg4: memref<512x1024xbf16, #tpu.memory_space<vmem>>, %arg5: memref<1024x1024xbf16, #tpu.memory_space<vmem>>, %arg6: memref<1x6528xf32, #tpu.memory_space<vmem>>, %arg7: memref<2x1024xf32, #tpu.memory_space<vmem>>) attributes {dimension_semantics = [], scalar_prefetch = 0 : i64, scratch_operands = 0 : i64, tpu.core_type = #tpu.core_type<tc>} {
    %c0 = arith.constant 0 : index
    %c0_0 = arith.constant 0 : index
    %0 = vector.load %arg0[%c0, %c0_0] : memref<2x32xf32, #tpu.memory_space<vmem>>, vector<2x32xf32>
    %1 = arith.truncf %0 : vector<2x32xf32> to vector<2x32xbf16>
    %c0_1 = arith.constant 0 : index
    %c0_2 = arith.constant 0 : index
    %2 = vector.load %arg1[%c0_1, %c0_2] : memref<32x128xbf16, #tpu.memory_space<vmem>>, vector<32x128xbf16>
    %cst = arith.constant dense<0.000000e+00> : vector<2x128xf32>
    %3 = tpu.matmul %1, %2, %cst {dimension_numbers = #tpu.dot_dimension_numbers<[1], [0], [0], [1], [0, 0, 1, 1], [], []>} : vector<2x32xbf16>, vector<32x128xbf16>, vector<2x128xf32> -> vector<2x128xf32>
    %c0_3 = arith.constant 0 : index
    %c0_4 = arith.constant 0 : index
    %4 = vector.load %arg6[%c0_3, %c0_4] : memref<1x6528xf32, #tpu.memory_space<vmem>>, vector<1x128xf32>
    %5 = vector.broadcast %4 : vector<1x128xf32> to vector<2x128xf32>
    %6 = arith.addf %3, %5 : vector<2x128xf32>
    %cst_5 = arith.constant 0.000000e+00 : f32
    %7 = vector.broadcast %cst_5 : f32 to vector<2x128xf32>
    %8 = arith.cmpf ogt, %6, %7 : vector<2x128xf32>
    %cst_6 = arith.constant 2.000000e-01 : f32
    %9 = vector.broadcast %cst_6 : f32 to vector<2x128xf32>
    %10 = arith.mulf %9, %6 : vector<2x128xf32>
    %11 = arith.select %8, %6, %10 : vector<2x128xi1>, vector<2x128xf32>
    %12 = arith.truncf %11 : vector<2x128xf32> to vector<2x128xbf16>
    %c0_7 = arith.constant 0 : index
    %c0_8 = arith.constant 0 : index
    %13 = vector.load %arg2[%c0_7, %c0_8] : memref<128x256xbf16, #tpu.memory_space<vmem>>, vector<128x256xbf16>
    %cst_9 = arith.constant dense<0.000000e+00> : vector<2x256xf32>
    %14 = tpu.matmul %12, %13, %cst_9 {dimension_numbers = #tpu.dot_dimension_numbers<[1], [0], [0], [1], [0, 0, 1, 1], [], []>} : vector<2x128xbf16>, vector<128x256xbf16>, vector<2x256xf32> -> vector<2x256xf32>
    %c0_10 = arith.constant 0 : index
    %c128 = arith.constant 128 : index
    %15 = vector.load %arg6[%c0_10, %c128] : memref<1x6528xf32, #tpu.memory_space<vmem>>, vector<1x256xf32>
    %16 = vector.broadcast %15 : vector<1x256xf32> to vector<2x256xf32>
    %17 = arith.addf %14, %16 : vector<2x256xf32>
    %c0_11 = arith.constant 0 : index
    %c384 = arith.constant 384 : index
    %18 = vector.load %arg6[%c0_11, %c384] : memref<1x6528xf32, #tpu.memory_space<vmem>>, vector<1x256xf32>
    %c0_12 = arith.constant 0 : index
    %c640 = arith.constant 640 : index
    %19 = vector.load %arg6[%c0_12, %c640] : memref<1x6528xf32, #tpu.memory_space<vmem>>, vector<1x256xf32>
    %cst_13 = arith.constant dense<0.000000e+00> : vector<256xf32>
    %20 = vector.multi_reduction <add>, %17, %cst_13 [0] : vector<2x256xf32> to vector<256xf32>
    %21 = vector.shape_cast %20 : vector<256xf32> to vector<1x256xf32>
    %cst_14 = arith.constant 2.000000e+00 : f32
    %22 = vector.broadcast %cst_14 : f32 to vector<1x256xf32>
    %23 = arith.divf %21, %22 : vector<1x256xf32>
    %24 = vector.broadcast %23 : vector<1x256xf32> to vector<2x256xf32>
    %25 = arith.subf %17, %24 : vector<2x256xf32>
    %26 = arith.mulf %25, %25 : vector<2x256xf32>
    %cst_15 = arith.constant dense<0.000000e+00> : vector<256xf32>
    %27 = vector.multi_reduction <add>, %26, %cst_15 [0] : vector<2x256xf32> to vector<256xf32>
    %28 = vector.shape_cast %27 : vector<256xf32> to vector<1x256xf32>
    %cst_16 = arith.constant 2.000000e+00 : f32
    %29 = vector.broadcast %cst_16 : f32 to vector<1x256xf32>
    %30 = arith.divf %28, %29 : vector<1x256xf32>
    %cst_17 = arith.constant 8.000000e-01 : f32
    %31 = vector.broadcast %cst_17 : f32 to vector<1x256xf32>
    %32 = arith.addf %30, %31 : vector<1x256xf32>
    %33 = math.rsqrt %32 : vector<1x256xf32>
    %34 = vector.broadcast %33 : vector<1x256xf32> to vector<2x256xf32>
    %35 = arith.mulf %25, %34 : vector<2x256xf32>
    %36 = vector.broadcast %18 : vector<1x256xf32> to vector<2x256xf32>
    %37 = arith.mulf %35, %36 : vector<2x256xf32>
    %38 = vector.broadcast %19 : vector<1x256xf32> to vector<2x256xf32>
    %39 = arith.addf %37, %38 : vector<2x256xf32>
    %cst_18 = arith.constant 0.000000e+00 : f32
    %40 = vector.broadcast %cst_18 : f32 to vector<2x256xf32>
    %41 = arith.cmpf ogt, %39, %40 : vector<2x256xf32>
    %cst_19 = arith.constant 2.000000e-01 : f32
    %42 = vector.broadcast %cst_19 : f32 to vector<2x256xf32>
    %43 = arith.mulf %42, %39 : vector<2x256xf32>
    %44 = arith.select %41, %39, %43 : vector<2x256xi1>, vector<2x256xf32>
    %45 = arith.truncf %44 : vector<2x256xf32> to vector<2x256xbf16>
    %c0_20 = arith.constant 0 : index
    %c0_21 = arith.constant 0 : index
    %46 = vector.load %arg3[%c0_20, %c0_21] : memref<256x512xbf16, #tpu.memory_space<vmem>>, vector<256x512xbf16>
    %cst_22 = arith.constant dense<0.000000e+00> : vector<2x512xf32>
    %47 = tpu.matmul %45, %46, %cst_22 {dimension_numbers = #tpu.dot_dimension_numbers<[1], [0], [0], [1], [0, 0, 1, 1], [], []>} : vector<2x256xbf16>, vector<256x512xbf16>, vector<2x512xf32> -> vector<2x512xf32>
    %c0_23 = arith.constant 0 : index
    %c896 = arith.constant 896 : index
    %48 = vector.load %arg6[%c0_23, %c896] : memref<1x6528xf32, #tpu.memory_space<vmem>>, vector<1x512xf32>
    %49 = vector.broadcast %48 : vector<1x512xf32> to vector<2x512xf32>
    %50 = arith.addf %47, %49 : vector<2x512xf32>
    %c0_24 = arith.constant 0 : index
    %c1408 = arith.constant 1408 : index
    %51 = vector.load %arg6[%c0_24, %c1408] : memref<1x6528xf32, #tpu.memory_space<vmem>>, vector<1x512xf32>
    %c0_25 = arith.constant 0 : index
    %c1920 = arith.constant 1920 : index
    %52 = vector.load %arg6[%c0_25, %c1920] : memref<1x6528xf32, #tpu.memory_space<vmem>>, vector<1x512xf32>
    %cst_26 = arith.constant dense<0.000000e+00> : vector<512xf32>
    %53 = vector.multi_reduction <add>, %50, %cst_26 [0] : vector<2x512xf32> to vector<512xf32>
    %54 = vector.shape_cast %53 : vector<512xf32> to vector<1x512xf32>
    %cst_27 = arith.constant 2.000000e+00 : f32
    %55 = vector.broadcast %cst_27 : f32 to vector<1x512xf32>
    %56 = arith.divf %54, %55 : vector<1x512xf32>
    %57 = vector.broadcast %56 : vector<1x512xf32> to vector<2x512xf32>
    %58 = arith.subf %50, %57 : vector<2x512xf32>
    %59 = arith.mulf %58, %58 : vector<2x512xf32>
    %cst_28 = arith.constant dense<0.000000e+00> : vector<512xf32>
    %60 = vector.multi_reduction <add>, %59, %cst_28 [0] : vector<2x512xf32> to vector<512xf32>
    %61 = vector.shape_cast %60 : vector<512xf32> to vector<1x512xf32>
    %cst_29 = arith.constant 2.000000e+00 : f32
    %62 = vector.broadcast %cst_29 : f32 to vector<1x512xf32>
    %63 = arith.divf %61, %62 : vector<1x512xf32>
    %cst_30 = arith.constant 8.000000e-01 : f32
    %64 = vector.broadcast %cst_30 : f32 to vector<1x512xf32>
    %65 = arith.addf %63, %64 : vector<1x512xf32>
    %66 = math.rsqrt %65 : vector<1x512xf32>
    %67 = vector.broadcast %66 : vector<1x512xf32> to vector<2x512xf32>
    %68 = arith.mulf %58, %67 : vector<2x512xf32>
    %69 = vector.broadcast %51 : vector<1x512xf32> to vector<2x512xf32>
    %70 = arith.mulf %68, %69 : vector<2x512xf32>
    %71 = vector.broadcast %52 : vector<1x512xf32> to vector<2x512xf32>
    %72 = arith.addf %70, %71 : vector<2x512xf32>
    %cst_31 = arith.constant 0.000000e+00 : f32
    %73 = vector.broadcast %cst_31 : f32 to vector<2x512xf32>
    %74 = arith.cmpf ogt, %72, %73 : vector<2x512xf32>
    %cst_32 = arith.constant 2.000000e-01 : f32
    %75 = vector.broadcast %cst_32 : f32 to vector<2x512xf32>
    %76 = arith.mulf %75, %72 : vector<2x512xf32>
    %77 = arith.select %74, %72, %76 : vector<2x512xi1>, vector<2x512xf32>
    %78 = arith.truncf %77 : vector<2x512xf32> to vector<2x512xbf16>
    %c0_33 = arith.constant 0 : index
    %c0_34 = arith.constant 0 : index
    %79 = vector.load %arg4[%c0_33, %c0_34] : memref<512x1024xbf16, #tpu.memory_space<vmem>>, vector<512x1024xbf16>
    %cst_35 = arith.constant dense<0.000000e+00> : vector<2x1024xf32>
    %80 = tpu.matmul %78, %79, %cst_35 {dimension_numbers = #tpu.dot_dimension_numbers<[1], [0], [0], [1], [0, 0, 1, 1], [], []>} : vector<2x512xbf16>, vector<512x1024xbf16>, vector<2x1024xf32> -> vector<2x1024xf32>
    %c0_36 = arith.constant 0 : index
    %c2432 = arith.constant 2432 : index
    %81 = vector.load %arg6[%c0_36, %c2432] : memref<1x6528xf32, #tpu.memory_space<vmem>>, vector<1x1024xf32>
    %82 = vector.broadcast %81 : vector<1x1024xf32> to vector<2x1024xf32>
    %83 = arith.addf %80, %82 : vector<2x1024xf32>
    %c0_37 = arith.constant 0 : index
    %c3456 = arith.constant 3456 : index
    %84 = vector.load %arg6[%c0_37, %c3456] : memref<1x6528xf32, #tpu.memory_space<vmem>>, vector<1x1024xf32>
    %c0_38 = arith.constant 0 : index
    %c4480 = arith.constant 4480 : index
    %85 = vector.load %arg6[%c0_38, %c4480] : memref<1x6528xf32, #tpu.memory_space<vmem>>, vector<1x1024xf32>
    %cst_39 = arith.constant dense<0.000000e+00> : vector<1024xf32>
    %86 = vector.multi_reduction <add>, %83, %cst_39 [0] : vector<2x1024xf32> to vector<1024xf32>
    %87 = vector.shape_cast %86 : vector<1024xf32> to vector<1x1024xf32>
    %cst_40 = arith.constant 2.000000e+00 : f32
    %88 = vector.broadcast %cst_40 : f32 to vector<1x1024xf32>
    %89 = arith.divf %87, %88 : vector<1x1024xf32>
    %90 = vector.broadcast %89 : vector<1x1024xf32> to vector<2x1024xf32>
    %91 = arith.subf %83, %90 : vector<2x1024xf32>
    %92 = arith.mulf %91, %91 : vector<2x1024xf32>
    %cst_41 = arith.constant dense<0.000000e+00> : vector<1024xf32>
    %93 = vector.multi_reduction <add>, %92, %cst_41 [0] : vector<2x1024xf32> to vector<1024xf32>
    %94 = vector.shape_cast %93 : vector<1024xf32> to vector<1x1024xf32>
    %cst_42 = arith.constant 2.000000e+00 : f32
    %95 = vector.broadcast %cst_42 : f32 to vector<1x1024xf32>
    %96 = arith.divf %94, %95 : vector<1x1024xf32>
    %cst_43 = arith.constant 8.000000e-01 : f32
    %97 = vector.broadcast %cst_43 : f32 to vector<1x1024xf32>
    %98 = arith.addf %96, %97 : vector<1x1024xf32>
    %99 = math.rsqrt %98 : vector<1x1024xf32>
    %100 = vector.broadcast %99 : vector<1x1024xf32> to vector<2x1024xf32>
    %101 = arith.mulf %91, %100 : vector<2x1024xf32>
    %102 = vector.broadcast %84 : vector<1x1024xf32> to vector<2x1024xf32>
    %103 = arith.mulf %101, %102 : vector<2x1024xf32>
    %104 = vector.broadcast %85 : vector<1x1024xf32> to vector<2x1024xf32>
    %105 = arith.addf %103, %104 : vector<2x1024xf32>
    %cst_44 = arith.constant 0.000000e+00 : f32
    %106 = vector.broadcast %cst_44 : f32 to vector<2x1024xf32>
    %107 = arith.cmpf ogt, %105, %106 : vector<2x1024xf32>
    %cst_45 = arith.constant 2.000000e-01 : f32
    %108 = vector.broadcast %cst_45 : f32 to vector<2x1024xf32>
    %109 = arith.mulf %108, %105 : vector<2x1024xf32>
    %110 = arith.select %107, %105, %109 : vector<2x1024xi1>, vector<2x1024xf32>
    %111 = arith.truncf %110 : vector<2x1024xf32> to vector<2x1024xbf16>
    %c0_46 = arith.constant 0 : index
    %c0_47 = arith.constant 0 : index
    %112 = vector.load %arg5[%c0_46, %c0_47] : memref<1024x1024xbf16, #tpu.memory_space<vmem>>, vector<1024x1024xbf16>
    %cst_48 = arith.constant dense<0.000000e+00> : vector<2x1024xf32>
    %113 = tpu.matmul %111, %112, %cst_48 {dimension_numbers = #tpu.dot_dimension_numbers<[1], [0], [0], [1], [0, 0, 1, 1], [], []>} : vector<2x1024xbf16>, vector<1024x1024xbf16>, vector<2x1024xf32> -> vector<2x1024xf32>
    %c0_49 = arith.constant 0 : index
    %c5504 = arith.constant 5504 : index
    %114 = vector.load %arg6[%c0_49, %c5504] : memref<1x6528xf32, #tpu.memory_space<vmem>>, vector<1x1024xf32>
    %115 = vector.broadcast %114 : vector<1x1024xf32> to vector<2x1024xf32>
    %116 = arith.addf %113, %115 : vector<2x1024xf32>
    %117 = math.tanh %116 : vector<2x1024xf32>
    %c0_50 = arith.constant 0 : index
    %c0_51 = arith.constant 0 : index
    %118 = vector.load %arg7[%c0_50, %c0_51] : memref<2x1024xf32, #tpu.memory_space<vmem>>, vector<2x1024xf32>
    tpu.vector_store %arg7[%c0_50, %c0_51], %117 {strides = array<i32>} : memref<2x1024xf32, #tpu.memory_space<vmem>>, vector<2x1024xf32>,
    return
  }
}

</mosaic_0001>

<llo_original>
// kernel: tpu_custom_call.1
$region0: #{tpu_custom_call.1}
  #allocation0 [shape = 'u32[]', space=smem, size = 0x4, offset = 0x4, fixed_abs, tag = 'smem constant byte address 0x4 - core index']
  #allocation1 [shape = 'u32[144,128]{1,0:T(1,128)}', space=vmem, size = 0x12000, scoped, tag = 'internal scratch']
  %s0 = inlined_call_operand.hbm [shape: f32[2,32], index: 0, kind: input, shape index: {}]
  %s1 = inlined_call_operand.hbm [shape: bf16[32,128], index: 1, kind: input, shape index: {}]
  %s2 = inlined_call_operand.hbm [shape: bf16[128,256], index: 2, kind: input, shape index: {}]
  %s3 = inlined_call_operand.hbm [shape: bf16[256,512], index: 3, kind: input, shape index: {}]
  %s4 = inlined_call_operand.hbm [shape: bf16[512,1024], index: 4, kind: input, shape index: {}]
  %s5 = inlined_call_operand.hbm [shape: bf16[1024,1024], index: 5, kind: input, shape index: {}]
  %s6 = inlined_call_operand.hbm [shape: f32[1,6528], index: 6, kind: input, shape index: {}]
  %s7 = inlined_call_operand.hbm [shape: f32[2,1024], index: 7, kind: output, shape index: {}]
  %s8 = sld [smem:[#allocation0]]
  $region66: #{tpu_custom_call.1} parent=0
    _
  %s10 = ssub.s32 1, %s8
  %s11 = scalar_select 0, %s10, %s8
  $region1: #{tpu_custom_call.1} parent=0
    #allocation2 [shape = 'u8[1024]{0}', space=vmem, size = 0x400, scoped, tag = 'input window, operand 0, single buffered']
    #allocation3 [shape = 's32[1]{0}', space=sflag, size = 0x4, scoped, tag = 'scoped memory for tpu_custom_call.1']
    #allocation4 [shape = 's32[1]{0}', space=sflag, size = 0x4, scoped, tag = 'scoped memory for tpu_custom_call.1']
    #allocation5 [shape = 'u8[8192]{0}', space=vmem, size = 0x2000, scoped, tag = 'input window, operand 1, single buffered']
    #allocation6 [shape = 's32[1]{0}', space=sflag, size = 0x4, scoped, tag = 'scoped memory for tpu_custom_call.1']
    #allocation7 [shape = 'u8[65536]{0}', space=vmem, size = 0x10000, scoped, tag = 'input window, operand 2, single buffered']
    #allocation8 [shape = 'u8[262144]{0}', space=vmem, size = 0x40000, scoped, tag = 'input window, operand 3, single buffered']
    #allocation9 [shape = 's32[1]{0}', space=sflag, size = 0x4, scoped, tag = 'scoped memory for tpu_custom_call.1']
    #allocation10 [shape = 'u8[1048576]{0}', space=vmem, size = 0x100000, scoped, tag = 'input window, operand 4, single buffered']
    #allocation11 [shape = 'u8[2097152]{0}', space=vmem, size = 0x200000, scoped, tag = 'input window, operand 5, single buffered']
    #allocation12 [shape = 's32[1]{0}', space=sflag, size = 0x4, scoped, tag = 'scoped memory for tpu_custom_call.1']
    #allocation13 [shape = 'u8[26112]{0}', space=vmem, size = 0x6800, scoped, tag = 'input window, operand 6, single buffered']
    #allocation14 [shape = 'u8[8192]{0}', space=vmem, size = 0x2000, scoped, tag = 'output window, operand 0, single buffered']
    %12 = vsyncpa [#allocation3], 0
    %13 = vsyncpa [#allocation6], 0
    %14 = vsyncpa [#allocation9], 0
    %15 = vsyncpa [#allocation12], 0
    %16 = vsyncpa [#allocation4], 0
    // Predicated region
    $region2: #{tpu_custom_call.1} parent=1 // pred_check
      _
    $region3: #{tpu_custom_call.1} parent=1 // pred_check_branch
      %18 = sbr.rel (0) target = $region5
    $region4: #{tpu_custom_call.1} parent=1 // pred_region
      %s20 = ssub.s32 32, 32
      %21 = vsyncadd [#allocation3], %s20
      %s23 = sshll.u32 [#allocation2], 4
      %s24 = int_to_ptr.vmem [resolvable:$true] %s23
      %26 = dma.hbm_to_vmem [thread:$0]  %s0, 32, %s24, [#allocation3]
    $region5: #{tpu_custom_call.1} parent=1 // pred_fallthru
      _
    // Predicated region
    $region6: #{tpu_custom_call.1} parent=1 // pred_check
      _
    $region7: #{tpu_custom_call.1} parent=1 // pred_check_branch
      %28 = sbr.rel (0) target = $region9
    $region8: #{tpu_custom_call.1} parent=1 // pred_region
      %s30 = ssub.s32 256, 256
      %31 = vsyncadd [#allocation6], %s30
      %s32 = sshll.u32 [#allocation5], 4
      %s33 = int_to_ptr.vmem [resolvable:$true] %s32
      %38 = dma.hbm_to_vmem [thread:$0]  %s1, 256, %s33, [#allocation6], 64, 64, 4
    $region9: #{tpu_custom_call.1} parent=1 // pred_fallthru
      _
    // Predicated region
    $region10: #{tpu_custom_call.1} parent=1 // pred_check
      _
    $region11: #{tpu_custom_call.1} parent=1 // pred_check_branch
      %40 = sbr.rel (0) target = $region13
    $region12: #{tpu_custom_call.1} parent=1 // pred_region
      %s42 = ssub.s32 2048, 2048
      %43 = vsyncadd [#allocation6], %s42
      %s44 = sshll.u32 [#allocation7], 4
      %s45 = int_to_ptr.vmem [resolvable:$true] %s44
      %50 = dma.hbm_to_vmem [thread:$0]  %s2, 2048, %s45, [#allocation6], 128, 128, 8
    $region13: #{tpu_custom_call.1} parent=1 // pred_fallthru
      _
    // Predicated region
    $region14: #{tpu_custom_call.1} parent=1 // pred_check
      _
    $region15: #{tpu_custom_call.1} parent=1 // pred_check_branch
      %52 = sbr.rel (0) target = $region17
    $region16: #{tpu_custom_call.1} parent=1 // pred_region
      %s54 = ssub.s32 8192, 8192
      %55 = vsyncadd [#allocation9], %s54
      %s56 = sshll.u32 [#allocation8], 4
      %s57 = int_to_ptr.vmem [resolvable:$true] %s56
      %62 = dma.hbm_to_vmem [thread:$0]  %s3, 8192, %s57, [#allocation9], 256, 256, 16
    $region17: #{tpu_custom_call.1} parent=1 // pred_fallthru
      _
    // Predicated region
    $region18: #{tpu_custom_call.1} parent=1 // pred_check
      _
    $region19: #{tpu_custom_call.1} parent=1 // pred_check_branch
      %64 = sbr.rel (0) target = $region21
    $region20: #{tpu_custom_call.1} parent=1 // pred_region
      %s66 = ssub.s32 32768, 32768
      %67 = vsyncadd [#allocation9], %s66
      %s68 = sshll.u32 [#allocation10], 4
      %s69 = int_to_ptr.vmem [resolvable:$true] %s68
      %74 = dma.hbm_to_vmem [thread:$0]  %s4, 32768, %s69, [#allocation9], 512, 512, 32
    $region21: #{tpu_custom_call.1} parent=1 // pred_fallthru
      _
    // Predicated region
    $region22: #{tpu_custom_call.1} parent=1 // pred_check
      _
    $region23: #{tpu_custom_call.1} parent=1 // pred_check_branch
      %76 = sbr.rel (0) target = $region25
    $region24: #{tpu_custom_call.1} parent=1 // pred_region
      %s78 = ssub.s32 65536, 65536
      %79 = vsyncadd [#allocation12], %s78
      %s80 = sshll.u32 [#allocation11], 4
      %s81 = int_to_ptr.vmem [resolvable:$true] %s80
      %86 = dma.hbm_to_vmem [thread:$0]  %s5, 65536, %s81, [#allocation12], 512, 512, 32
    $region25: #{tpu_custom_call.1} parent=1 // pred_fallthru
      _
    // Predicated region
    $region26: #{tpu_custom_call.1} parent=1 // pred_check
      _
    $region27: #{tpu_custom_call.1} parent=1 // pred_check_branch
      %88 = sbr.rel (0) target = $region29
    $region28: #{tpu_custom_call.1} parent=1 // pred_region
      %s90 = ssub.s32 816, 816
      %91 = vsyncadd [#allocation12], %s90
      %s93 = sshll.u32 [#allocation13], 4
      %s94 = int_to_ptr.vmem [resolvable:$true] %s93
      %96 = dma.hbm_to_vmem [thread:$0]  %s6, 816, %s94, [#allocation12]
    $region29: #{tpu_custom_call.1} parent=1 // pred_fallthru
      _
    // Predicated region
    $region30: #{tpu_custom_call.1} parent=1 // pred_check
      _
    $region31: #{tpu_custom_call.1} parent=1 // pred_check_branch
      %98 = sbr.rel (0) target = $region33
    $region32: #{tpu_custom_call.1} parent=1 // pred_region
      %99 = dma.done [#allocation3], 32
    $region33: #{tpu_custom_call.1} parent=1 // pred_fallthru
      _
    // Predicated region
    $region34: #{tpu_custom_call.1} parent=1 // pred_check
      _
    $region35: #{tpu_custom_call.1} parent=1 // pred_check_branch
      %101 = sbr.rel (0) target = $region37
    $region36: #{tpu_custom_call.1} parent=1 // pred_region
      %102 = dma.done [#allocation6], 256
    $region37: #{tpu_custom_call.1} parent=1 // pred_fallthru
      _
    // Predicated region
    $region38: #{tpu_custom_call.1} parent=1 // pred_check
      _
    $region39: #{tpu_custom_call.1} parent=1 // pred_check_branch
      %104 = sbr.rel (0) target = $region41
    $region40: #{tpu_custom_call.1} parent=1 // pred_region
      %105 = dma.done [#allocation6], 2048
    $region41: #{tpu_custom_call.1} parent=1 // pred_fallthru
      _
    // Predicated region
    $region42: #{tpu_custom_call.1} parent=1 // pred_check
      _
    $region43: #{tpu_custom_call.1} parent=1 // pred_check_branch
      %107 = sbr.rel (0) target = $region45
    $region44: #{tpu_custom_call.1} parent=1 // pred_region
      %108 = dma.done [#allocation9], 8192
    $region45: #{tpu_custom_call.1} parent=1 // pred_fallthru
      _
    // Predicated region
    $region46: #{tpu_custom_call.1} parent=1 // pred_check
      _
    $region47: #{tpu_custom_call.1} parent=1 // pred_check_branch
      %110 = sbr.rel (0) target = $region49
    $region48: #{tpu_custom_call.1} parent=1 // pred_region
      %111 = dma.done [#allocation9], 32768
    $region49: #{tpu_custom_call.1} parent=1 // pred_fallthru
      _
    // Predicated region
    $region50: #{tpu_custom_call.1} parent=1 // pred_check
      _
    $region51: #{tpu_custom_call.1} parent=1 // pred_check_branch
      %113 = sbr.rel (0) target = $region53
    $region52: #{tpu_custom_call.1} parent=1 // pred_region
      %114 = dma.done [#allocation12], 65536
    $region53: #{tpu_custom_call.1} parent=1 // pred_fallthru
      _
    // Predicated region
    $region54: #{tpu_custom_call.1} parent=1 // pred_check
      _
    $region55: #{tpu_custom_call.1} parent=1 // pred_check_branch
      %116 = sbr.rel (0) target = $region57
    $region56: #{tpu_custom_call.1} parent=1 // pred_region
      %117 = dma.done [#allocation12], 816
    $region57: #{tpu_custom_call.1} parent=1 // pred_fallthru
      _
    %v119 = vld [vmem:[#allocation2] sm:$0x3]
    %v120 = vpack.c.bf16 %v119, %v119
    %v121 = vld [vmem:[#allocation5] sm:$0xf]
    %v122 = vld [vmem:[#allocation5 + $0x4] sm:$0xf]
    %v123 = vld [vmem:[#allocation5 + $0x8] sm:$0xf]
    %v124 = vld [vmem:[#allocation5 + $0xc] sm:$0xf]
    %v125 = vld [vmem:[#allocation13] sm:$0x1]
    %v127 = vlaneseq
    %v128 = vshrl.u32 %v127, 7
    %v129 = vsub.s32 0, %v128
    %v130 = vrot.slane %v125, %v129
    %v136 = vunpack.c.l.b16 %v121
    %v137 = vunpack.c.l.b16 %v122
    %v138 = vunpack.c.l.b16 %v123
    %v139 = vunpack.c.l.b16 %v124
    %v140 = vpack.c.b16 %v137, %v136
    %v141 = vpack.c.b16 %v139, %v138
    %vm144 = vcmask 261120
    %v146 = vsel %vm144, %v120, 0
    %148 = vmatprep.subr.bf16.mxu0 0
    %149 = vmatpush1.bf16.msra.mxu0 0
    %150 = vmatprep.subr.bf16.mxu0 0
    %151 = vmatpush1.bf16.msra.mxu0 0
    %152 = vmatprep.subr.bf16.mxu0 0
    %153 = vmatpush1.bf16.msra.mxu0 0
    %154 = vmatprep.subr.bf16.mxu0 0
    %155 = vmatpush1.bf16.msra.mxu0 0
    %156 = vmatprep.subr.bf16.mxu0 0
    %157 = vmatpush1.bf16.msra.mxu0 0
    %158 = vmatprep.subr.bf16.mxu0 0
    %159 = vmatpush1.bf16.msra.mxu0 0
    %160 = vmatprep.subr.bf16.mxu0 0
    %161 = vmatpush1.bf16.msra.mxu0 %v141
    %162 = vmatprep.subr.bf16.mxu0 0
    %163 = vmatpush1.bf16.msra.mxu0 %v140
    %164 = vmatprep.subr.bf16.mxu0 0
    %165 = vmatpush2.bf16.msra.mxu0 0
    %166 = vmatprep.subr.bf16.mxu0 0
    %167 = vmatpush2.bf16.msra.mxu0 0
    %168 = vmatprep.subr.bf16.mxu0 0
    %169 = vmatpush2.bf16.msra.mxu0 0
    %170 = vmatprep.subr.bf16.mxu0 0
    %171 = vmatpush2.bf16.msra.mxu0 0
    %172 = vmatprep.subr.bf16.mxu0 0
    %173 = vmatpush2.bf16.msra.mxu0 0
    %174 = vmatprep.subr.bf16.mxu0 0
    %175 = vmatpush2.bf16.msra.mxu0 0
    %176 = vmatprep.subr.bf16.mxu0 0
    %177 = vmatpush2.bf16.msra.mxu0 0
    %178 = vmatprep.subr.bf16.mxu0 0
    %179 = vmatpush2.bf16.msra.mxu0 0
    %180 = vmatprep.mubr.bf16.mxu0 0
    %181 = vmatmul.mubr.bf16.gmra.mxu0 %v146
    %v182 = vpop.f32.mrf.mxu0
    %v183 = vadd.f32 %v130, %v182
    %v184 = vpop.f32.mrf.mxu0
    %v185 = vpop.f32.mrf.mxu0
    %v186 = vpop.f32.mrf.mxu0
    %187 = vdwg.mxu0
    %vm188 = vcmp.gt.f32.partialorder %v183, 0.0
    %v189 = vmul.f32 %v183, 0.2
    %v190 = vsel %vm188, %v183, %v189
    %v191 = vpack.c.bf16 %v190, %v190
    %v192 = vld [vmem:[#allocation7] sm:$0xff]
    %v193 = vld [vmem:[#allocation7 + $0x8] sm:$0xff]
    %v194 = vld [vmem:[#allocation7 + $0x10] sm:$0xff]
    %v195 = vld [vmem:[#allocation7 + $0x18] sm:$0xff]
    %v196 = vld [vmem:[#allocation7 + $0x20] sm:$0xff]
    %v197 = vld [vmem:[#allocation7 + $0x28] sm:$0xff]
    %v198 = vld [vmem:[#allocation7 + $0x30] sm:$0xff]
    %v199 = vld [vmem:[#allocation7 + $0x38] sm:$0xff]
    %v200 = vld [vmem:[#allocation7 + $0x40] sm:$0xff]
    %v201 = vld [vmem:[#allocation7 + $0x48] sm:$0xff]
    %v202 = vld [vmem:[#allocation7 + $0x50] sm:$0xff]
    %v203 = vld [vmem:[#allocation7 + $0x58] sm:$0xff]
    %v204 = vld [vmem:[#allocation7 + $0x60] sm:$0xff]
    %v205 = vld [vmem:[#allocation7 + $0x68] sm:$0xff]
    %v206 = vld [vmem:[#allocation7 + $0x70] sm:$0xff]
    %v207 = vld [vmem:[#allocation7 + $0x78] sm:$0xff]
    %v208 = vld [vmem:[#allocation13 + $0x1] sm:$0x3]
    %v210 = vlaneseq
    %v211 = vshrl.u32 %v210, 7
    %v212 = vsub.s32 0, %v211
    %v213 = vrot.slane %v208, %v212
    %v214 = vlaneseq
    %v215 = vshrl.u32 %v214, 7
    %v216 = vsub.s32 1, %v215
    %v217 = vrot.slane %v208, %v216
    %v236 = vunpack.c.l.b16 %v192
    %v237 = vunpack.c.h.b16 %v192
    %v238 = vunpack.c.l.b16 %v193
    %v239 = vunpack.c.h.b16 %v193
    %v240 = vunpack.c.l.b16 %v194
    %v241 = vunpack.c.h.b16 %v194
    %v242 = vunpack.c.l.b16 %v195
    %v243 = vunpack.c.h.b16 %v195
    %v244 = vunpack.c.l.b16 %v196
    %v245 = vunpack.c.h.b16 %v196
    %v246 = vunpack.c.l.b16 %v197
    %v247 = vunpack.c.h.b16 %v197
    %v248 = vunpack.c.l.b16 %v198
    %v249 = vunpack.c.h.b16 %v198
    %v250 = vunpack.c.l.b16 %v199
    %v251 = vunpack.c.h.b16 %v199
    %v252 = vunpack.c.l.b16 %v200
    %v253 = vunpack.c.h.b16 %v200
    %v254 = vunpack.c.l.b16 %v201
    %v255 = vunpack.c.h.b16 %v201
    %v256 = vunpack.c.l.b16 %v202
    %v257 = vunpack.c.h.b16 %v202
    %v258 = vunpack.c.l.b16 %v203
    %v259 = vunpack.c.h.b16 %v203
    %v260 = vunpack.c.l.b16 %v204
    %v261 = vunpack.c.h.b16 %v204
    %v262 = vunpack.c.l.b16 %v205
    %v263 = vunpack.c.h.b16 %v205
    %v264 = vunpack.c.l.b16 %v206
    %v265 = vunpack.c.h.b16 %v206
    %v266 = vunpack.c.l.b16 %v207
    %v267 = vunpack.c.h.b16 %v207
    %v268 = vpack.c.b16 %v238, %v236
    %v269 = vpack.c.b16 %v239, %v237
    %v270 = vpack.c.b16 %v242, %v240
    %v271 = vpack.c.b16 %v243, %v241
    %v272 = vpack.c.b16 %v246, %v244
    %v273 = vpack.c.b16 %v247, %v245
    %v274 = vpack.c.b16 %v250, %v248
    %v275 = vpack.c.b16 %v251, %v249
    %v276 = vpack.c.b16 %v254, %v252
    %v277 = vpack.c.b16 %v255, %v253
    %v278 = vpack.c.b16 %v258, %v256
    %v279 = vpack.c.b16 %v259, %v257
    %v280 = vpack.c.b16 %v262, %v260
    %v281 = vpack.c.b16 %v263, %v261
    %v282 = vpack.c.b16 %v266, %v264
    %v283 = vpack.c.b16 %v267, %v265
    %300 = vmatprep.subr.bf16.mxu0 %v283
    %301 = vmatpush1.bf16.msra.mxu0 %v282
    %302 = vmatprep.subr.bf16.mxu0 %v281
    %303 = vmatpush1.bf16.msra.mxu0 %v280
    %304 = vmatprep.subr.bf16.mxu0 %v279
    %305 = vmatpush1.bf16.msra.mxu0 %v278
    %306 = vmatprep.subr.bf16.mxu0 %v277
    %307 = vmatpush1.bf16.msra.mxu0 %v276
    %308 = vmatprep.subr.bf16.mxu0 %v275
    %309 = vmatpush1.bf16.msra.mxu0 %v274
    %310 = vmatprep.subr.bf16.mxu0 %v273
    %311 = vmatpush1.bf16.msra.mxu0 %v272
    %312 = vmatprep.subr.bf16.mxu0 %v271
    %313 = vmatpush1.bf16.msra.mxu0 %v270
    %314 = vmatprep.subr.bf16.mxu0 %v269
    %315 = vmatpush1.bf16.msra.mxu0 %v268
    %316 = vmatprep.subr.bf16.mxu0 0
    %317 = vmatpush2.bf16.msra.mxu0 0
    %318 = vmatprep.subr.bf16.mxu0 0
    %319 = vmatpush2.bf16.msra.mxu0 0
    %320 = vmatprep.subr.bf16.mxu0 0
    %321 = vmatpush2.bf16.msra.mxu0 0
    %322 = vmatprep.subr.bf16.mxu0 0
    %323 = vmatpush2.bf16.msra.mxu0 0
    %324 = vmatprep.subr.bf16.mxu0 0
    %325 = vmatpush2.bf16.msra.mxu0 0
    %326 = vmatprep.subr.bf16.mxu0 0
    %327 = vmatpush2.bf16.msra.mxu0 0
    %328 = vmatprep.subr.bf16.mxu0 0
    %329 = vmatpush2.bf16.msra.mxu0 0
    %330 = vmatprep.subr.bf16.mxu0 0
    %331 = vmatpush2.bf16.msra.mxu0 0
    %332 = vmatprep.mubr.bf16.mxu0 0
    %333 = vmatmul.mubr.bf16.gmra.mxu0 %v191
    %v334 = vpop.f32.mrf.mxu0
    %v335 = vadd.f32 %v213, %v334
    %v336 = vpop.f32.mrf.mxu0
    %v337 = vadd.f32 %v217, %v336
    %v338 = vpop.f32.mrf.mxu0
    %v339 = vpop.f32.mrf.mxu0
    %340 = vdwg.mxu0
    %v341 = vld [vmem:[#allocation13 + $0x3] sm:$0x3]
    %v342 = vld [vmem:[#allocation13 + $0x5] sm:$0x3]
    %vm343 = vcmask 1041408
    %v344 = vsel %vm343, %v335, 0.0
    %v345 = vrot.slane %v344, 4
    %v346 = vadd.f32 %v344, %v345
    %v347 = vrot.slane %v346, 2
    %v348 = vadd.f32 %v346, %v347
    %v349 = vrot.slane %v348, 1
    %v350 = vadd.f32 %v348, %v349
    %v351 = vsel %vm343, %v337, 0.0
    %v352 = vrot.slane %v351, 4
    %v353 = vadd.f32 %v351, %v352
    %v354 = vrot.slane %v353, 2
    %v355 = vadd.f32 %v353, %v354
    %v356 = vrot.slane %v355, 1
    %v357 = vadd.f32 %v355, %v356
    %v358 = vrcp.pop 2.0
    %v359 = vmul.f32 %v350, %v358
    %v360 = vmul.f32 %v357, %v358
    %v361 = vsub.f32 %v335, %v359
    %v362 = vsub.f32 %v337, %v360
    %v363 = vmul.f32 %v361, %v361
    %v364 = vmul.f32 %v362, %v362
    %v365 = vsel %vm343, %v363, 0.0
    %v366 = vrot.slane %v365, 4
    %v367 = vadd.f32 %v365, %v366
    %v368 = vrot.slane %v367, 2
    %v369 = vadd.f32 %v367, %v368
    %v370 = vrot.slane %v369, 1
    %v371 = vadd.f32 %v369, %v370
    %v372 = vsel %vm343, %v364, 0.0
    %v373 = vrot.slane %v372, 4
    %v374 = vadd.f32 %v372, %v373
    %v375 = vrot.slane %v374, 2
    %v376 = vadd.f32 %v374, %v375
    %v377 = vrot.slane %v376, 1
    %v378 = vadd.f32 %v376, %v377
    %v379 = vmul.f32 %v371, %v358
    %v380 = vmul.f32 %v378, %v358
    %v381 = vadd.f32 %v379, 0.8
    %v382 = vadd.f32 %v380, 0.8
    %v383 = vrsqrt.pop %v381
    %v384 = vrsqrt.pop %v382
    %v385 = vmul.f32 %v361, %v383
    %v386 = vmul.f32 %v362, %v384
    %v388 = vlaneseq
    %v389 = vshrl.u32 %v388, 7
    %v390 = vsub.s32 0, %v389
    %v391 = vrot.slane %v341, %v390
    %v392 = vlaneseq
    %v393 = vshrl.u32 %v392, 7
    %v394 = vsub.s32 1, %v393
    %v395 = vrot.slane %v341, %v394
    %v398 = vmul.f32 %v385, %v391
    %v399 = vmul.f32 %v386, %v395
    %v401 = vlaneseq
    %v402 = vshrl.u32 %v401, 7
    %v403 = vsub.s32 0, %v402
    %v404 = vrot.slane %v342, %v403
    %v405 = vlaneseq
    %v406 = vshrl.u32 %v405, 7
    %v407 = vsub.s32 1, %v406
    %v408 = vrot.slane %v342, %v407
    %v411 = vadd.f32 %v398, %v404
    %v412 = vadd.f32 %v399, %v408
    %vm413 = vcmp.gt.f32.partialorder %v411, 0.0
    %vm414 = vcmp.gt.f32.partialorder %v412, 0.0
    %v415 = vmul.f32 %v411, 0.2
    %v416 = vmul.f32 %v412, 0.2
    %v417 = vsel %vm413, %v411, %v415
    %v418 = vsel %vm414, %v412, %v416
    %v419 = vpack.c.bf16 %v417, %v417
    %v420 = vpack.c.bf16 %v418, %v418
    %v421 = vld [vmem:[#allocation8] sm:$0xff]
    %v422 = vld [vmem:[#allocation8 + $0x8] sm:$0xff]
    %v423 = vld [vmem:[#allocation8 + $0x10] sm:$0xff]
    %v424 = vld [vmem:[#allocation8 + $0x18] sm:$0xff]
    %v425 = vld [vmem:[#allocation8 + $0x20] sm:$0xff]
    %v426 = vld [vmem:[#allocation8 + $0x28] sm:$0xff]
    %v427 = vld [vmem:[#allocation8 + $0x30] sm:$0xff]
    %v428 = vld [vmem:[#allocation8 + $0x38] sm:$0xff]
    %v429 = vld [vmem:[#allocation8 + $0x40] sm:$0xff]
    %v430 = vld [vmem:[#allocation8 + $0x48] sm:$0xff]
    %v431 = vld [vmem:[#allocation8 + $0x50] sm:$0xff]
    %v432 = vld [vmem:[#allocation8 + $0x58] sm:$0xff]
    %v433 = vld [vmem:[#allocation8 + $0x60] sm:$0xff]
    %v434 = vld [vmem:[#allocation8 + $0x68] sm:$0xff]
    %v435 = vld [vmem:[#allocation8 + $0x70] sm:$0xff]
    %v436 = vld [vmem:[#allocation8 + $0x78] sm:$0xff]
    %v437 = vld [vmem:[#allocation8 + $0x80] sm:$0xff]
    %v438 = vld [vmem:[#allocation8 + $0x88] sm:$0xff]
    %v439 = vld [vmem:[#allocation8 + $0x90] sm:$0xff]
    %v440 = vld [vmem:[#allocation8 + $0x98] sm:$0xff]
    %v441 = vld [vmem:[#allocation8 + $0xa0] sm:$0xff]
    %v442 = vld [vmem:[#allocation8 + $0xa8] sm:$0xff]
    %v443 = vld [vmem:[#allocation8 + $0xb0] sm:$0xff]
    %v444 = vld [vmem:[#allocation8 + $0xb8] sm:$0xff]
    %v445 = vld [vmem:[#allocation8 + $0xc0] sm:$0xff]
    %v446 = vld [vmem:[#allocation8 + $0xc8] sm:$0xff]
    %v447 = vld [vmem:[#allocation8 + $0xd0] sm:$0xff]
    %v448 = vld [vmem:[#allocation8 + $0xd8] sm:$0xff]
    %v449 = vld [vmem:[#allocation8 + $0xe0] sm:$0xff]
    %v450 = vld [vmem:[#allocation8 + $0xe8] sm:$0xff]
    %v451 = vld [vmem:[#allocation8 + $0xf0] sm:$0xff]
    %v452 = vld [vmem:[#allocation8 + $0xf8] sm:$0xff]
    %v453 = vld [vmem:[#allocation8 + $0x100] sm:$0xff]
    %v454 = vld [vmem:[#allocation8 + $0x108] sm:$0xff]
    %v455 = vld [vmem:[#allocation8 + $0x110] sm:$0xff]
    %v456 = vld [vmem:[#allocation8 + $0x118] sm:$0xff]
    %v457 = vld [vmem:[#allocation8 + $0x120] sm:$0xff]
    %v458 = vld [vmem:[#allocation8 + $0x128] sm:$0xff]
    %v459 = vld [vmem:[#allocation8 + $0x130] sm:$0xff]
    %v460 = vld [vmem:[#allocation8 + $0x138] sm:$0xff]
    %v461 = vld [vmem:[#allocation8 + $0x140] sm:$0xff]
    %v462 = vld [vmem:[#allocation8 + $0x148] sm:$0xff]
    %v463 = vld [vmem:[#allocation8 + $0x150] sm:$0xff]
    %v464 = vld [vmem:[#allocation8 + $0x158] sm:$0xff]
    %v465 = vld [vmem:[#allocation8 + $0x160] sm:$0xff]
    %v466 = vld [vmem:[#allocation8 + $0x168] sm:$0xff]
    %v467 = vld [vmem:[#allocation8 + $0x170] sm:$0xff]
    %v468 = vld [vmem:[#allocation8 + $0x178] sm:$0xff]
    %v469 = vld [vmem:[#allocation8 + $0x180] sm:$0xff]
    %v470 = vld [vmem:[#allocation8 + $0x188] sm:$0xff]
    %v471 = vld [vmem:[#allocation8 + $0x190] sm:$0xff]
    %v472 = vld [vmem:[#allocation8 + $0x198] sm:$0xff]
    %v473 = vld [vmem:[#allocation8 + $0x1a0] sm:$0xff]
    %v474 = vld [vmem:[#allocation8 + $0x1a8] sm:$0xff]
    %v475 = vld [vmem:[#allocation8 + $0x1b0] sm:$0xff]
    %v476 = vld [vmem:[#allocation8 + $0x1b8] sm:$0xff]
    %v477 = vld [vmem:[#allocation8 + $0x1c0] sm:$0xff]
    %v478 = vld [vmem:[#allocation8 + $0x1c8] sm:$0xff]
    %v479 = vld [vmem:[#allocation8 + $0x1d0] sm:$0xff]
    %v480 = vld [vmem:[#allocation8 + $0x1d8] sm:$0xff]
    %v481 = vld [vmem:[#allocation8 + $0x1e0] sm:$0xff]
    %v482 = vld [vmem:[#allocation8 + $0x1e8] sm:$0xff]
    %v483 = vld [vmem:[#allocation8 + $0x1f0] sm:$0xff]
    %v484 = vld [vmem:[#allocation8 + $0x1f8] sm:$0xff]
    %v485 = vld [vmem:[#allocation13 + $0x7] sm:$0xf]
    %v487 = vlaneseq
    %v488 = vshrl.u32 %v487, 7
    %v489 = vsub.s32 0, %v488
    %v490 = vrot.slane %v485, %v489
    %v491 = vlaneseq
    %v492 = vshrl.u32 %v491, 7
    %v493 = vsub.s32 1, %v492
    %v494 = vrot.slane %v485, %v493
    %v495 = vlaneseq
    %v496 = vshrl.u32 %v495, 7
    %v497 = vsub.s32 2, %v496
    %v498 = vrot.slane %v485, %v497
    %v499 = vlaneseq
    %v500 = vshrl.u32 %v499, 7
    %v501 = vsub.s32 3, %v500
    %v502 = vrot.slane %v485, %v501
    %v571 = vunpack.c.l.b16 %v421
    %v572 = vunpack.c.h.b16 %v421
    %v573 = vunpack.c.l.b16 %v422
    %v574 = vunpack.c.h.b16 %v422
    %v575 = vunpack.c.l.b16 %v423
    %v576 = vunpack.c.h.b16 %v423
    %v577 = vunpack.c.l.b16 %v424
    %v578 = vunpack.c.h.b16 %v424
    %v579 = vunpack.c.l.b16 %v425
    %v580 = vunpack.c.h.b16 %v425
    %v581 = vunpack.c.l.b16 %v426
    %v582 = vunpack.c.h.b16 %v426
    %v583 = vunpack.c.l.b16 %v427
    %v584 = vunpack.c.h.b16 %v427
    %v585 = vunpack.c.l.b16 %v428
    %v586 = vunpack.c.h.b16 %v428
    %v587 = vunpack.c.l.b16 %v429
    %v588 = vunpack.c.h.b16 %v429
    %v589 = vunpack.c.l.b16 %v430
    %v590 = vunpack.c.h.b16 %v430
    %v591 = vunpack.c.l.b16 %v431
    %v592 = vunpack.c.h.b16 %v431
    %v593 = vunpack.c.l.b16 %v432
    %v594 = vunpack.c.h.b16 %v432
    %v595 = vunpack.c.l.b16 %v433
    %v596 = vunpack.c.h.b16 %v433
    %v597 = vunpack.c.l.b16 %v434
    %v598 = vunpack.c.h.b16 %v434
    %v599 = vunpack.c.l.b16 %v435
    %v600 = vunpack.c.h.b16 %v435
    %v601 = vunpack.c.l.b16 %v436
    %v602 = vunpack.c.h.b16 %v436
    %v603 = vunpack.c.l.b16 %v437
    %v604 = vunpack.c.h.b16 %v437
    %v605 = vunpack.c.l.b16 %v438
    %v606 = vunpack.c.h.b16 %v438
    %v607 = vunpack.c.l.b16 %v439
    %v608 = vunpack.c.h.b16 %v439
    %v609 = vunpack.c.l.b16 %v440
    %v610 = vunpack.c.h.b16 %v440
    %v611 = vunpack.c.l.b16 %v441
    %v612 = vunpack.c.h.b16 %v441
    %v613 = vunpack.c.l.b16 %v442
    %v614 = vunpack.c.h.b16 %v442
    %v615 = vunpack.c.l.b16 %v443
    %v616 = vunpack.c.h.b16 %v443
    %v617 = vunpack.c.l.b16 %v444
    %v618 = vunpack.c.h.b16 %v444
    %v619 = vunpack.c.l.b16 %v445
    %v620 = vunpack.c.h.b16 %v445
    %v621 = vunpack.c.l.b16 %v446
    %v622 = vunpack.c.h.b16 %v446
    %v623 = vunpack.c.l.b16 %v447
    %v624 = vunpack.c.h.b16 %v447
    %v625 = vunpack.c.l.b16 %v448
    %v626 = vunpack.c.h.b16 %v448
    %v627 = vunpack.c.l.b16 %v449
    %v628 = vunpack.c.h.b16 %v449
    %v629 = vunpack.c.l.b16 %v450
    %v630 = vunpack.c.h.b16 %v450
    %v631 = vunpack.c.l.b16 %v451
    %v632 = vunpack.c.h.b16 %v451
    %v633 = vunpack.c.l.b16 %v452
    %v634 = vunpack.c.h.b16 %v452
    %v635 = vunpack.c.l.b16 %v453
    %v636 = vunpack.c.h.b16 %v453
    %v637 = vunpack.c.l.b16 %v454
    %v638 = vunpack.c.h.b16 %v454
    %v639 = vunpack.c.l.b16 %v455
    %v640 = vunpack.c.h.b16 %v455
    %v641 = vunpack.c.l.b16 %v456
    %v642 = vunpack.c.h.b16 %v456
    %v643 = vunpack.c.l.b16 %v457
    %v644 = vunpack.c.h.b16 %v457
    %v645 = vunpack.c.l.b16 %v458
    %v646 = vunpack.c.h.b16 %v458
    %v647 = vunpack.c.l.b16 %v459
    %v648 = vunpack.c.h.b16 %v459
    %v649 = vunpack.c.l.b16 %v460
    %v650 = vunpack.c.h.b16 %v460
    %v651 = vunpack.c.l.b16 %v461
    %v652 = vunpack.c.h.b16 %v461
    %v653 = vunpack.c.l.b16 %v462
    %v654 = vunpack.c.h.b16 %v462
    %v655 = vunpack.c.l.b16 %v463
    %v656 = vunpack.c.h.b16 %v463
    %v657 = vunpack.c.l.b16 %v464
    %v658 = vunpack.c.h.b16 %v464
    %v659 = vunpack.c.l.b16 %v465
    %v660 = vunpack.c.h.b16 %v465
    %v661 = vunpack.c.l.b16 %v466
    %v662 = vunpack.c.h.b16 %v466
    %v663 = vunpack.c.l.b16 %v467
    %v664 = vunpack.c.h.b16 %v467
    %v665 = vunpack.c.l.b16 %v468
    %v666 = vunpack.c.h.b16 %v468
    %v667 = vunpack.c.l.b16 %v469
    %v668 = vunpack.c.h.b16 %v469
    %v669 = vunpack.c.l.b16 %v470
    %v670 = vunpack.c.h.b16 %v470
    %v671 = vunpack.c.l.b16 %v471
    %v672 = vunpack.c.h.b16 %v471
    %v673 = vunpack.c.l.b16 %v472
    %v674 = vunpack.c.h.b16 %v472
    %v675 = vunpack.c.l.b16 %v473
    %v676 = vunpack.c.h.b16 %v473
    %v677 = vunpack.c.l.b16 %v474
    %v678 = vunpack.c.h.b16 %v474
    %v679 = vunpack.c.l.b16 %v475
    %v680 = vunpack.c.h.b16 %v475
    %v681 = vunpack.c.l.b16 %v476
    %v682 = vunpack.c.h.b16 %v476
    %v683 = vunpack.c.l.b16 %v477
    %v684 = vunpack.c.h.b16 %v477
    %v685 = vunpack.c.l.b16 %v478
    %v686 = vunpack.c.h.b16 %v478
    %v687 = vunpack.c.l.b16 %v479
    %v688 = vunpack.c.h.b16 %v479
    %v689 = vunpack.c.l.b16 %v480
    %v690 = vunpack.c.h.b16 %v480
    %v691 = vunpack.c.l.b16 %v481
    %v692 = vunpack.c.h.b16 %v481
    %v693 = vunpack.c.l.b16 %v482
    %v694 = vunpack.c.h.b16 %v482
    %v695 = vunpack.c.l.b16 %v483
    %v696 = vunpack.c.h.b16 %v483
    %v697 = vunpack.c.l.b16 %v484
    %v698 = vunpack.c.h.b16 %v484
    %v699 = vpack.c.b16 %v575, %v571
    %v700 = vpack.c.b16 %v576, %v572
    %v701 = vpack.c.b16 %v577, %v573
    %v702 = vpack.c.b16 %v578, %v574
    %v703 = vpack.c.b16 %v583, %v579
    %v704 = vpack.c.b16 %v584, %v580
    %v705 = vpack.c.b16 %v585, %v581
    %v706 = vpack.c.b16 %v586, %v582
    %v707 = vpack.c.b16 %v591, %v587
    %v708 = vpack.c.b16 %v592, %v588
    %v709 = vpack.c.b16 %v593, %v589
    %v710 = vpack.c.b16 %v594, %v590
    %v711 = vpack.c.b16 %v599, %v595
    %v712 = vpack.c.b16 %v600, %v596
    %v713 = vpack.c.b16 %v601, %v597
    %v714 = vpack.c.b16 %v602, %v598
    %v715 = vpack.c.b16 %v607, %v603
    %v716 = vpack.c.b16 %v608, %v604
    %v717 = vpack.c.b16 %v609, %v605
    %v718 = vpack.c.b16 %v610, %v606
    %v719 = vpack.c.b16 %v615, %v611
    %v720 = vpack.c.b16 %v616, %v612
    %v721 = vpack.c.b16 %v617, %v613
    %v722 = vpack.c.b16 %v618, %v614
    %v723 = vpack.c.b16 %v623, %v619
    %v724 = vpack.c.b16 %v624, %v620
    %v725 = vpack.c.b16 %v625, %v621
    %v726 = vpack.c.b16 %v626, %v622
    %v727 = vpack.c.b16 %v631, %v627
    %v728 = vpack.c.b16 %v632, %v628
    %v729 = vpack.c.b16 %v633, %v629
    %v730 = vpack.c.b16 %v634, %v630
    %v731 = vpack.c.b16 %v639, %v635
    %v732 = vpack.c.b16 %v640, %v636
    %v733 = vpack.c.b16 %v641, %v637
    %v734 = vpack.c.b16 %v642, %v638
    %v735 = vpack.c.b16 %v647, %v643
    %v736 = vpack.c.b16 %v648, %v644
    %v737 = vpack.c.b16 %v649, %v645
    %v738 = vpack.c.b16 %v650, %v646
    %v739 = vpack.c.b16 %v655, %v651
    %v740 = vpack.c.b16 %v656, %v652
    %v741 = vpack.c.b16 %v657, %v653
    %v742 = vpack.c.b16 %v658, %v654
    %v743 = vpack.c.b16 %v663, %v659
    %v744 = vpack.c.b16 %v664, %v660
    %v745 = vpack.c.b16 %v665, %v661
    %v746 = vpack.c.b16 %v666, %v662
    %v747 = vpack.c.b16 %v671, %v667
    %v748 = vpack.c.b16 %v672, %v668
    %v749 = vpack.c.b16 %v673, %v669
    %v750 = vpack.c.b16 %v674, %v670
    %v751 = vpack.c.b16 %v679, %v675
    %v752 = vpack.c.b16 %v680, %v676
    %v753 = vpack.c.b16 %v681, %v677
    %v754 = vpack.c.b16 %v682, %v678
    %v755 = vpack.c.b16 %v687, %v683
    %v756 = vpack.c.b16 %v688, %v684
    %v757 = vpack.c.b16 %v689, %v685
    %v758 = vpack.c.b16 %v690, %v686
    %v759 = vpack.c.b16 %v695, %v691
    %v760 = vpack.c.b16 %v696, %v692
    %v761 = vpack.c.b16 %v697, %v693
    %v762 = vpack.c.b16 %v698, %v694
    %827 = vmatprep.subr.bf16.mxu0 %v728
    %828 = vmatpush1.bf16.msra.mxu0 %v727
    %829 = vmatprep.subr.bf16.mxu0 %v724
    %830 = vmatpush1.bf16.msra.mxu0 %v723
    %831 = vmatprep.subr.bf16.mxu0 %v720
    %832 = vmatpush1.bf16.msra.mxu0 %v719
    %833 = vmatprep.subr.bf16.mxu0 %v716
    %834 = vmatpush1.bf16.msra.mxu0 %v715
    %835 = vmatprep.subr.bf16.mxu0 %v712
    %836 = vmatpush1.bf16.msra.mxu0 %v711
    %837 = vmatprep.subr.bf16.mxu0 %v708
    %838 = vmatpush1.bf16.msra.mxu0 %v707
    %839 = vmatprep.subr.bf16.mxu0 %v704
    %840 = vmatpush1.bf16.msra.mxu0 %v703
    %841 = vmatprep.subr.bf16.mxu0 %v700
    %842 = vmatpush1.bf16.msra.mxu0 %v699
    %843 = vmatprep.subr.bf16.mxu0 %v760
    %844 = vmatpush2.bf16.msra.mxu0 %v759
    %845 = vmatprep.subr.bf16.mxu0 %v756
    %846 = vmatpush2.bf16.msra.mxu0 %v755
    %847 = vmatprep.subr.bf16.mxu0 %v752
    %848 = vmatpush2.bf16.msra.mxu0 %v751
    %849 = vmatprep.subr.bf16.mxu0 %v748
    %850 = vmatpush2.bf16.msra.mxu0 %v747
    %851 = vmatprep.subr.bf16.mxu0 %v744
    %852 = vmatpush2.bf16.msra.mxu0 %v743
    %853 = vmatprep.subr.bf16.mxu0 %v740
    %854 = vmatpush2.bf16.msra.mxu0 %v739
    %855 = vmatprep.subr.bf16.mxu0 %v736
    %856 = vmatpush2.bf16.msra.mxu0 %v735
    %857 = vmatprep.subr.bf16.mxu0 %v732
    %858 = vmatpush2.bf16.msra.mxu0 %v731
    %859 = vmatprep.mubr.bf16.mxu0 %v420
    %860 = vmatmul.mubr.bf16.gmra.mxu0 %v419
    %v861 = vpop.f32.mrf.mxu0
    %v862 = vadd.f32 %v490, %v861
    %v863 = vpop.f32.mrf.mxu0
    %v864 = vadd.f32 %v494, %v863
    %v865 = vpop.f32.mrf.mxu0
    %v866 = vpop.f32.mrf.mxu0
    %867 = vdwg.mxu0
    %868 = vmatprep.subr.bf16.mxu0 %v730
    %869 = vmatpush1.bf16.msra.mxu0 %v729
    %870 = vmatprep.subr.bf16.mxu0 %v726
    %871 = vmatpush1.bf16.msra.mxu0 %v725
    %872 = vmatprep.subr.bf16.mxu0 %v722
    %873 = vmatpush1.bf16.msra.mxu0 %v721
    %874 = vmatprep.subr.bf16.mxu0 %v718
    %875 = vmatpush1.bf16.msra.mxu0 %v717
    %876 = vmatprep.subr.bf16.mxu0 %v714
    %877 = vmatpush1.bf16.msra.mxu0 %v713
    %878 = vmatprep.subr.bf16.mxu0 %v710
    %879 = vmatpush1.bf16.msra.mxu0 %v709
    %880 = vmatprep.subr.bf16.mxu0 %v706
    %881 = vmatpush1.bf16.msra.mxu0 %v705
    %882 = vmatprep.subr.bf16.mxu0 %v702
    %883 = vmatpush1.bf16.msra.mxu0 %v701
    %884 = vmatprep.subr.bf16.mxu0 %v762
    %885 = vmatpush2.bf16.msra.mxu0 %v761
    %886 = vmatprep.subr.bf16.mxu0 %v758
    %887 = vmatpush2.bf16.msra.mxu0 %v757
    %888 = vmatprep.subr.bf16.mxu0 %v754
    %889 = vmatpush2.bf16.msra.mxu0 %v753
    %890 = vmatprep.subr.bf16.mxu0 %v750
    %891 = vmatpush2.bf16.msra.mxu0 %v749
    %892 = vmatprep.subr.bf16.mxu0 %v746
    %893 = vmatpush2.bf16.msra.mxu0 %v745
    %894 = vmatprep.subr.bf16.mxu0 %v742
    %895 = vmatpush2.bf16.msra.mxu0 %v741
    %896 = vmatprep.subr.bf16.mxu0 %v738
    %897 = vmatpush2.bf16.msra.mxu0 %v737
    %898 = vmatprep.subr.bf16.mxu0 %v734
    %899 = vmatpush2.bf16.msra.mxu0 %v733
    %900 = vmatprep.mubr.bf16.mxu0 %v420
    %901 = vmatmul.mubr.bf16.gmra.mxu0 %v419
    %v902 = vpop.f32.mrf.mxu0
    %v903 = vadd.f32 %v498, %v902
    %v904 = vpop.f32.mrf.mxu0
    %v905 = vadd.f32 %v502, %v904
    %v906 = vpop.f32.mrf.mxu0
    %v907 = vpop.f32.mrf.mxu0
    %908 = vdwg.mxu0
    %v909 = vld [vmem:[#allocation13 + $0xb] sm:$0xf]
    %v910 = vld [vmem:[#allocation13 + $0xf] sm:$0xf]
    %v911 = vsel %vm343, %v862, 0.0
    %v912 = vrot.slane %v911, 4
    %v913 = vadd.f32 %v911, %v912
    %v914 = vrot.slane %v913, 2
    %v915 = vadd.f32 %v913, %v914
    %v916 = vrot.slane %v915, 1
    %v917 = vadd.f32 %v915, %v916
    %v918 = vsel %vm343, %v864, 0.0
    %v919 = vrot.slane %v918, 4
    %v920 = vadd.f32 %v918, %v919
    %v921 = vrot.slane %v920, 2
    %v922 = vadd.f32 %v920, %v921
    %v923 = vrot.slane %v922, 1
    %v924 = vadd.f32 %v922, %v923
    %v925 = vsel %vm343, %v903, 0.0
    %v926 = vrot.slane %v925, 4
    %v927 = vadd.f32 %v925, %v926
    %v928 = vrot.slane %v927, 2
    %v929 = vadd.f32 %v927, %v928
    %v930 = vrot.slane %v929, 1
    %v931 = vadd.f32 %v929, %v930
    %v932 = vsel %vm343, %v905, 0.0
    %v933 = vrot.slane %v932, 4
    %v934 = vadd.f32 %v932, %v933
    %v935 = vrot.slane %v934, 2
    %v936 = vadd.f32 %v934, %v935
    %v937 = vrot.slane %v936, 1
    %v938 = vadd.f32 %v936, %v937
    %v939 = vmul.f32 %v917, %v358
    %v940 = vmul.f32 %v924, %v358
    %v941 = vmul.f32 %v931, %v358
    %v942 = vmul.f32 %v938, %v358
    %v943 = vsub.f32 %v862, %v939
    %v944 = vsub.f32 %v864, %v940
    %v945 = vsub.f32 %v903, %v941
    %v946 = vsub.f32 %v905, %v942
    %v947 = vmul.f32 %v943, %v943
    %v948 = vmul.f32 %v944, %v944
    %v949 = vmul.f32 %v945, %v945
    %v950 = vmul.f32 %v946, %v946
    %v951 = vsel %vm343, %v947, 0.0
    %v952 = vrot.slane %v951, 4
    %v953 = vadd.f32 %v951, %v952
    %v954 = vrot.slane %v953, 2
    %v955 = vadd.f32 %v953, %v954
    %v956 = vrot.slane %v955, 1
    %v957 = vadd.f32 %v955, %v956
    %v958 = vsel %vm343, %v948, 0.0
    %v959 = vrot.slane %v958, 4
    %v960 = vadd.f32 %v958, %v959
    %v961 = vrot.slane %v960, 2
    %v962 = vadd.f32 %v960, %v961
    %v963 = vrot.slane %v962, 1
    %v964 = vadd.f32 %v962, %v963
    %v965 = vsel %vm343, %v949, 0.0
    %v966 = vrot.slane %v965, 4
    %v967 = vadd.f32 %v965, %v966
    %v968 = vrot.slane %v967, 2
    %v969 = vadd.f32 %v967, %v968
    %v970 = vrot.slane %v969, 1
    %v971 = vadd.f32 %v969, %v970
    %v972 = vsel %vm343, %v950, 0.0
    %v973 = vrot.slane %v972, 4
    %v974 = vadd.f32 %v972, %v973
    %v975 = vrot.slane %v974, 2
    %v976 = vadd.f32 %v974, %v975
    %v977 = vrot.slane %v976, 1
    %v978 = vadd.f32 %v976, %v977
    %v979 = vmul.f32 %v957, %v358
    %v980 = vmul.f32 %v964, %v358
    %v981 = vmul.f32 %v971, %v358
    %v982 = vmul.f32 %v978, %v358
    %v983 = vadd.f32 %v979, 0.8
    %v984 = vadd.f32 %v980, 0.8
    %v985 = vadd.f32 %v981, 0.8
    %v986 = vadd.f32 %v982, 0.8
    %v987 = vrsqrt.pop %v983
    %v988 = vrsqrt.pop %v984
    %v989 = vrsqrt.pop %v985
    %v990 = vrsqrt.pop %v986
    %v991 = vmul.f32 %v943, %v987
    %v992 = vmul.f32 %v944, %v988
    %v993 = vmul.f32 %v945, %v989
    %v994 = vmul.f32 %v946, %v990
    %v996 = vlaneseq
    %v997 = vshrl.u32 %v996, 7
    %v998 = vsub.s32 0, %v997
    %v999 = vrot.slane %v909, %v998
    %v1000 = vlaneseq
    %v1001 = vshrl.u32 %v1000, 7
    %v1002 = vsub.s32 1, %v1001
    %v1003 = vrot.slane %v909, %v1002
    %v1004 = vlaneseq
    %v1005 = vshrl.u32 %v1004, 7
    %v1006 = vsub.s32 2, %v1005
    %v1007 = vrot.slane %v909, %v1006
    %v1008 = vlaneseq
    %v1009 = vshrl.u32 %v1008, 7
    %v1010 = vsub.s32 3, %v1009
    %v1011 = vrot.slane %v909, %v1010
    %v1016 = vmul.f32 %v991, %v999
    %v1017 = vmul.f32 %v992, %v1003
    %v1018 = vmul.f32 %v993, %v1007
    %v1019 = vmul.f32 %v994, %v1011
    %v1021 = vlaneseq
    %v1022 = vshrl.u32 %v1021, 7
    %v1023 = vsub.s32 0, %v1022
    %v1024 = vrot.slane %v910, %v1023
    %v1025 = vlaneseq
    %v1026 = vshrl.u32 %v1025, 7
    %v1027 = vsub.s32 1, %v1026
    %v1028 = vrot.slane %v910, %v1027
    %v1029 = vlaneseq
    %v1030 = vshrl.u32 %v1029, 7
    %v1031 = vsub.s32 2, %v1030
    %v1032 = vrot.slane %v910, %v1031
    %v1033 = vlaneseq
    %v1034 = vshrl.u32 %v1033, 7
    %v1035 = vsub.s32 3, %v1034
    %v1036 = vrot.slane %v910, %v1035
    %v1041 = vadd.f32 %v1016, %v1024
    %v1042 = vadd.f32 %v1017, %v1028
    %v1043 = vadd.f32 %v1018, %v1032
    %v1044 = vadd.f32 %v1019, %v1036
    %vm1045 = vcmp.gt.f32.partialorder %v1041, 0.0
    %vm1046 = vcmp.gt.f32.partialorder %v1042, 0.0
    %vm1047 = vcmp.gt.f32.partialorder %v1043, 0.0
    %vm1048 = vcmp.gt.f32.partialorder %v1044, 0.0
    %v1049 = vmul.f32 %v1041, 0.2
    %v1050 = vmul.f32 %v1042, 0.2
    %v1051 = vmul.f32 %v1043, 0.2
    %v1052 = vmul.f32 %v1044, 0.2
    %v1053 = vsel %vm1045, %v1041, %v1049
    %v1054 = vsel %vm1046, %v1042, %v1050
    %v1055 = vsel %vm1047, %v1043, %v1051
    %v1056 = vsel %vm1048, %v1044, %v1052
    %v1057 = vpack.c.bf16 %v1053, %v1053
    %v1058 = vpack.c.bf16 %v1054, %v1054
    %v1059 = vpack.c.bf16 %v1055, %v1055
    %v1060 = vpack.c.bf16 %v1056, %v1056
    %v1061 = vld [vmem:[#allocation10] sm:$0xff]
    %v1062 = vld [vmem:[#allocation10 + $0x8] sm:$0xff]
    %v1063 = vld [vmem:[#allocation10 + $0x10] sm:$0xff]
    %v1064 = vld [vmem:[#allocation10 + $0x18] sm:$0xff]
    %v1065 = vld [vmem:[#allocation10 + $0x20] sm:$0xff]
    %v1066 = vld [vmem:[#allocation10 + $0x28] sm:$0xff]
    %v1067 = vld [vmem:[#allocation10 + $0x30] sm:$0xff]
    %v1068 = vld [vmem:[#allocation10 + $0x38] sm:$0xff]
    %v1069 = vld [vmem:[#allocation10 + $0x40] sm:$0xff]
    %v1070 = vld [vmem:[#allocation10 + $0x48] sm:$0xff]
    %v1071 = vld [vmem:[#allocation10 + $0x50] sm:$0xff]
    %v1072 = vld [vmem:[#allocation10 + $0x58] sm:$0xff]
    %v1073 = vld [vmem:[#allocation10 + $0x60] sm:$0xff]
    %v1074 = vld [vmem:[#allocation10 + $0x68] sm:$0xff]
    %v1075 = vld [vmem:[#allocation10 + $0x70] sm:$0xff]
    %v1076 = vld [vmem:[#allocation10 + $0x78] sm:$0xff]
    %v1077 = vld [vmem:[#allocation10 + $0x80] sm:$0xff]
    %v1078 = vld [vmem:[#allocation10 + $0x88] sm:$0xff]
    %v1079 = vld [vmem:[#allocation10 + $0x90] sm:$0xff]
    %v1080 = vld [vmem:[#allocation10 + $0x98] sm:$0xff]
    %v1081 = vld [vmem:[#allocation10 + $0xa0] sm:$0xff]
    %v1082 = vld [vmem:[#allocation10 + $0xa8] sm:$0xff]
    %v1083 = vld [vmem:[#allocation10 + $0xb0] sm:$0xff]
    %v1084 = vld [vmem:[#allocation10 + $0xb8] sm:$0xff]
    %v1085 = vld [vmem:[#allocation10 + $0xc0] sm:$0xff]
    %v1086 = vld [vmem:[#allocation10 + $0xc8] sm:$0xff]
    %v1087 = vld [vmem:[#allocation10 + $0xd0] sm:$0xff]
    %v1088 = vld [vmem:[#allocation10 + $0xd8] sm:$0xff]
    %v1089 = vld [vmem:[#allocation10 + $0xe0] sm:$0xff]
    %v1090 = vld [vmem:[#allocation10 + $0xe8] sm:$0xff]
    %v1091 = vld [vmem:[#allocation10 + $0xf0] sm:$0xff]
    %v1092 = vld [vmem:[#allocation10 + $0xf8] sm:$0xff]
    %v1093 = vld [vmem:[#allocation10 + $0x100] sm:$0xff]
    %v1094 = vld [vmem:[#allocation10 + $0x108] sm:$0xff]
    %v1095 = vld [vmem:[#allocation10 + $0x110] sm:$0xff]
    %v1096 = vld [vmem:[#allocation10 + $0x118] sm:$0xff]
    %v1097 = vld [vmem:[#allocation10 + $0x120] sm:$0xff]
    %v1098 = vld [vmem:[#allocation10 + $0x128] sm:$0xff]
    %v1099 = vld [vmem:[#allocation10 + $0x130] sm:$0xff]
    %v1100 = vld [vmem:[#allocation10 + $0x138] sm:$0xff]
    %v1101 = vld [vmem:[#allocation10 + $0x140] sm:$0xff]
    %v1102 = vld [vmem:[#allocation10 + $0x148] sm:$0xff]
    %v1103 = vld [vmem:[#allocation10 + $0x150] sm:$0xff]
    %v1104 = vld [vmem:[#allocation10 + $0x158] sm:$0xff]
    %v1105 = vld [vmem:[#allocation10 + $0x160] sm:$0xff]
    %v1106 = vld [vmem:[#allocation10 + $0x168] sm:$0xff]
    %v1107 = vld [vmem:[#allocation10 + $0x170] sm:$0xff]
    %v1108 = vld [vmem:[#allocation10 + $0x178] sm:$0xff]
    %v1109 = vld [vmem:[#allocation10 + $0x180] sm:$0xff]
    %v1110 = vld [vmem:[#allocation10 + $0x188] sm:$0xff]
    %v1111 = vld [vmem:[#allocation10 + $0x190] sm:$0xff]
    %v1112 = vld [vmem:[#allocation10 + $0x198] sm:$0xff]
    %v1113 = vld [vmem:[#allocation10 + $0x1a0] sm:$0xff]
    %v1114 = vld [vmem:[#allocation10 + $0x1a8] sm:$0xff]
    %v1115 = vld [vmem:[#allocation10 + $0x1b0] sm:$0xff]
    %v1116 = vld [vmem:[#allocation10 + $0x1b8] sm:$0xff]
    %v1117 = vld [vmem:[#allocation10 + $0x1c0] sm:$0xff]
    %v1118 = vld [vmem:[#allocation10 + $0x1c8] sm:$0xff]
    %v1119 = vld [vmem:[#allocation10 + $0x1d0] sm:$0xff]
    %v1120 = vld [vmem:[#allocation10 + $0x1d8] sm:$0xff]
    %v1121 = vld [vmem:[#allocation10 + $0x1e0] sm:$0xff]
    %v1122 = vld [vmem:[#allocation10 + $0x1e8] sm:$0xff]
    %v1123 = vld [vmem:[#allocation10 + $0x1f0] sm:$0xff]
    %v1124 = vld [vmem:[#allocation10 + $0x1f8] sm:$0xff]
    %v1125 = vld [vmem:[#allocation10 + $0x200] sm:$0xff]
    %v1126 = vld [vmem:[#allocation10 + $0x208] sm:$0xff]
    %v1127 = vld [vmem:[#allocation10 + $0x210] sm:$0xff]
    %v1128 = vld [vmem:[#allocation10 + $0x218] sm:$0xff]
    %v1129 = vld [vmem:[#allocation10 + $0x220] sm:$0xff]
    %v1130 = vld [vmem:[#allocation10 + $0x228] sm:$0xff]
    %v1131 = vld [vmem:[#allocation10 + $0x230] sm:$0xff]
    %v1132 = vld [vmem:[#allocation10 + $0x238] sm:$0xff]
    %v1133 = vld [vmem:[#allocation10 + $0x240] sm:$0xff]
    %v1134 = vld [vmem:[#allocation10 + $0x248] sm:$0xff]
    %v1135 = vld [vmem:[#allocation10 + $0x250] sm:$0xff]
    %v1136 = vld [vmem:[#allocation10 + $0x258] sm:$0xff]
    %v1137 = vld [vmem:[#allocation10 + $0x260] sm:$0xff]
    %v1138 = vld [vmem:[#allocation10 + $0x268] sm:$0xff]
    %v1139 = vld [vmem:[#allocation10 + $0x270] sm:$0xff]
    %v1140 = vld [vmem:[#allocation10 + $0x278] sm:$0xff]
    %v1141 = vld [vmem:[#allocation10 + $0x280] sm:$0xff]
    %v1142 = vld [vmem:[#allocation10 + $0x288] sm:$0xff]
    %v1143 = vld [vmem:[#allocation10 + $0x290] sm:$0xff]
    %v1144 = vld [vmem:[#allocation10 + $0x298] sm:$0xff]
    %v1145 = vld [vmem:[#allocation10 + $0x2a0] sm:$0xff]
    %v1146 = vld [vmem:[#allocation10 + $0x2a8] sm:$0xff]
    %v1147 = vld [vmem:[#allocation10 + $0x2b0] sm:$0xff]
    %v1148 = vld [vmem:[#allocation10 + $0x2b8] sm:$0xff]
    %v1149 = vld [vmem:[#allocation10 + $0x2c0] sm:$0xff]
    %v1150 = vld [vmem:[#allocation10 + $0x2c8] sm:$0xff]
    %v1151 = vld [vmem:[#allocation10 + $0x2d0] sm:$0xff]
    %v1152 = vld [vmem:[#allocation10 + $0x2d8] sm:$0xff]
    %v1153 = vld [vmem:[#allocation10 + $0x2e0] sm:$0xff]
    %v1154 = vld [vmem:[#allocation10 + $0x2e8] sm:$0xff]
    %v1155 = vld [vmem:[#allocation10 + $0x2f0] sm:$0xff]
    %v1156 = vld [vmem:[#allocation10 + $0x2f8] sm:$0xff]
    %v1157 = vld [vmem:[#allocation10 + $0x300] sm:$0xff]
    %v1158 = vld [vmem:[#allocation10 + $0x308] sm:$0xff]
    %v1159 = vld [vmem:[#allocation10 + $0x310] sm:$0xff]
    %v1160 = vld [vmem:[#allocation10 + $0x318] sm:$0xff]
    %v1161 = vld [vmem:[#allocation10 + $0x320] sm:$0xff]
    %v1162 = vld [vmem:[#allocation10 + $0x328] sm:$0xff]
    %v1163 = vld [vmem:[#allocation10 + $0x330] sm:$0xff]
    %v1164 = vld [vmem:[#allocation10 + $0x338] sm:$0xff]
    %v1165 = vld [vmem:[#allocation10 + $0x340] sm:$0xff]
    %v1166 = vld [vmem:[#allocation10 + $0x348] sm:$0xff]
    %v1167 = vld [vmem:[#allocation10 + $0x350] sm:$0xff]
    %v1168 = vld [vmem:[#allocation10 + $0x358] sm:$0xff]
    %v1169 = vld [vmem:[#allocation10 + $0x360] sm:$0xff]
    %v1170 = vld [vmem:[#allocation10 + $0x368] sm:$0xff]
    %v1171 = vld [vmem:[#allocation10 + $0x370] sm:$0xff]
    %v1172 = vld [vmem:[#allocation10 + $0x378] sm:$0xff]
    %v1173 = vld [vmem:[#allocation10 + $0x380] sm:$0xff]
    %v1174 = vld [vmem:[#allocation10 + $0x388] sm:$0xff]
    %v1175 = vld [vmem:[#allocation10 + $0x390] sm:$0xff]
    %v1176 = vld [vmem:[#allocation10 + $0x398] sm:$0xff]
    %v1177 = vld [vmem:[#allocation10 + $0x3a0] sm:$0xff]
    %v1178 = vld [vmem:[#allocation10 + $0x3a8] sm:$0xff]
    %v1179 = vld [vmem:[#allocation10 + $0x3b0] sm:$0xff]
    %v1180 = vld [vmem:[#allocation10 + $0x3b8] sm:$0xff]
    %v1181 = vld [vmem:[#allocation10 + $0x3c0] sm:$0xff]
    %v1182 = vld [vmem:[#allocation10 + $0x3c8] sm:$0xff]
    %v1183 = vld [vmem:[#allocation10 + $0x3d0] sm:$0xff]
    %v1184 = vld [vmem:[#allocation10 + $0x3d8] sm:$0xff]
    %v1185 = vld [vmem:[#allocation10 + $0x3e0] sm:$0xff]
    %v1186 = vld [vmem:[#allocation10 + $0x3e8] sm:$0xff]
    %v1187 = vld [vmem:[#allocation10 + $0x3f0] sm:$0xff]
    %v1188 = vld [vmem:[#allocation10 + $0x3f8] sm:$0xff]
    %v1189 = vld [vmem:[#allocation10 + $0x400] sm:$0xff]
    %v1190 = vld [vmem:[#allocation10 + $0x408] sm:$0xff]
    %v1191 = vld [vmem:[#allocation10 + $0x410] sm:$0xff]
    %v1192 = vld [vmem:[#allocation10 + $0x418] sm:$0xff]
    %v1193 = vld [vmem:[#allocation10 + $0x420] sm:$0xff]
    %v1194 = vld [vmem:[#allocation10 + $0x428] sm:$0xff]
    %v1195 = vld [vmem:[#allocation10 + $0x430] sm:$0xff]
    %v1196 = vld [vmem:[#allocation10 + $0x438] sm:$0xff]
    %v1197 = vld [vmem:[#allocation10 + $0x440] sm:$0xff]
    %v1198 = vld [vmem:[#allocation10 + $0x448] sm:$0xff]
    %v1199 = vld [vmem:[#allocation10 + $0x450] sm:$0xff]
    %v1200 = vld [vmem:[#allocation10 + $0x458] sm:$0xff]
    %v1201 = vld [vmem:[#allocation10 + $0x460] sm:$0xff]
    %v1202 = vld [vmem:[#allocation10 + $0x468] sm:$0xff]
    %v1203 = vld [vmem:[#allocation10 + $0x470] sm:$0xff]
    %v1204 = vld [vmem:[#allocation10 + $0x478] sm:$0xff]
    %v1205 = vld [vmem:[#allocation10 + $0x480] sm:$0xff]
    %v1206 = vld [vmem:[#allocation10 + $0x488] sm:$0xff]
    %v1207 = vld [vmem:[#allocation10 + $0x490] sm:$0xff]
    %v1208 = vld [vmem:[#allocation10 + $0x498] sm:$0xff]
    %v1209 = vld [vmem:[#allocation10 + $0x4a0] sm:$0xff]
    %v1210 = vld [vmem:[#allocation10 + $0x4a8] sm:$0xff]
    %v1211 = vld [vmem:[#allocation10 + $0x4b0] sm:$0xff]
    %v1212 = vld [vmem:[#allocation10 + $0x4b8] sm:$0xff]
    %v1213 = vld [vmem:[#allocation10 + $0x4c0] sm:$0xff]
    %v1214 = vld [vmem:[#allocation10 + $0x4c8] sm:$0xff]
    %v1215 = vld [vmem:[#allocation10 + $0x4d0] sm:$0xff]
    %v1216 = vld [vmem:[#allocation10 + $0x4d8] sm:$0xff]
    %v1217 = vld [vmem:[#allocation10 + $0x4e0] sm:$0xff]
    %v1218 = vld [vmem:[#allocation10 + $0x4e8] sm:$0xff]
    %v1219 = vld [vmem:[#allocation10 + $0x4f0] sm:$0xff]
    %v1220 = vld [vmem:[#allocation10 + $0x4f8] sm:$0xff]
    %v1221 = vld [vmem:[#allocation10 + $0x500] sm:$0xff]
    %v1222 = vld [vmem:[#allocation10 + $0x508] sm:$0xff]
    %v1223 = vld [vmem:[#allocation10 + $0x510] sm:$0xff]
    %v1224 = vld [vmem:[#allocation10 + $0x518] sm:$0xff]
    %v1225 = vld [vmem:[#allocation10 + $0x520] sm:$0xff]
    %v1226 = vld [vmem:[#allocation10 + $0x528] sm:$0xff]
    %v1227 = vld [vmem:[#allocation10 + $0x530] sm:$0xff]
    %v1228 = vld [vmem:[#allocation10 + $0x538] sm:$0xff]
    %v1229 = vld [vmem:[#allocation10 + $0x540] sm:$0xff]
    %v1230 = vld [vmem:[#allocation10 + $0x548] sm:$0xff]
    %v1231 = vld [vmem:[#allocation10 + $0x550] sm:$0xff]
    %v1232 = vld [vmem:[#allocation10 + $0x558] sm:$0xff]
    %v1233 = vld [vmem:[#allocation10 + $0x560] sm:$0xff]
    %v1234 = vld [vmem:[#allocation10 + $0x568] sm:$0xff]
    %v1235 = vld [vmem:[#allocation10 + $0x570] sm:$0xff]
    %v1236 = vld [vmem:[#allocation10 + $0x578] sm:$0xff]
    %v1237 = vld [vmem:[#allocation10 + $0x580] sm:$0xff]
    %v1238 = vld [vmem:[#allocation10 + $0x588] sm:$0xff]
    %v1239 = vld [vmem:[#allocation10 + $0x590] sm:$0xff]
    %v1240 = vld [vmem:[#allocation10 + $0x598] sm:$0xff]
    %v1241 = vld [vmem:[#allocation10 + $0x5a0] sm:$0xff]
    %v1242 = vld [vmem:[#allocation10 + $0x5a8] sm:$0xff]
    %v1243 = vld [vmem:[#allocation10 + $0x5b0] sm:$0xff]
    %v1244 = vld [vmem:[#allocation10 + $0x5b8] sm:$0xff]
    %v1245 = vld [vmem:[#allocation10 + $0x5c0] sm:$0xff]
    %v1246 = vld [vmem:[#allocation10 + $0x5c8] sm:$0xff]
    %v1247 = vld [vmem:[#allocation10 + $0x5d0] sm:$0xff]
    %v1248 = vld [vmem:[#allocation10 + $0x5d8] sm:$0xff]
    %v1249 = vld [vmem:[#allocation10 + $0x5e0] sm:$0xff]
    %v1250 = vld [vmem:[#allocation10 + $0x5e8] sm:$0xff]
    %v1251 = vld [vmem:[#allocation10 + $0x5f0] sm:$0xff]
    %v1252 = vld [vmem:[#allocation10 + $0x5f8] sm:$0xff]
    %v1253 = vld [vmem:[#allocation10 + $0x600] sm:$0xff]
    %v1254 = vld [vmem:[#allocation10 + $0x608] sm:$0xff]
    %v1255 = vld [vmem:[#allocation10 + $0x610] sm:$0xff]
    %v1256 = vld [vmem:[#allocation10 + $0x618] sm:$0xff]
    %v1257 = vld [vmem:[#allocation10 + $0x620] sm:$0xff]
    %v1258 = vld [vmem:[#allocation10 + $0x628] sm:$0xff]
    %v1259 = vld [vmem:[#allocation10 + $0x630] sm:$0xff]
    %v1260 = vld [vmem:[#allocation10 + $0x638] sm:$0xff]
    %v1261 = vld [vmem:[#allocation10 + $0x640] sm:$0xff]
    %v1262 = vld [vmem:[#allocation10 + $0x648] sm:$0xff]
    %v1263 = vld [vmem:[#allocation10 + $0x650] sm:$0xff]
    %v1264 = vld [vmem:[#allocation10 + $0x658] sm:$0xff]
    %v1265 = vld [vmem:[#allocation10 + $0x660] sm:$0xff]
    %v1266 = vld [vmem:[#allocation10 + $0x668] sm:$0xff]
    %v1267 = vld [vmem:[#allocation10 + $0x670] sm:$0xff]
    %v1268 = vld [vmem:[#allocation10 + $0x678] sm:$0xff]
    %v1269 = vld [vmem:[#allocation10 + $0x680] sm:$0xff]
    %v1270 = vld [vmem:[#allocation10 + $0x688] sm:$0xff]
    %v1271 = vld [vmem:[#allocation10 + $0x690] sm:$0xff]
    %v1272 = vld [vmem:[#allocation10 + $0x698] sm:$0xff]
    %v1273 = vld [vmem:[#allocation10 + $0x6a0] sm:$0xff]
    %v1274 = vld [vmem:[#allocation10 + $0x6a8] sm:$0xff]
    %v1275 = vld [vmem:[#allocation10 + $0x6b0] sm:$0xff]
    %v1276 = vld [vmem:[#allocation10 + $0x6b8] sm:$0xff]
    %v1277 = vld [vmem:[#allocation10 + $0x6c0] sm:$0xff]
    %v1278 = vld [vmem:[#allocation10 + $0x6c8] sm:$0xff]
    %v1279 = vld [vmem:[#allocation10 + $0x6d0] sm:$0xff]
    %v1280 = vld [vmem:[#allocation10 + $0x6d8] sm:$0xff]
    %v1281 = vld [vmem:[#allocation10 + $0x6e0] sm:$0xff]
    %v1282 = vld [vmem:[#allocation10 + $0x6e8] sm:$0xff]
    %v1283 = vld [vmem:[#allocation10 + $0x6f0] sm:$0xff]
    %v1284 = vld [vmem:[#allocation10 + $0x6f8] sm:$0xff]
    %v1285 = vld [vmem:[#allocation10 + $0x700] sm:$0xff]
    %v1286 = vld [vmem:[#allocation10 + $0x708] sm:$0xff]
    %v1287 = vld [vmem:[#allocation10 + $0x710] sm:$0xff]
    %v1288 = vld [vmem:[#allocation10 + $0x718] sm:$0xff]
    %v1289 = vld [vmem:[#allocation10 + $0x720] sm:$0xff]
    %v1290 = vld [vmem:[#allocation10 + $0x728] sm:$0xff]
    %v1291 = vld [vmem:[#allocation10 + $0x730] sm:$0xff]
    %v1292 = vld [vmem:[#allocation10 + $0x738] sm:$0xff]
    %v1293 = vld [vmem:[#allocation10 + $0x740] sm:$0xff]
    %v1294 = vld [vmem:[#allocation10 + $0x748] sm:$0xff]
    %v1295 = vld [vmem:[#allocation10 + $0x750] sm:$0xff]
    %v1296 = vld [vmem:[#allocation10 + $0x758] sm:$0xff]
    %v1297 = vld [vmem:[#allocation10 + $0x760] sm:$0xff]
    %v1298 = vld [vmem:[#allocation10 + $0x768] sm:$0xff]
    %v1299 = vld [vmem:[#allocation10 + $0x770] sm:$0xff]
    %v1300 = vld [vmem:[#allocation10 + $0x778] sm:$0xff]
    %v1301 = vld [vmem:[#allocation10 + $0x780] sm:$0xff]
    %v1302 = vld [vmem:[#allocation10 + $0x788] sm:$0xff]
    %v1303 = vld [vmem:[#allocation10 + $0x790] sm:$0xff]
    %v1304 = vld [vmem:[#allocation10 + $0x798] sm:$0xff]
    %v1305 = vld [vmem:[#allocation10 + $0x7a0] sm:$0xff]
    %v1306 = vld [vmem:[#allocation10 + $0x7a8] sm:$0xff]
    %v1307 = vld [vmem:[#allocation10 + $0x7b0] sm:$0xff]
    %v1308 = vld [vmem:[#allocation10 + $0x7b8] sm:$0xff]
    %v1309 = vld [vmem:[#allocation10 + $0x7c0] sm:$0xff]
    %v1310 = vld [vmem:[#allocation10 + $0x7c8] sm:$0xff]
    %v1311 = vld [vmem:[#allocation10 + $0x7d0] sm:$0xff]
    %v1312 = vld [vmem:[#allocation10 + $0x7d8] sm:$0xff]
    %v1313 = vld [vmem:[#allocation10 + $0x7e0] sm:$0xff]
    %v1314 = vld [vmem:[#allocation10 + $0x7e8] sm:$0xff]
    %v1315 = vld [vmem:[#allocation10 + $0x7f0] sm:$0xff]
    %v1316 = vld [vmem:[#allocation10 + $0x7f8] sm:$0xff]
    %v1317 = vld [vmem:[#allocation13 + $0x13] sm:$0xff]
    %v1319 = vlaneseq
    %v1320 = vshrl.u32 %v1319, 7
    %v1321 = vsub.s32 0, %v1320
    %v1322 = vrot.slane %v1317, %v1321
    %v1323 = vlaneseq
    %v1324 = vshrl.u32 %v1323, 7
    %v1325 = vsub.s32 1, %v1324
    %v1326 = vrot.slane %v1317, %v1325
    %v1327 = vlaneseq
    %v1328 = vshrl.u32 %v1327, 7
    %v1329 = vsub.s32 2, %v1328
    %v1330 = vrot.slane %v1317, %v1329
    %v1331 = vlaneseq
    %v1332 = vshrl.u32 %v1331, 7
    %v1333 = vsub.s32 3, %v1332
    %v1334 = vrot.slane %v1317, %v1333
    %v1335 = vlaneseq
    %v1336 = vshrl.u32 %v1335, 7
    %v1337 = vsub.s32 4, %v1336
    %v1338 = vrot.slane %v1317, %v1337
    %v1339 = vlaneseq
    %v1340 = vshrl.u32 %v1339, 7
    %v1341 = vsub.s32 5, %v1340
    %v1342 = vrot.slane %v1317, %v1341
    %v1343 = vlaneseq
    %v1344 = vshrl.u32 %v1343, 7
    %v1345 = vsub.s32 6, %v1344
    %v1346 = vrot.slane %v1317, %v1345
    %v1347 = vlaneseq
    %v1348 = vshrl.u32 %v1347, 7
    %v1349 = vsub.s32 7, %v1348
    %v1350 = vrot.slane %v1317, %v1349
    %v1615 = vunpack.c.l.b16 %v1061
    %v1616 = vunpack.c.h.b16 %v1061
    %v1617 = vunpack.c.l.b16 %v1062
    %v1618 = vunpack.c.h.b16 %v1062
    %v1619 = vunpack.c.l.b16 %v1063
    %v1620 = vunpack.c.h.b16 %v1063
    %v1621 = vunpack.c.l.b16 %v1064
    %v1622 = vunpack.c.h.b16 %v1064
    %v1623 = vunpack.c.l.b16 %v1065
    %v1624 = vunpack.c.h.b16 %v1065
    %v1625 = vunpack.c.l.b16 %v1066
    %v1626 = vunpack.c.h.b16 %v1066
    %v1627 = vunpack.c.l.b16 %v1067
    %v1628 = vunpack.c.h.b16 %v1067
    %v1629 = vunpack.c.l.b16 %v1068
    %v1630 = vunpack.c.h.b16 %v1068
    %v1631 = vunpack.c.l.b16 %v1069
    %v1632 = vunpack.c.h.b16 %v1069
    %v1633 = vunpack.c.l.b16 %v1070
    %v1634 = vunpack.c.h.b16 %v1070
    %v1635 = vunpack.c.l.b16 %v1071
    %v1636 = vunpack.c.h.b16 %v1071
    %v1637 = vunpack.c.l.b16 %v1072
    %v1638 = vunpack.c.h.b16 %v1072
    %v1639 = vunpack.c.l.b16 %v1073
    %v1640 = vunpack.c.h.b16 %v1073
    %v1641 = vunpack.c.l.b16 %v1074
    %v1642 = vunpack.c.h.b16 %v1074
    %v1643 = vunpack.c.l.b16 %v1075
    %v1644 = vunpack.c.h.b16 %v1075
    %v1645 = vunpack.c.l.b16 %v1076
    %v1646 = vunpack.c.h.b16 %v1076
    %v1647 = vunpack.c.l.b16 %v1077
    %v1648 = vunpack.c.h.b16 %v1077
    %v1649 = vunpack.c.l.b16 %v1078
    %v1650 = vunpack.c.h.b16 %v1078
    %v1651 = vunpack.c.l.b16 %v1079
    %v1652 = vunpack.c.h.b16 %v1079
    %v1653 = vunpack.c.l.b16 %v1080
    %v1654 = vunpack.c.h.b16 %v1080
    %v1655 = vunpack.c.l.b16 %v1081
    %v1656 = vunpack.c.h.b16 %v1081
    %v1657 = vunpack.c.l.b16 %v1082
    %v1658 = vunpack.c.h.b16 %v1082
    %v1659 = vunpack.c.l.b16 %v1083
    %v1660 = vunpack.c.h.b16 %v1083
    %v1661 = vunpack.c.l.b16 %v1084
    %v1662 = vunpack.c.h.b16 %v1084
    %v1663 = vunpack.c.l.b16 %v1085
    %v1664 = vunpack.c.h.b16 %v1085
    %v1665 = vunpack.c.l.b16 %v1086
    %v1666 = vunpack.c.h.b16 %v1086
    %v1667 = vunpack.c.l.b16 %v1087
    %v1668 = vunpack.c.h.b16 %v1087
    %v1669 = vunpack.c.l.b16 %v1088
    %v1670 = vunpack.c.h.b16 %v1088
    %v1671 = vunpack.c.l.b16 %v1089
    %v1672 = vunpack.c.h.b16 %v1089
    %v1673 = vunpack.c.l.b16 %v1090
    %v1674 = vunpack.c.h.b16 %v1090
    %v1675 = vunpack.c.l.b16 %v1091
    %v1676 = vunpack.c.h.b16 %v1091
    %v1677 = vunpack.c.l.b16 %v1092
    %v1678 = vunpack.c.h.b16 %v1092
    %v1679 = vunpack.c.l.b16 %v1093
    %v1680 = vunpack.c.h.b16 %v1093
    %v1681 = vunpack.c.l.b16 %v1094
    %v1682 = vunpack.c.h.b16 %v1094
    %v1683 = vunpack.c.l.b16 %v1095
    %v1684 = vunpack.c.h.b16 %v1095
    %v1685 = vunpack.c.l.b16 %v1096
    %v1686 = vunpack.c.h.b16 %v1096
    %v1687 = vunpack.c.l.b16 %v1097
    %v1688 = vunpack.c.h.b16 %v1097
    %v1689 = vunpack.c.l.b16 %v1098
    %v1690 = vunpack.c.h.b16 %v1098
    %v1691 = vunpack.c.l.b16 %v1099
    %v1692 = vunpack.c.h.b16 %v1099
    %v1693 = vunpack.c.l.b16 %v1100
    %v1694 = vunpack.c.h.b16 %v1100
    %v1695 = vunpack.c.l.b16 %v1101
    %v1696 = vunpack.c.h.b16 %v1101
    %v1697 = vunpack.c.l.b16 %v1102
    %v1698 = vunpack.c.h.b16 %v1102
    %v1699 = vunpack.c.l.b16 %v1103
    %v1700 = vunpack.c.h.b16 %v1103
    %v1701 = vunpack.c.l.b16 %v1104
    %v1702 = vunpack.c.h.b16 %v1104
    %v1703 = vunpack.c.l.b16 %v1105
    %v1704 = vunpack.c.h.b16 %v1105
    %v1705 = vunpack.c.l.b16 %v1106
    %v1706 = vunpack.c.h.b16 %v1106
    %v1707 = vunpack.c.l.b16 %v1107
    %v1708 = vunpack.c.h.b16 %v1107
    %v1709 = vunpack.c.l.b16 %v1108
    %v1710 = vunpack.c.h.b16 %v1108
    %v1711 = vunpack.c.l.b16 %v1109
    %v1712 = vunpack.c.h.b16 %v1109
    %v1713 = vunpack.c.l.b16 %v1110
    %v1714 = vunpack.c.h.b16 %v1110
    %v1715 = vunpack.c.l.b16 %v1111
    %v1716 = vunpack.c.h.b16 %v1111
    %v1717 = vunpack.c.l.b16 %v1112
    %v1718 = vunpack.c.h.b16 %v1112
    %v1719 = vunpack.c.l.b16 %v1113
    %v1720 = vunpack.c.h.b16 %v1113
    %v1721 = vunpack.c.l.b16 %v1114
    %v1722 = vunpack.c.h.b16 %v1114
    %v1723 = vunpack.c.l.b16 %v1115
    %v1724 = vunpack.c.h.b16 %v1115
    %v1725 = vunpack.c.l.b16 %v1116
    %v1726 = vunpack.c.h.b16 %v1116
    %v1727 = vunpack.c.l.b16 %v1117
    %v1728 = vunpack.c.h.b16 %v1117
    %v1729 = vunpack.c.l.b16 %v1118
    %v1730 = vunpack.c.h.b16 %v1118
    %v1731 = vunpack.c.l.b16 %v1119
    %v1732 = vunpack.c.h.b16 %v1119
    %v1733 = vunpack.c.l.b16 %v1120
    %v1734 = vunpack.c.h.b16 %v1120
    %v1735 = vunpack.c.l.b16 %v1121
    %v1736 = vunpack.c.h.b16 %v1121
    %v1737 = vunpack.c.l.b16 %v1122
    %v1738 = vunpack.c.h.b16 %v1122
    %v1739 = vunpack.c.l.b16 %v1123
    %v1740 = vunpack.c.h.b16 %v1123
    %v1741 = vunpack.c.l.b16 %v1124
    %v1742 = vunpack.c.h.b16 %v1124
    %v1743 = vunpack.c.l.b16 %v1125
    %v1744 = vunpack.c.h.b16 %v1125
    %v1745 = vunpack.c.l.b16 %v1126
    %v1746 = vunpack.c.h.b16 %v1126
    %v1747 = vunpack.c.l.b16 %v1127
    %v1748 = vunpack.c.h.b16 %v1127
    %v1749 = vunpack.c.l.b16 %v1128
    %v1750 = vunpack.c.h.b16 %v1128
    %v1751 = vunpack.c.l.b16 %v1129
    %v1752 = vunpack.c.h.b16 %v1129
    %v1753 = vunpack.c.l.b16 %v1130
    %v1754 = vunpack.c.h.b16 %v1130
    %v1755 = vunpack.c.l.b16 %v1131
    %v1756 = vunpack.c.h.b16 %v1131
    %v1757 = vunpack.c.l.b16 %v1132
    %v1758 = vunpack.c.h.b16 %v1132
    %v1759 = vunpack.c.l.b16 %v1133
    %v1760 = vunpack.c.h.b16 %v1133
    %v1761 = vunpack.c.l.b16 %v1134
    %v1762 = vunpack.c.h.b16 %v1134
    %v1763 = vunpack.c.l.b16 %v1135
    %v1764 = vunpack.c.h.b16 %v1135
    %v1765 = vunpack.c.l.b16 %v1136
    %v1766 = vunpack.c.h.b16 %v1136
    %v1767 = vunpack.c.l.b16 %v1137
    %v1768 = vunpack.c.h.b16 %v1137
    %v1769 = vunpack.c.l.b16 %v1138
    %v1770 = vunpack.c.h.b16 %v1138
    %v1771 = vunpack.c.l.b16 %v1139
    %v1772 = vunpack.c.h.b16 %v1139
    %v1773 = vunpack.c.l.b16 %v1140
    %v1774 = vunpack.c.h.b16 %v1140
    %v1775 = vunpack.c.l.b16 %v1141
    %v1776 = vunpack.c.h.b16 %v1141
    %v1777 = vunpack.c.l.b16 %v1142
    %v1778 = vunpack.c.h.b16 %v1142
    %v1779 = vunpack.c.l.b16 %v1143
    %v1780 = vunpack.c.h.b16 %v1143
    %v1781 = vunpack.c.l.b16 %v1144
    %v1782 = vunpack.c.h.b16 %v1144
    %v1783 = vunpack.c.l.b16 %v1145
    %v1784 = vunpack.c.h.b16 %v1145
    %v1785 = vunpack.c.l.b16 %v1146
    %v1786 = vunpack.c.h.b16 %v1146
    %v1787 = vunpack.c.l.b16 %v1147
    %v1788 = vunpack.c.h.b16 %v1147
    %v1789 = vunpack.c.l.b16 %v1148
    %v1790 = vunpack.c.h.b16 %v1148
    %v1791 = vunpack.c.l.b16 %v1149
    %v1792 = vunpack.c.h.b16 %v1149
    %v1793 = vunpack.c.l.b16 %v1150
    %v1794 = vunpack.c.h.b16 %v1150
    %v1795 = vunpack.c.l.b16 %v1151
    %v1796 = vunpack.c.h.b16 %v1151
    %v1797 = vunpack.c.l.b16 %v1152
    %v1798 = vunpack.c.h.b16 %v1152
    %v1799 = vunpack.c.l.b16 %v1153
    %v1800 = vunpack.c.h.b16 %v1153
    %v1801 = vunpack.c.l.b16 %v1154
    %v1802 = vunpack.c.h.b16 %v1154
    %v1803 = vunpack.c.l.b16 %v1155
    %v1804 = vunpack.c.h.b16 %v1155
    %v1805 = vunpack.c.l.b16 %v1156
    %v1806 = vunpack.c.h.b16 %v1156
    %v1807 = vunpack.c.l.b16 %v1157
    %v1808 = vunpack.c.h.b16 %v1157
    %v1809 = vunpack.c.l.b16 %v1158
    %v1810 = vunpack.c.h.b16 %v1158
    %v1811 = vunpack.c.l.b16 %v1159
    %v1812 = vunpack.c.h.b16 %v1159
    %v1813 = vunpack.c.l.b16 %v1160
    %v1814 = vunpack.c.h.b16 %v1160
    %v1815 = vunpack.c.l.b16 %v1161
    %v1816 = vunpack.c.h.b16 %v1161
    %v1817 = vunpack.c.l.b16 %v1162
    %v1818 = vunpack.c.h.b16 %v1162
    %v1819 = vunpack.c.l.b16 %v1163
    %v1820 = vunpack.c.h.b16 %v1163
    %v1821 = vunpack.c.l.b16 %v1164
    %v1822 = vunpack.c.h.b16 %v1164
    %v1823 = vunpack.c.l.b16 %v1165
    %v1824 = vunpack.c.h.b16 %v1165
    %v1825 = vunpack.c.l.b16 %v1166
    %v1826 = vunpack.c.h.b16 %v1166
    %v1827 = vunpack.c.l.b16 %v1167
    %v1828 = vunpack.c.h.b16 %v1167
    %v1829 = vunpack.c.l.b16 %v1168
    %v1830 = vunpack.c.h.b16 %v1168
    %v1831 = vunpack.c.l.b16 %v1169
    %v1832 = vunpack.c.h.b16 %v1169
    %v1833 = vunpack.c.l.b16 %v1170
    %v1834 = vunpack.c.h.b16 %v1170
    %v1835 = vunpack.c.l.b16 %v1171
    %v1836 = vunpack.c.h.b16 %v1171
    %v1837 = vunpack.c.l.b16 %v1172
    %v1838 = vunpack.c.h.b16 %v1172
    %v1839 = vunpack.c.l.b16 %v1173
    %v1840 = vunpack.c.h.b16 %v1173
    %v1841 = vunpack.c.l.b16 %v1174
    %v1842 = vunpack.c.h.b16 %v1174
    %v1843 = vunpack.c.l.b16 %v1175
    %v1844 = vunpack.c.h.b16 %v1175
    %v1845 = vunpack.c.l.b16 %v1176
    %v1846 = vunpack.c.h.b16 %v1176
    %v1847 = vunpack.c.l.b16 %v1177
    %v1848 = vunpack.c.h.b16 %v1177
    %v1849 = vunpack.c.l.b16 %v1178
    %v1850 = vunpack.c.h.b16 %v1178
    %v1851 = vunpack.c.l.b16 %v1179
    %v1852 = vunpack.c.h.b16 %v1179
    %v1853 = vunpack.c.l.b16 %v1180
    %v1854 = vunpack.c.h.b16 %v1180
    %v1855 = vunpack.c.l.b16 %v1181
    %v1856 = vunpack.c.h.b16 %v1181
    %v1857 = vunpack.c.l.b16 %v1182
    %v1858 = vunpack.c.h.b16 %v1182
    %v1859 = vunpack.c.l.b16 %v1183
    %v1860 = vunpack.c.h.b16 %v1183
    %v1861 = vunpack.c.l.b16 %v1184
    %v1862 = vunpack.c.h.b16 %v1184
    %v1863 = vunpack.c.l.b16 %v1185
    %v1864 = vunpack.c.h.b16 %v1185
    %v1865 = vunpack.c.l.b16 %v1186
    %v1866 = vunpack.c.h.b16 %v1186
    %v1867 = vunpack.c.l.b16 %v1187
    %v1868 = vunpack.c.h.b16 %v1187
    %v1869 = vunpack.c.l.b16 %v1188
    %v1870 = vunpack.c.h.b16 %v1188
    %v1871 = vunpack.c.l.b16 %v1189
    %v1872 = vunpack.c.h.b16 %v1189
    %v1873 = vunpack.c.l.b16 %v1190
    %v1874 = vunpack.c.h.b16 %v1190
    %v1875 = vunpack.c.l.b16 %v1191
    %v1876 = vunpack.c.h.b16 %v1191
    %v1877 = vunpack.c.l.b16 %v1192
    %v1878 = vunpack.c.h.b16 %v1192
    %v1879 = vunpack.c.l.b16 %v1193
    %v1880 = vunpack.c.h.b16 %v1193
    %v1881 = vunpack.c.l.b16 %v1194
    %v1882 = vunpack.c.h.b16 %v1194
    %v1883 = vunpack.c.l.b16 %v1195
    %v1884 = vunpack.c.h.b16 %v1195
    %v1885 = vunpack.c.l.b16 %v1196
    %v1886 = vunpack.c.h.b16 %v1196
    %v1887 = vunpack.c.l.b16 %v1197
    %v1888 = vunpack.c.h.b16 %v1197
    %v1889 = vunpack.c.l.b16 %v1198
    %v1890 = vunpack.c.h.b16 %v1198
    %v1891 = vunpack.c.l.b16 %v1199
    %v1892 = vunpack.c.h.b16 %v1199
    %v1893 = vunpack.c.l.b16 %v1200
    %v1894 = vunpack.c.h.b16 %v1200
    %v1895 = vunpack.c.l.b16 %v1201
    %v1896 = vunpack.c.h.b16 %v1201
    %v1897 = vunpack.c.l.b16 %v1202
    %v1898 = vunpack.c.h.b16 %v1202
    %v1899 = vunpack.c.l.b16 %v1203
    %v1900 = vunpack.c.h.b16 %v1203
    %v1901 = vunpack.c.l.b16 %v1204
    %v1902 = vunpack.c.h.b16 %v1204
    %v1903 = vunpack.c.l.b16 %v1205
    %v1904 = vunpack.c.h.b16 %v1205
    %v1905 = vunpack.c.l.b16 %v1206
    %v1906 = vunpack.c.h.b16 %v1206
    %v1907 = vunpack.c.l.b16 %v1207
    %v1908 = vunpack.c.h.b16 %v1207
    %v1909 = vunpack.c.l.b16 %v1208
    %v1910 = vunpack.c.h.b16 %v1208
    %v1911 = vunpack.c.l.b16 %v1209
    %v1912 = vunpack.c.h.b16 %v1209
    %v1913 = vunpack.c.l.b16 %v1210
    %v1914 = vunpack.c.h.b16 %v1210
    %v1915 = vunpack.c.l.b16 %v1211
    %v1916 = vunpack.c.h.b16 %v1211
    %v1917 = vunpack.c.l.b16 %v1212
    %v1918 = vunpack.c.h.b16 %v1212
    %v1919 = vunpack.c.l.b16 %v1213
    %v1920 = vunpack.c.h.b16 %v1213
    %v1921 = vunpack.c.l.b16 %v1214
    %v1922 = vunpack.c.h.b16 %v1214
    %v1923 = vunpack.c.l.b16 %v1215
    %v1924 = vunpack.c.h.b16 %v1215
    %v1925 = vunpack.c.l.b16 %v1216
    %v1926 = vunpack.c.h.b16 %v1216
    %v1927 = vunpack.c.l.b16 %v1217
    %v1928 = vunpack.c.h.b16 %v1217
    %v1929 = vunpack.c.l.b16 %v1218
    %v1930 = vunpack.c.h.b16 %v1218
    %v1931 = vunpack.c.l.b16 %v1219
    %v1932 = vunpack.c.h.b16 %v1219
    %v1933 = vunpack.c.l.b16 %v1220
    %v1934 = vunpack.c.h.b16 %v1220
    %v1935 = vunpack.c.l.b16 %v1221
    %v1936 = vunpack.c.h.b16 %v1221
    %v1937 = vunpack.c.l.b16 %v1222
    %v1938 = vunpack.c.h.b16 %v1222
    %v1939 = vunpack.c.l.b16 %v1223
    %v1940 = vunpack.c.h.b16 %v1223
    %v1941 = vunpack.c.l.b16 %v1224
    %v1942 = vunpack.c.h.b16 %v1224
    %v1943 = vunpack.c.l.b16 %v1225
    %v1944 = vunpack.c.h.b16 %v1225
    %v1945 = vunpack.c.l.b16 %v1226
    %v1946 = vunpack.c.h.b16 %v1226
    %v1947 = vunpack.c.l.b16 %v1227
    %v1948 = vunpack.c.h.b16 %v1227
    %v1949 = vunpack.c.l.b16 %v1228
    %v1950 = vunpack.c.h.b16 %v1228
    %v1951 = vunpack.c.l.b16 %v1229
    %v1952 = vunpack.c.h.b16 %v1229
    %v1953 = vunpack.c.l.b16 %v1230
    %v1954 = vunpack.c.h.b16 %v1230
    %v1955 = vunpack.c.l.b16 %v1231
    %v1956 = vunpack.c.h.b16 %v1231
    %v1957 = vunpack.c.l.b16 %v1232
    %v1958 = vunpack.c.h.b16 %v1232
    %v1959 = vunpack.c.l.b16 %v1233
    %v1960 = vunpack.c.h.b16 %v1233
    %v1961 = vunpack.c.l.b16 %v1234
    %v1962 = vunpack.c.h.b16 %v1234
    %v1963 = vunpack.c.l.b16 %v1235
    %v1964 = vunpack.c.h.b16 %v1235
    %v1965 = vunpack.c.l.b16 %v1236
    %v1966 = vunpack.c.h.b16 %v1236
    %v1967 = vunpack.c.l.b16 %v1237
    %v1968 = vunpack.c.h.b16 %v1237
    %v1969 = vunpack.c.l.b16 %v1238
    %v1970 = vunpack.c.h.b16 %v1238
    %v1971 = vunpack.c.l.b16 %v1239
    %v1972 = vunpack.c.h.b16 %v1239
    %v1973 = vunpack.c.l.b16 %v1240
    %v1974 = vunpack.c.h.b16 %v1240
    %v1975 = vunpack.c.l.b16 %v1241
    %v1976 = vunpack.c.h.b16 %v1241
    %v1977 = vunpack.c.l.b16 %v1242
    %v1978 = vunpack.c.h.b16 %v1242
    %v1979 = vunpack.c.l.b16 %v1243
    %v1980 = vunpack.c.h.b16 %v1243
    %v1981 = vunpack.c.l.b16 %v1244
    %v1982 = vunpack.c.h.b16 %v1244
    %v1983 = vunpack.c.l.b16 %v1245
    %v1984 = vunpack.c.h.b16 %v1245
    %v1985 = vunpack.c.l.b16 %v1246
    %v1986 = vunpack.c.h.b16 %v1246
    %v1987 = vunpack.c.l.b16 %v1247
    %v1988 = vunpack.c.h.b16 %v1247
    %v1989 = vunpack.c.l.b16 %v1248
    %v1990 = vunpack.c.h.b16 %v1248
    %v1991 = vunpack.c.l.b16 %v1249
    %v1992 = vunpack.c.h.b16 %v1249
    %v1993 = vunpack.c.l.b16 %v1250
    %v1994 = vunpack.c.h.b16 %v1250
    %v1995 = vunpack.c.l.b16 %v1251
    %v1996 = vunpack.c.h.b16 %v1251
    %v1997 = vunpack.c.l.b16 %v1252
    %v1998 = vunpack.c.h.b16 %v1252
    %v1999 = vunpack.c.l.b16 %v1253
    %v2000 = vunpack.c.h.b16 %v1253
    %v2001 = vunpack.c.l.b16 %v1254
    %v2002 = vunpack.c.h.b16 %v1254
    %v2003 = vunpack.c.l.b16 %v1255
    %v2004 = vunpack.c.h.b16 %v1255
    %v2005 = vunpack.c.l.b16 %v1256
    %v2006 = vunpack.c.h.b16 %v1256
    %v2007 = vunpack.c.l.b16 %v1257
    %v2008 = vunpack.c.h.b16 %v1257
    %v2009 = vunpack.c.l.b16 %v1258
    %v2010 = vunpack.c.h.b16 %v1258
    %v2011 = vunpack.c.l.b16 %v1259
    %v2012 = vunpack.c.h.b16 %v1259
    %v2013 = vunpack.c.l.b16 %v1260
    %v2014 = vunpack.c.h.b16 %v1260
    %v2015 = vunpack.c.l.b16 %v1261
    %v2016 = vunpack.c.h.b16 %v1261
    %v2017 = vunpack.c.l.b16 %v1262
    %v2018 = vunpack.c.h.b16 %v1262
    %v2019 = vunpack.c.l.b16 %v1263
    %v2020 = vunpack.c.h.b16 %v1263
    %v2021 = vunpack.c.l.b16 %v1264
    %v2022 = vunpack.c.h.b16 %v1264
    %v2023 = vunpack.c.l.b16 %v1265
    %v2024 = vunpack.c.h.b16 %v1265
    %v2025 = vunpack.c.l.b16 %v1266
    %v2026 = vunpack.c.h.b16 %v1266
    %v2027 = vunpack.c.l.b16 %v1267
    %v2028 = vunpack.c.h.b16 %v1267
    %v2029 = vunpack.c.l.b16 %v1268
    %v2030 = vunpack.c.h.b16 %v1268
    %v2031 = vunpack.c.l.b16 %v1269
    %v2032 = vunpack.c.h.b16 %v1269
    %v2033 = vunpack.c.l.b16 %v1270
    %v2034 = vunpack.c.h.b16 %v1270
    %v2035 = vunpack.c.l.b16 %v1271
    %v2036 = vunpack.c.h.b16 %v1271
    %v2037 = vunpack.c.l.b16 %v1272
    %v2038 = vunpack.c.h.b16 %v1272
    %v2039 = vunpack.c.l.b16 %v1273
    %v2040 = vunpack.c.h.b16 %v1273
    %v2041 = vunpack.c.l.b16 %v1274
    %v2042 = vunpack.c.h.b16 %v1274
    %v2043 = vunpack.c.l.b16 %v1275
    %v2044 = vunpack.c.h.b16 %v1275
    %v2045 = vunpack.c.l.b16 %v1276
    %v2046 = vunpack.c.h.b16 %v1276
    %v2047 = vunpack.c.l.b16 %v1277
    %v2048 = vunpack.c.h.b16 %v1277
    %v2049 = vunpack.c.l.b16 %v1278
    %v2050 = vunpack.c.h.b16 %v1278
    %v2051 = vunpack.c.l.b16 %v1279
    %v2052 = vunpack.c.h.b16 %v1279
    %v2053 = vunpack.c.l.b16 %v1280
    %v2054 = vunpack.c.h.b16 %v1280
    %v2055 = vunpack.c.l.b16 %v1281
    %v2056 = vunpack.c.h.b16 %v1281
    %v2057 = vunpack.c.l.b16 %v1282
    %v2058 = vunpack.c.h.b16 %v1282
    %v2059 = vunpack.c.l.b16 %v1283
    %v2060 = vunpack.c.h.b16 %v1283
    %v2061 = vunpack.c.l.b16 %v1284
    %v2062 = vunpack.c.h.b16 %v1284
    %v2063 = vunpack.c.l.b16 %v1285
    %v2064 = vunpack.c.h.b16 %v1285
    %v2065 = vunpack.c.l.b16 %v1286
    %v2066 = vunpack.c.h.b16 %v1286
    %v2067 = vunpack.c.l.b16 %v1287
    %v2068 = vunpack.c.h.b16 %v1287
    %v2069 = vunpack.c.l.b16 %v1288
    %v2070 = vunpack.c.h.b16 %v1288
    %v2071 = vunpack.c.l.b16 %v1289
    %v2072 = vunpack.c.h.b16 %v1289
    %v2073 = vunpack.c.l.b16 %v1290
    %v2074 = vunpack.c.h.b16 %v1290
    %v2075 = vunpack.c.l.b16 %v1291
    %v2076 = vunpack.c.h.b16 %v1291
    %v2077 = vunpack.c.l.b16 %v1292
    %v2078 = vunpack.c.h.b16 %v1292
    %v2079 = vunpack.c.l.b16 %v1293
    %v2080 = vunpack.c.h.b16 %v1293
    %v2081 = vunpack.c.l.b16 %v1294
    %v2082 = vunpack.c.h.b16 %v1294
    %v2083 = vunpack.c.l.b16 %v1295
    %v2084 = vunpack.c.h.b16 %v1295
    %v2085 = vunpack.c.l.b16 %v1296
    %v2086 = vunpack.c.h.b16 %v1296
    %v2087 = vunpack.c.l.b16 %v1297
    %v2088 = vunpack.c.h.b16 %v1297
    %v2089 = vunpack.c.l.b16 %v1298
    %v2090 = vunpack.c.h.b16 %v1298
    %v2091 = vunpack.c.l.b16 %v1299
    %v2092 = vunpack.c.h.b16 %v1299
    %v2093 = vunpack.c.l.b16 %v1300
    %v2094 = vunpack.c.h.b16 %v1300
    %v2095 = vunpack.c.l.b16 %v1301
    %v2096 = vunpack.c.h.b16 %v1301
    %v2097 = vunpack.c.l.b16 %v1302
    %v2098 = vunpack.c.h.b16 %v1302
    %v2099 = vunpack.c.l.b16 %v1303
    %v2100 = vunpack.c.h.b16 %v1303
    %v2101 = vunpack.c.l.b16 %v1304
    %v2102 = vunpack.c.h.b16 %v1304
    %v2103 = vunpack.c.l.b16 %v1305
    %v2104 = vunpack.c.h.b16 %v1305
    %v2105 = vunpack.c.l.b16 %v1306
    %v2106 = vunpack.c.h.b16 %v1306
    %v2107 = vunpack.c.l.b16 %v1307
    %v2108 = vunpack.c.h.b16 %v1307
    %v2109 = vunpack.c.l.b16 %v1308
    %v2110 = vunpack.c.h.b16 %v1308
    %v2111 = vunpack.c.l.b16 %v1309
    %v2112 = vunpack.c.h.b16 %v1309
    %v2113 = vunpack.c.l.b16 %v1310
    %v2114 = vunpack.c.h.b16 %v1310
    %v2115 = vunpack.c.l.b16 %v1311
    %v2116 = vunpack.c.h.b16 %v1311
    %v2117 = vunpack.c.l.b16 %v1312
    %v2118 = vunpack.c.h.b16 %v1312
    %v2119 = vunpack.c.l.b16 %v1313
    %v2120 = vunpack.c.h.b16 %v1313
    %v2121 = vunpack.c.l.b16 %v1314
    %v2122 = vunpack.c.h.b16 %v1314
    %v2123 = vunpack.c.l.b16 %v1315
    %v2124 = vunpack.c.h.b16 %v1315
    %v2125 = vunpack.c.l.b16 %v1316
    %v2126 = vunpack.c.h.b16 %v1316
    %v2127 = vpack.c.b16 %v1623, %v1615
    %v2128 = vpack.c.b16 %v1624, %v1616
    %v2129 = vpack.c.b16 %v1625, %v1617
    %v2130 = vpack.c.b16 %v1626, %v1618
    %v2131 = vpack.c.b16 %v1627, %v1619
    %v2132 = vpack.c.b16 %v1628, %v1620
    %v2133 = vpack.c.b16 %v1629, %v1621
    %v2134 = vpack.c.b16 %v1630, %v1622
    %v2135 = vpack.c.b16 %v1639, %v1631
    %v2136 = vpack.c.b16 %v1640, %v1632
    %v2137 = vpack.c.b16 %v1641, %v1633
    %v2138 = vpack.c.b16 %v1642, %v1634
    %v2139 = vpack.c.b16 %v1643, %v1635
    %v2140 = vpack.c.b16 %v1644, %v1636
    %v2141 = vpack.c.b16 %v1645, %v1637
    %v2142 = vpack.c.b16 %v1646, %v1638
    %v2143 = vpack.c.b16 %v1655, %v1647
    %v2144 = vpack.c.b16 %v1656, %v1648
    %v2145 = vpack.c.b16 %v1657, %v1649
    %v2146 = vpack.c.b16 %v1658, %v1650
    %v2147 = vpack.c.b16 %v1659, %v1651
    %v2148 = vpack.c.b16 %v1660, %v1652
    %v2149 = vpack.c.b16 %v1661, %v1653
    %v2150 = vpack.c.b16 %v1662, %v1654
    %v2151 = vpack.c.b16 %v1671, %v1663
    %v2152 = vpack.c.b16 %v1672, %v1664
    %v2153 = vpack.c.b16 %v1673, %v1665
    %v2154 = vpack.c.b16 %v1674, %v1666
    %v2155 = vpack.c.b16 %v1675, %v1667
    %v2156 = vpack.c.b16 %v1676, %v1668
    %v2157 = vpack.c.b16 %v1677, %v1669
    %v2158 = vpack.c.b16 %v1678, %v1670
    %v2159 = vpack.c.b16 %v1687, %v1679
    %v2160 = vpack.c.b16 %v1688, %v1680
    %v2161 = vpack.c.b16 %v1689, %v1681
    %v2162 = vpack.c.b16 %v1690, %v1682
    %v2163 = vpack.c.b16 %v1691, %v1683
    %v2164 = vpack.c.b16 %v1692, %v1684
    %v2165 = vpack.c.b16 %v1693, %v1685
    %v2166 = vpack.c.b16 %v1694, %v1686
    %v2167 = vpack.c.b16 %v1703, %v1695
    %v2168 = vpack.c.b16 %v1704, %v1696
    %v2169 = vpack.c.b16 %v1705, %v1697
    %v2170 = vpack.c.b16 %v1706, %v1698
    %v2171 = vpack.c.b16 %v1707, %v1699
    %v2172 = vpack.c.b16 %v1708, %v1700
    %v2173 = vpack.c.b16 %v1709, %v1701
    %v2174 = vpack.c.b16 %v1710, %v1702
    %v2175 = vpack.c.b16 %v1719, %v1711
    %v2176 = vpack.c.b16 %v1720, %v1712
    %v2177 = vpack.c.b16 %v1721, %v1713
    %v2178 = vpack.c.b16 %v1722, %v1714
    %v2179 = vpack.c.b16 %v1723, %v1715
    %v2180 = vpack.c.b16 %v1724, %v1716
    %v2181 = vpack.c.b16 %v1725, %v1717
    %v2182 = vpack.c.b16 %v1726, %v1718
    %v2183 = vpack.c.b16 %v1735, %v1727
    %v2184 = vpack.c.b16 %v1736, %v1728
    %v2185 = vpack.c.b16 %v1737, %v1729
    %v2186 = vpack.c.b16 %v1738, %v1730
    %v2187 = vpack.c.b16 %v1739, %v1731
    %v2188 = vpack.c.b16 %v1740, %v1732
    %v2189 = vpack.c.b16 %v1741, %v1733
    %v2190 = vpack.c.b16 %v1742, %v1734
    %v2191 = vpack.c.b16 %v1751, %v1743
    %v2192 = vpack.c.b16 %v1752, %v1744
    %v2193 = vpack.c.b16 %v1753, %v1745
    %v2194 = vpack.c.b16 %v1754, %v1746
    %v2195 = vpack.c.b16 %v1755, %v1747
    %v2196 = vpack.c.b16 %v1756, %v1748
    %v2197 = vpack.c.b16 %v1757, %v1749
    %v2198 = vpack.c.b16 %v1758, %v1750
    %v2199 = vpack.c.b16 %v1767, %v1759
    %v2200 = vpack.c.b16 %v1768, %v1760
    %v2201 = vpack.c.b16 %v1769, %v1761
    %v2202 = vpack.c.b16 %v1770, %v1762
    %v2203 = vpack.c.b16 %v1771, %v1763
    %v2204 = vpack.c.b16 %v1772, %v1764
    %v2205 = vpack.c.b16 %v1773, %v1765
    %v2206 = vpack.c.b16 %v1774, %v1766
    %v2207 = vpack.c.b16 %v1783, %v1775
    %v2208 = vpack.c.b16 %v1784, %v1776
    %v2209 = vpack.c.b16 %v1785, %v1777
    %v2210 = vpack.c.b16 %v1786, %v1778
    %v2211 = vpack.c.b16 %v1787, %v1779
    %v2212 = vpack.c.b16 %v1788, %v1780
    %v2213 = vpack.c.b16 %v1789, %v1781
    %v2214 = vpack.c.b16 %v1790, %v1782
    %v2215 = vpack.c.b16 %v1799, %v1791
    %v2216 = vpack.c.b16 %v1800, %v1792
    %v2217 = vpack.c.b16 %v1801, %v1793
    %v2218 = vpack.c.b16 %v1802, %v1794
    %v2219 = vpack.c.b16 %v1803, %v1795
    %v2220 = vpack.c.b16 %v1804, %v1796
    %v2221 = vpack.c.b16 %v1805, %v1797
    %v2222 = vpack.c.b16 %v1806, %v1798
    %v2223 = vpack.c.b16 %v1815, %v1807
    %v2224 = vpack.c.b16 %v1816, %v1808
    %v2225 = vpack.c.b16 %v1817, %v1809
    %v2226 = vpack.c.b16 %v1818, %v1810
    %v2227 = vpack.c.b16 %v1819, %v1811
    %v2228 = vpack.c.b16 %v1820, %v1812
    %v2229 = vpack.c.b16 %v1821, %v1813
    %v2230 = vpack.c.b16 %v1822, %v1814
    %v2231 = vpack.c.b16 %v1831, %v1823
    %v2232 = vpack.c.b16 %v1832, %v1824
    %v2233 = vpack.c.b16 %v1833, %v1825
    %v2234 = vpack.c.b16 %v1834, %v1826
    %v2235 = vpack.c.b16 %v1835, %v1827
    %v2236 = vpack.c.b16 %v1836, %v1828
    %v2237 = vpack.c.b16 %v1837, %v1829
    %v2238 = vpack.c.b16 %v1838, %v1830
    %v2239 = vpack.c.b16 %v1847, %v1839
    %v2240 = vpack.c.b16 %v1848, %v1840
    %v2241 = vpack.c.b16 %v1849, %v1841
    %v2242 = vpack.c.b16 %v1850, %v1842
    %v2243 = vpack.c.b16 %v1851, %v1843
    %v2244 = vpack.c.b16 %v1852, %v1844
    %v2245 = vpack.c.b16 %v1853, %v1845
    %v2246 = vpack.c.b16 %v1854, %v1846
    %v2247 = vpack.c.b16 %v1863, %v1855
    %v2248 = vpack.c.b16 %v1864, %v1856
    %v2249 = vpack.c.b16 %v1865, %v1857
    %v2250 = vpack.c.b16 %v1866, %v1858
    %v2251 = vpack.c.b16 %v1867, %v1859
    %v2252 = vpack.c.b16 %v1868, %v1860
    %v2253 = vpack.c.b16 %v1869, %v1861
    %v2254 = vpack.c.b16 %v1870, %v1862
    %v2255 = vpack.c.b16 %v1879, %v1871
    %v2256 = vpack.c.b16 %v1880, %v1872
    %v2257 = vpack.c.b16 %v1881, %v1873
    %v2258 = vpack.c.b16 %v1882, %v1874
    %v2259 = vpack.c.b16 %v1883, %v1875
    %v2260 = vpack.c.b16 %v1884, %v1876
    %v2261 = vpack.c.b16 %v1885, %v1877
    %v2262 = vpack.c.b16 %v1886, %v1878
    %v2263 = vpack.c.b16 %v1895, %v1887
    %v2264 = vpack.c.b16 %v1896, %v1888
    %v2265 = vpack.c.b16 %v1897, %v1889
    %v2266 = vpack.c.b16 %v1898, %v1890
    %v2267 = vpack.c.b16 %v1899, %v1891
    %v2268 = vpack.c.b16 %v1900, %v1892
    %v2269 = vpack.c.b16 %v1901, %v1893
    %v2270 = vpack.c.b16 %v1902, %v1894
    %v2271 = vpack.c.b16 %v1911, %v1903
    %v2272 = vpack.c.b16 %v1912, %v1904
    %v2273 = vpack.c.b16 %v1913, %v1905
    %v2274 = vpack.c.b16 %v1914, %v1906
    %v2275 = vpack.c.b16 %v1915, %v1907
    %v2276 = vpack.c.b16 %v1916, %v1908
    %v2277 = vpack.c.b16 %v1917, %v1909
    %v2278 = vpack.c.b16 %v1918, %v1910
    %v2279 = vpack.c.b16 %v1927, %v1919
    %v2280 = vpack.c.b16 %v1928, %v1920
    %v2281 = vpack.c.b16 %v1929, %v1921
    %v2282 = vpack.c.b16 %v1930, %v1922
    %v2283 = vpack.c.b16 %v1931, %v1923
    %v2284 = vpack.c.b16 %v1932, %v1924
    %v2285 = vpack.c.b16 %v1933, %v1925
    %v2286 = vpack.c.b16 %v1934, %v1926
    %v2287 = vpack.c.b16 %v1943, %v1935
    %v2288 = vpack.c.b16 %v1944, %v1936
    %v2289 = vpack.c.b16 %v1945, %v1937
    %v2290 = vpack.c.b16 %v1946, %v1938
    %v2291 = vpack.c.b16 %v1947, %v1939
    %v2292 = vpack.c.b16 %v1948, %v1940
    %v2293 = vpack.c.b16 %v1949, %v1941
    %v2294 = vpack.c.b16 %v1950, %v1942
    %v2295 = vpack.c.b16 %v1959, %v1951
    %v2296 = vpack.c.b16 %v1960, %v1952
    %v2297 = vpack.c.b16 %v1961, %v1953
    %v2298 = vpack.c.b16 %v1962, %v1954
    %v2299 = vpack.c.b16 %v1963, %v1955
    %v2300 = vpack.c.b16 %v1964, %v1956
    %v2301 = vpack.c.b16 %v1965, %v1957
    %v2302 = vpack.c.b16 %v1966, %v1958
    %v2303 = vpack.c.b16 %v1975, %v1967
    %v2304 = vpack.c.b16 %v1976, %v1968
    %v2305 = vpack.c.b16 %v1977, %v1969
    %v2306 = vpack.c.b16 %v1978, %v1970
    %v2307 = vpack.c.b16 %v1979, %v1971
    %v2308 = vpack.c.b16 %v1980, %v1972
    %v2309 = vpack.c.b16 %v1981, %v1973
    %v2310 = vpack.c.b16 %v1982, %v1974
    %v2311 = vpack.c.b16 %v1991, %v1983
    %v2312 = vpack.c.b16 %v1992, %v1984
    %v2313 = vpack.c.b16 %v1993, %v1985
    %v2314 = vpack.c.b16 %v1994, %v1986
    %v2315 = vpack.c.b16 %v1995, %v1987
    %v2316 = vpack.c.b16 %v1996, %v1988
    %v2317 = vpack.c.b16 %v1997, %v1989
    %v2318 = vpack.c.b16 %v1998, %v1990
    %v2319 = vpack.c.b16 %v2007, %v1999
    %v2320 = vpack.c.b16 %v2008, %v2000
    %v2321 = vpack.c.b16 %v2009, %v2001
    %v2322 = vpack.c.b16 %v2010, %v2002
    %v2323 = vpack.c.b16 %v2011, %v2003
    %v2324 = vpack.c.b16 %v2012, %v2004
    %v2325 = vpack.c.b16 %v2013, %v2005
    %v2326 = vpack.c.b16 %v2014, %v2006
    %v2327 = vpack.c.b16 %v2023, %v2015
    %v2328 = vpack.c.b16 %v2024, %v2016
    %v2329 = vpack.c.b16 %v2025, %v2017
    %v2330 = vpack.c.b16 %v2026, %v2018
    %v2331 = vpack.c.b16 %v2027, %v2019
    %v2332 = vpack.c.b16 %v2028, %v2020
    %v2333 = vpack.c.b16 %v2029, %v2021
    %v2334 = vpack.c.b16 %v2030, %v2022
    %v2335 = vpack.c.b16 %v2039, %v2031
    %v2336 = vpack.c.b16 %v2040, %v2032
    %v2337 = vpack.c.b16 %v2041, %v2033
    %v2338 = vpack.c.b16 %v2042, %v2034
    %v2339 = vpack.c.b16 %v2043, %v2035
    %v2340 = vpack.c.b16 %v2044, %v2036
    %v2341 = vpack.c.b16 %v2045, %v2037
    %v2342 = vpack.c.b16 %v2046, %v2038
    %v2343 = vpack.c.b16 %v2055, %v2047
    %v2344 = vpack.c.b16 %v2056, %v2048
    %v2345 = vpack.c.b16 %v2057, %v2049
    %v2346 = vpack.c.b16 %v2058, %v2050
    %v2347 = vpack.c.b16 %v2059, %v2051
    %v2348 = vpack.c.b16 %v2060, %v2052
    %v2349 = vpack.c.b16 %v2061, %v2053
    %v2350 = vpack.c.b16 %v2062, %v2054
    %v2351 = vpack.c.b16 %v2071, %v2063
    %v2352 = vpack.c.b16 %v2072, %v2064
    %v2353 = vpack.c.b16 %v2073, %v2065
    %v2354 = vpack.c.b16 %v2074, %v2066
    %v2355 = vpack.c.b16 %v2075, %v2067
    %v2356 = vpack.c.b16 %v2076, %v2068
    %v2357 = vpack.c.b16 %v2077, %v2069
    %v2358 = vpack.c.b16 %v2078, %v2070
    %v2359 = vpack.c.b16 %v2087, %v2079
    %v2360 = vpack.c.b16 %v2088, %v2080
    %v2361 = vpack.c.b16 %v2089, %v2081
    %v2362 = vpack.c.b16 %v2090, %v2082
    %v2363 = vpack.c.b16 %v2091, %v2083
    %v2364 = vpack.c.b16 %v2092, %v2084
    %v2365 = vpack.c.b16 %v2093, %v2085
    %v2366 = vpack.c.b16 %v2094, %v2086
    %v2367 = vpack.c.b16 %v2103, %v2095
    %v2368 = vpack.c.b16 %v2104, %v2096
    %v2369 = vpack.c.b16 %v2105, %v2097
    %v2370 = vpack.c.b16 %v2106, %v2098
    %v2371 = vpack.c.b16 %v2107, %v2099
    %v2372 = vpack.c.b16 %v2108, %v2100
    %v2373 = vpack.c.b16 %v2109, %v2101
    %v2374 = vpack.c.b16 %v2110, %v2102
    %v2375 = vpack.c.b16 %v2119, %v2111
    %v2376 = vpack.c.b16 %v2120, %v2112
    %v2377 = vpack.c.b16 %v2121, %v2113
    %v2378 = vpack.c.b16 %v2122, %v2114
    %v2379 = vpack.c.b16 %v2123, %v2115
    %v2380 = vpack.c.b16 %v2124, %v2116
    %v2381 = vpack.c.b16 %v2125, %v2117
    %v2382 = vpack.c.b16 %v2126, %v2118
    %2639 = vmatprep.subr.bf16.mxu0 %v2184
    %2640 = vmatpush1.bf16.msra.mxu0 %v2183
    %2641 = vmatprep.subr.bf16.mxu0 %v2176
    %2642 = vmatpush1.bf16.msra.mxu0 %v2175
    %2643 = vmatprep.subr.bf16.mxu0 %v2168
    %2644 = vmatpush1.bf16.msra.mxu0 %v2167
    %2645 = vmatprep.subr.bf16.mxu0 %v2160
    %2646 = vmatpush1.bf16.msra.mxu0 %v2159
    %2647 = vmatprep.subr.bf16.mxu0 %v2152
    %2648 = vmatpush1.bf16.msra.mxu0 %v2151
    %2649 = vmatprep.subr.bf16.mxu0 %v2144
    %2650 = vmatpush1.bf16.msra.mxu0 %v2143
    %2651 = vmatprep.subr.bf16.mxu0 %v2136
    %2652 = vmatpush1.bf16.msra.mxu0 %v2135
    %2653 = vmatprep.subr.bf16.mxu0 %v2128
    %2654 = vmatpush1.bf16.msra.mxu0 %v2127
    %2655 = vmatprep.subr.bf16.mxu0 %v2248
    %2656 = vmatpush2.bf16.msra.mxu0 %v2247
    %2657 = vmatprep.subr.bf16.mxu0 %v2240
    %2658 = vmatpush2.bf16.msra.mxu0 %v2239
    %2659 = vmatprep.subr.bf16.mxu0 %v2232
    %2660 = vmatpush2.bf16.msra.mxu0 %v2231
    %2661 = vmatprep.subr.bf16.mxu0 %v2224
    %2662 = vmatpush2.bf16.msra.mxu0 %v2223
    %2663 = vmatprep.subr.bf16.mxu0 %v2216
    %2664 = vmatpush2.bf16.msra.mxu0 %v2215
    %2665 = vmatprep.subr.bf16.mxu0 %v2208
    %2666 = vmatpush2.bf16.msra.mxu0 %v2207
    %2667 = vmatprep.subr.bf16.mxu0 %v2200
    %2668 = vmatpush2.bf16.msra.mxu0 %v2199
    %2669 = vmatprep.subr.bf16.mxu0 %v2192
    %2670 = vmatpush2.bf16.msra.mxu0 %v2191
    %2671 = vmatprep.mubr.bf16.mxu0 %v1058
    %2672 = vmatmul.mubr.bf16.gmra.mxu0 %v1057
    %v2673 = vpop.f32.mrf.mxu0
    %v2674 = vadd.f32 %v1322, %v2673
    %v2675 = vpop.f32.mrf.mxu0
    %v2676 = vadd.f32 %v1326, %v2675
    %v2677 = vpop.f32.mrf.mxu0
    %v2678 = vpop.f32.mrf.mxu0
    %2679 = vdwg.mxu0
    %2680 = vmatprep.subr.bf16.mxu0 %v2312
    %2681 = vmatpush1.bf16.msra.mxu0 %v2311
    %2682 = vmatprep.subr.bf16.mxu0 %v2304
    %2683 = vmatpush1.bf16.msra.mxu0 %v2303
    %2684 = vmatprep.subr.bf16.mxu0 %v2296
    %2685 = vmatpush1.bf16.msra.mxu0 %v2295
    %2686 = vmatprep.subr.bf16.mxu0 %v2288
    %2687 = vmatpush1.bf16.msra.mxu0 %v2287
    %2688 = vmatprep.subr.bf16.mxu0 %v2280
    %2689 = vmatpush1.bf16.msra.mxu0 %v2279
    %2690 = vmatprep.subr.bf16.mxu0 %v2272
    %2691 = vmatpush1.bf16.msra.mxu0 %v2271
    %2692 = vmatprep.subr.bf16.mxu0 %v2264
    %2693 = vmatpush1.bf16.msra.mxu0 %v2263
    %2694 = vmatprep.subr.bf16.mxu0 %v2256
    %2695 = vmatpush1.bf16.msra.mxu0 %v2255
    %2696 = vmatprep.subr.bf16.mxu0 %v2376
    %2697 = vmatpush2.bf16.msra.mxu0 %v2375
    %2698 = vmatprep.subr.bf16.mxu0 %v2368
    %2699 = vmatpush2.bf16.msra.mxu0 %v2367
    %2700 = vmatprep.subr.bf16.mxu0 %v2360
    %2701 = vmatpush2.bf16.msra.mxu0 %v2359
    %2702 = vmatprep.subr.bf16.mxu0 %v2352
    %2703 = vmatpush2.bf16.msra.mxu0 %v2351
    %2704 = vmatprep.subr.bf16.mxu0 %v2344
    %2705 = vmatpush2.bf16.msra.mxu0 %v2343
    %2706 = vmatprep.subr.bf16.mxu0 %v2336
    %2707 = vmatpush2.bf16.msra.mxu0 %v2335
    %2708 = vmatprep.subr.bf16.mxu0 %v2328
    %2709 = vmatpush2.bf16.msra.mxu0 %v2327
    %2710 = vmatprep.subr.bf16.mxu0 %v2320
    %2711 = vmatpush2.bf16.msra.mxu0 %v2319
    %2712 = vmatprep.mubr.bf16.mxu0 %v1060
    %2713 = vmatmul.mubr.bf16.gmra.mxu0 %v1059
    %v2714 = vpop.f32.mrf.mxu0
    %v2715 = vadd.f32 %v2674, %v2714
    %v2716 = vpop.f32.mrf.mxu0
    %v2717 = vadd.f32 %v2676, %v2716
    %v2718 = vpop.f32.mrf.mxu0
    %v2719 = vpop.f32.mrf.mxu0
    %2720 = vdwg.mxu0
    %2721 = vmatprep.subr.bf16.mxu0 %v2186
    %2722 = vmatpush1.bf16.msra.mxu0 %v2185
    %2723 = vmatprep.subr.bf16.mxu0 %v2178
    %2724 = vmatpush1.bf16.msra.mxu0 %v2177
    %2725 = vmatprep.subr.bf16.mxu0 %v2170
    %2726 = vmatpush1.bf16.msra.mxu0 %v2169
    %2727 = vmatprep.subr.bf16.mxu0 %v2162
    %2728 = vmatpush1.bf16.msra.mxu0 %v2161
    %2729 = vmatprep.subr.bf16.mxu0 %v2154
    %2730 = vmatpush1.bf16.msra.mxu0 %v2153
    %2731 = vmatprep.subr.bf16.mxu0 %v2146
    %2732 = vmatpush1.bf16.msra.mxu0 %v2145
    %2733 = vmatprep.subr.bf16.mxu0 %v2138
    %2734 = vmatpush1.bf16.msra.mxu0 %v2137
    %2735 = vmatprep.subr.bf16.mxu0 %v2130
    %2736 = vmatpush1.bf16.msra.mxu0 %v2129
    %2737 = vmatprep.subr.bf16.mxu0 %v2250
    %2738 = vmatpush2.bf16.msra.mxu0 %v2249
    %2739 = vmatprep.subr.bf16.mxu0 %v2242
    %2740 = vmatpush2.bf16.msra.mxu0 %v2241
    %2741 = vmatprep.subr.bf16.mxu0 %v2234
    %2742 = vmatpush2.bf16.msra.mxu0 %v2233
    %2743 = vmatprep.subr.bf16.mxu0 %v2226
    %2744 = vmatpush2.bf16.msra.mxu0 %v2225
    %2745 = vmatprep.subr.bf16.mxu0 %v2218
    %2746 = vmatpush2.bf16.msra.mxu0 %v2217
    %2747 = vmatprep.subr.bf16.mxu0 %v2210
    %2748 = vmatpush2.bf16.msra.mxu0 %v2209
    %2749 = vmatprep.subr.bf16.mxu0 %v2202
    %2750 = vmatpush2.bf16.msra.mxu0 %v2201
    %2751 = vmatprep.subr.bf16.mxu0 %v2194
    %2752 = vmatpush2.bf16.msra.mxu0 %v2193
    %2753 = vmatprep.mubr.bf16.mxu0 %v1058
    %2754 = vmatmul.mubr.bf16.gmra.mxu0 %v1057
    %v2755 = vpop.f32.mrf.mxu0
    %v2756 = vadd.f32 %v1330, %v2755
    %v2757 = vpop.f32.mrf.mxu0
    %v2758 = vadd.f32 %v1334, %v2757
    %v2759 = vpop.f32.mrf.mxu0
    %v2760 = vpop.f32.mrf.mxu0
    %2761 = vdwg.mxu0
    %2762 = vmatprep.subr.bf16.mxu0 %v2314
    %2763 = vmatpush1.bf16.msra.mxu0 %v2313
    %2764 = vmatprep.subr.bf16.mxu0 %v2306
    %2765 = vmatpush1.bf16.msra.mxu0 %v2305
    %2766 = vmatprep.subr.bf16.mxu0 %v2298
    %2767 = vmatpush1.bf16.msra.mxu0 %v2297
    %2768 = vmatprep.subr.bf16.mxu0 %v2290
    %2769 = vmatpush1.bf16.msra.mxu0 %v2289
    %2770 = vmatprep.subr.bf16.mxu0 %v2282
    %2771 = vmatpush1.bf16.msra.mxu0 %v2281
    %2772 = vmatprep.subr.bf16.mxu0 %v2274
    %2773 = vmatpush1.bf16.msra.mxu0 %v2273
    %2774 = vmatprep.subr.bf16.mxu0 %v2266
    %2775 = vmatpush1.bf16.msra.mxu0 %v2265
    %2776 = vmatprep.subr.bf16.mxu0 %v2258
    %2777 = vmatpush1.bf16.msra.mxu0 %v2257
    %2778 = vmatprep.subr.bf16.mxu0 %v2378
    %2779 = vmatpush2.bf16.msra.mxu0 %v2377
    %2780 = vmatprep.subr.bf16.mxu0 %v2370
    %2781 = vmatpush2.bf16.msra.mxu0 %v2369
    %2782 = vmatprep.subr.bf16.mxu0 %v2362
    %2783 = vmatpush2.bf16.msra.mxu0 %v2361
    %2784 = vmatprep.subr.bf16.mxu0 %v2354
    %2785 = vmatpush2.bf16.msra.mxu0 %v2353
    %2786 = vmatprep.subr.bf16.mxu0 %v2346
    %2787 = vmatpush2.bf16.msra.mxu0 %v2345
    %2788 = vmatprep.subr.bf16.mxu0 %v2338
    %2789 = vmatpush2.bf16.msra.mxu0 %v2337
    %2790 = vmatprep.subr.bf16.mxu0 %v2330
    %2791 = vmatpush2.bf16.msra.mxu0 %v2329
    %2792 = vmatprep.subr.bf16.mxu0 %v2322
    %2793 = vmatpush2.bf16.msra.mxu0 %v2321
    %2794 = vmatprep.mubr.bf16.mxu0 %v1060
    %2795 = vmatmul.mubr.bf16.gmra.mxu0 %v1059
    %v2796 = vpop.f32.mrf.mxu0
    %v2797 = vadd.f32 %v2756, %v2796
    %v2798 = vpop.f32.mrf.mxu0
    %v2799 = vadd.f32 %v2758, %v2798
    %v2800 = vpop.f32.mrf.mxu0
    %v2801 = vpop.f32.mrf.mxu0
    %2802 = vdwg.mxu0
    %2803 = vmatprep.subr.bf16.mxu0 %v2188
    %2804 = vmatpush1.bf16.msra.mxu0 %v2187
    %2805 = vmatprep.subr.bf16.mxu0 %v2180
    %2806 = vmatpush1.bf16.msra.mxu0 %v2179
    %2807 = vmatprep.subr.bf16.mxu0 %v2172
    %2808 = vmatpush1.bf16.msra.mxu0 %v2171
    %2809 = vmatprep.subr.bf16.mxu0 %v2164
    %2810 = vmatpush1.bf16.msra.mxu0 %v2163
    %2811 = vmatprep.subr.bf16.mxu0 %v2156
    %2812 = vmatpush1.bf16.msra.mxu0 %v2155
    %2813 = vmatprep.subr.bf16.mxu0 %v2148
    %2814 = vmatpush1.bf16.msra.mxu0 %v2147
    %2815 = vmatprep.subr.bf16.mxu0 %v2140
    %2816 = vmatpush1.bf16.msra.mxu0 %v2139
    %2817 = vmatprep.subr.bf16.mxu0 %v2132
    %2818 = vmatpush1.bf16.msra.mxu0 %v2131
    %2819 = vmatprep.subr.bf16.mxu0 %v2252
    %2820 = vmatpush2.bf16.msra.mxu0 %v2251
    %2821 = vmatprep.subr.bf16.mxu0 %v2244
    %2822 = vmatpush2.bf16.msra.mxu0 %v2243
    %2823 = vmatprep.subr.bf16.mxu0 %v2236
    %2824 = vmatpush2.bf16.msra.mxu0 %v2235
    %2825 = vmatprep.subr.bf16.mxu0 %v2228
    %2826 = vmatpush2.bf16.msra.mxu0 %v2227
    %2827 = vmatprep.subr.bf16.mxu0 %v2220
    %2828 = vmatpush2.bf16.msra.mxu0 %v2219
    %2829 = vmatprep.subr.bf16.mxu0 %v2212
    %2830 = vmatpush2.bf16.msra.mxu0 %v2211
    %2831 = vmatprep.subr.bf16.mxu0 %v2204
    %2832 = vmatpush2.bf16.msra.mxu0 %v2203
    %2833 = vmatprep.subr.bf16.mxu0 %v2196
    %2834 = vmatpush2.bf16.msra.mxu0 %v2195
    %2835 = vmatprep.mubr.bf16.mxu0 %v1058
    %2836 = vmatmul.mubr.bf16.gmra.mxu0 %v1057
    %v2837 = vpop.f32.mrf.mxu0
    %v2838 = vadd.f32 %v1338, %v2837
    %v2839 = vpop.f32.mrf.mxu0
    %v2840 = vadd.f32 %v1342, %v2839
    %v2841 = vpop.f32.mrf.mxu0
    %v2842 = vpop.f32.mrf.mxu0
    %2843 = vdwg.mxu0
    %2844 = vmatprep.subr.bf16.mxu0 %v2316
    %2845 = vmatpush1.bf16.msra.mxu0 %v2315
    %2846 = vmatprep.subr.bf16.mxu0 %v2308
    %2847 = vmatpush1.bf16.msra.mxu0 %v2307
    %2848 = vmatprep.subr.bf16.mxu0 %v2300
    %2849 = vmatpush1.bf16.msra.mxu0 %v2299
    %2850 = vmatprep.subr.bf16.mxu0 %v2292
    %2851 = vmatpush1.bf16.msra.mxu0 %v2291
    %2852 = vmatprep.subr.bf16.mxu0 %v2284
    %2853 = vmatpush1.bf16.msra.mxu0 %v2283
    %2854 = vmatprep.subr.bf16.mxu0 %v2276
    %2855 = vmatpush1.bf16.msra.mxu0 %v2275
    %2856 = vmatprep.subr.bf16.mxu0 %v2268
    %2857 = vmatpush1.bf16.msra.mxu0 %v2267
    %2858 = vmatprep.subr.bf16.mxu0 %v2260
    %2859 = vmatpush1.bf16.msra.mxu0 %v2259
    %2860 = vmatprep.subr.bf16.mxu0 %v2380
    %2861 = vmatpush2.bf16.msra.mxu0 %v2379
    %2862 = vmatprep.subr.bf16.mxu0 %v2372
    %2863 = vmatpush2.bf16.msra.mxu0 %v2371
    %2864 = vmatprep.subr.bf16.mxu0 %v2364
    %2865 = vmatpush2.bf16.msra.mxu0 %v2363
    %2866 = vmatprep.subr.bf16.mxu0 %v2356
    %2867 = vmatpush2.bf16.msra.mxu0 %v2355
    %2868 = vmatprep.subr.bf16.mxu0 %v2348
    %2869 = vmatpush2.bf16.msra.mxu0 %v2347
    %2870 = vmatprep.subr.bf16.mxu0 %v2340
    %2871 = vmatpush2.bf16.msra.mxu0 %v2339
    %2872 = vmatprep.subr.bf16.mxu0 %v2332
    %2873 = vmatpush2.bf16.msra.mxu0 %v2331
    %2874 = vmatprep.subr.bf16.mxu0 %v2324
    %2875 = vmatpush2.bf16.msra.mxu0 %v2323
    %2876 = vmatprep.mubr.bf16.mxu0 %v1060
    %2877 = vmatmul.mubr.bf16.gmra.mxu0 %v1059
    %v2878 = vpop.f32.mrf.mxu0
    %v2879 = vadd.f32 %v2838, %v2878
    %v2880 = vpop.f32.mrf.mxu0
    %v2881 = vadd.f32 %v2840, %v2880
    %v2882 = vpop.f32.mrf.mxu0
    %v2883 = vpop.f32.mrf.mxu0
    %2884 = vdwg.mxu0
    %2885 = vmatprep.subr.bf16.mxu0 %v2190
    %2886 = vmatpush1.bf16.msra.mxu0 %v2189
    %2887 = vmatprep.subr.bf16.mxu0 %v2182
    %2888 = vmatpush1.bf16.msra.mxu0 %v2181
    %2889 = vmatprep.subr.bf16.mxu0 %v2174
    %2890 = vmatpush1.bf16.msra.mxu0 %v2173
    %2891 = vmatprep.subr.bf16.mxu0 %v2166
    %2892 = vmatpush1.bf16.msra.mxu0 %v2165
    %2893 = vmatprep.subr.bf16.mxu0 %v2158
    %2894 = vmatpush1.bf16.msra.mxu0 %v2157
    %2895 = vmatprep.subr.bf16.mxu0 %v2150
    %2896 = vmatpush1.bf16.msra.mxu0 %v2149
    %2897 = vmatprep.subr.bf16.mxu0 %v2142
    %2898 = vmatpush1.bf16.msra.mxu0 %v2141
    %2899 = vmatprep.subr.bf16.mxu0 %v2134
    %2900 = vmatpush1.bf16.msra.mxu0 %v2133
    %2901 = vmatprep.subr.bf16.mxu0 %v2254
    %2902 = vmatpush2.bf16.msra.mxu0 %v2253
    %2903 = vmatprep.subr.bf16.mxu0 %v2246
    %2904 = vmatpush2.bf16.msra.mxu0 %v2245
    %2905 = vmatprep.subr.bf16.mxu0 %v2238
    %2906 = vmatpush2.bf16.msra.mxu0 %v2237
    %2907 = vmatprep.subr.bf16.mxu0 %v2230
    %2908 = vmatpush2.bf16.msra.mxu0 %v2229
    %2909 = vmatprep.subr.bf16.mxu0 %v2222
    %2910 = vmatpush2.bf16.msra.mxu0 %v2221
    %2911 = vmatprep.subr.bf16.mxu0 %v2214
    %2912 = vmatpush2.bf16.msra.mxu0 %v2213
    %2913 = vmatprep.subr.bf16.mxu0 %v2206
    %2914 = vmatpush2.bf16.msra.mxu0 %v2205
    %2915 = vmatprep.subr.bf16.mxu0 %v2198
    %2916 = vmatpush2.bf16.msra.mxu0 %v2197
    %2917 = vmatprep.mubr.bf16.mxu0 %v1058
    %2918 = vmatmul.mubr.bf16.gmra.mxu0 %v1057
    %v2919 = vpop.f32.mrf.mxu0
    %v2920 = vadd.f32 %v1346, %v2919
    %v2921 = vpop.f32.mrf.mxu0
    %v2922 = vadd.f32 %v1350, %v2921
    %v2923 = vpop.f32.mrf.mxu0
    %v2924 = vpop.f32.mrf.mxu0
    %2925 = vdwg.mxu0
    %2926 = vmatprep.subr.bf16.mxu0 %v2318
    %2927 = vmatpush1.bf16.msra.mxu0 %v2317
    %2928 = vmatprep.subr.bf16.mxu0 %v2310
    %2929 = vmatpush1.bf16.msra.mxu0 %v2309
    %2930 = vmatprep.subr.bf16.mxu0 %v2302
    %2931 = vmatpush1.bf16.msra.mxu0 %v2301
    %2932 = vmatprep.subr.bf16.mxu0 %v2294
    %2933 = vmatpush1.bf16.msra.mxu0 %v2293
    %2934 = vmatprep.subr.bf16.mxu0 %v2286
    %2935 = vmatpush1.bf16.msra.mxu0 %v2285
    %2936 = vmatprep.subr.bf16.mxu0 %v2278
    %2937 = vmatpush1.bf16.msra.mxu0 %v2277
    %2938 = vmatprep.subr.bf16.mxu0 %v2270
    %2939 = vmatpush1.bf16.msra.mxu0 %v2269
    %2940 = vmatprep.subr.bf16.mxu0 %v2262
    %2941 = vmatpush1.bf16.msra.mxu0 %v2261
    %2942 = vmatprep.subr.bf16.mxu0 %v2382
    %2943 = vmatpush2.bf16.msra.mxu0 %v2381
    %2944 = vmatprep.subr.bf16.mxu0 %v2374
    %2945 = vmatpush2.bf16.msra.mxu0 %v2373
    %2946 = vmatprep.subr.bf16.mxu0 %v2366
    %2947 = vmatpush2.bf16.msra.mxu0 %v2365
    %2948 = vmatprep.subr.bf16.mxu0 %v2358
    %2949 = vmatpush2.bf16.msra.mxu0 %v2357
    %2950 = vmatprep.subr.bf16.mxu0 %v2350
    %2951 = vmatpush2.bf16.msra.mxu0 %v2349
    %2952 = vmatprep.subr.bf16.mxu0 %v2342
    %2953 = vmatpush2.bf16.msra.mxu0 %v2341
    %2954 = vmatprep.subr.bf16.mxu0 %v2334
    %2955 = vmatpush2.bf16.msra.mxu0 %v2333
    %2956 = vmatprep.subr.bf16.mxu0 %v2326
    %2957 = vmatpush2.bf16.msra.mxu0 %v2325
    %2958 = vmatprep.mubr.bf16.mxu0 %v1060
    %2959 = vmatmul.mubr.bf16.gmra.mxu0 %v1059
    %v2960 = vpop.f32.mrf.mxu0
    %v2961 = vadd.f32 %v2920, %v2960
    %v2962 = vpop.f32.mrf.mxu0
    %v2963 = vadd.f32 %v2922, %v2962
    %v2964 = vpop.f32.mrf.mxu0
    %v2965 = vpop.f32.mrf.mxu0
    %2966 = vdwg.mxu0
    %v2967 = vld [vmem:[#allocation13 + $0x1b] sm:$0xff]
    %v2968 = vld [vmem:[#allocation13 + $0x23] sm:$0xff]
    %v2969 = vsel %vm343, %v2715, 0.0
    %v2970 = vrot.slane %v2969, 4
    %v2971 = vadd.f32 %v2969, %v2970
    %v2972 = vrot.slane %v2971, 2
    %v2973 = vadd.f32 %v2971, %v2972
    %v2974 = vrot.slane %v2973, 1
    %v2975 = vadd.f32 %v2973, %v2974
    %v2976 = vsel %vm343, %v2717, 0.0
    %v2977 = vrot.slane %v2976, 4
    %v2978 = vadd.f32 %v2976, %v2977
    %v2979 = vrot.slane %v2978, 2
    %v2980 = vadd.f32 %v2978, %v2979
    %v2981 = vrot.slane %v2980, 1
    %v2982 = vadd.f32 %v2980, %v2981
    %v2983 = vsel %vm343, %v2797, 0.0
    %v2984 = vrot.slane %v2983, 4
    %v2985 = vadd.f32 %v2983, %v2984
    %v2986 = vrot.slane %v2985, 2
    %v2987 = vadd.f32 %v2985, %v2986
    %v2988 = vrot.slane %v2987, 1
    %v2989 = vadd.f32 %v2987, %v2988
    %v2990 = vsel %vm343, %v2799, 0.0
    %v2991 = vrot.slane %v2990, 4
    %v2992 = vadd.f32 %v2990, %v2991
    %v2993 = vrot.slane %v2992, 2
    %v2994 = vadd.f32 %v2992, %v2993
    %v2995 = vrot.slane %v2994, 1
    %v2996 = vadd.f32 %v2994, %v2995
    %v2997 = vsel %vm343, %v2879, 0.0
    %v2998 = vrot.slane %v2997, 4
    %v2999 = vadd.f32 %v2997, %v2998
    %v3000 = vrot.slane %v2999, 2
    %v3001 = vadd.f32 %v2999, %v3000
    %v3002 = vrot.slane %v3001, 1
    %v3003 = vadd.f32 %v3001, %v3002
    %v3004 = vsel %vm343, %v2881, 0.0
    %v3005 = vrot.slane %v3004, 4
    %v3006 = vadd.f32 %v3004, %v3005
    %v3007 = vrot.slane %v3006, 2
    %v3008 = vadd.f32 %v3006, %v3007
    %v3009 = vrot.slane %v3008, 1
    %v3010 = vadd.f32 %v3008, %v3009
    %v3011 = vsel %vm343, %v2961, 0.0
    %v3012 = vrot.slane %v3011, 4
    %v3013 = vadd.f32 %v3011, %v3012
    %v3014 = vrot.slane %v3013, 2
    %v3015 = vadd.f32 %v3013, %v3014
    %v3016 = vrot.slane %v3015, 1
    %v3017 = vadd.f32 %v3015, %v3016
    %v3018 = vsel %vm343, %v2963, 0.0
    %v3019 = vrot.slane %v3018, 4
    %v3020 = vadd.f32 %v3018, %v3019
    %v3021 = vrot.slane %v3020, 2
    %v3022 = vadd.f32 %v3020, %v3021
    %v3023 = vrot.slane %v3022, 1
    %v3024 = vadd.f32 %v3022, %v3023
    %v3025 = vmul.f32 %v2975, %v358
    %v3026 = vmul.f32 %v2982, %v358
    %v3027 = vmul.f32 %v2989, %v358
    %v3028 = vmul.f32 %v2996, %v358
    %v3029 = vmul.f32 %v3003, %v358
    %v3030 = vmul.f32 %v3010, %v358
    %v3031 = vmul.f32 %v3017, %v358
    %v3032 = vmul.f32 %v3024, %v358
    %v3033 = vsub.f32 %v2715, %v3025
    %v3034 = vsub.f32 %v2717, %v3026
    %v3035 = vsub.f32 %v2797, %v3027
    %v3036 = vsub.f32 %v2799, %v3028
    %v3037 = vsub.f32 %v2879, %v3029
    %v3038 = vsub.f32 %v2881, %v3030
    %v3039 = vsub.f32 %v2961, %v3031
    %v3040 = vsub.f32 %v2963, %v3032
    %v3041 = vmul.f32 %v3033, %v3033
    %v3042 = vmul.f32 %v3034, %v3034
    %v3043 = vmul.f32 %v3035, %v3035
    %v3044 = vmul.f32 %v3036, %v3036
    %v3045 = vmul.f32 %v3037, %v3037
    %v3046 = vmul.f32 %v3038, %v3038
    %v3047 = vmul.f32 %v3039, %v3039
    %v3048 = vmul.f32 %v3040, %v3040
    %v3049 = vsel %vm343, %v3041, 0.0
    %v3050 = vrot.slane %v3049, 4
    %v3051 = vadd.f32 %v3049, %v3050
    %v3052 = vrot.slane %v3051, 2
    %v3053 = vadd.f32 %v3051, %v3052
    %v3054 = vrot.slane %v3053, 1
    %v3055 = vadd.f32 %v3053, %v3054
    %v3056 = vsel %vm343, %v3042, 0.0
    %v3057 = vrot.slane %v3056, 4
    %v3058 = vadd.f32 %v3056, %v3057
    %v3059 = vrot.slane %v3058, 2
    %v3060 = vadd.f32 %v3058, %v3059
    %v3061 = vrot.slane %v3060, 1
    %v3062 = vadd.f32 %v3060, %v3061
    %v3063 = vsel %vm343, %v3043, 0.0
    %v3064 = vrot.slane %v3063, 4
    %v3065 = vadd.f32 %v3063, %v3064
    %v3066 = vrot.slane %v3065, 2
    %v3067 = vadd.f32 %v3065, %v3066
    %v3068 = vrot.slane %v3067, 1
    %v3069 = vadd.f32 %v3067, %v3068
    %v3070 = vsel %vm343, %v3044, 0.0
    %v3071 = vrot.slane %v3070, 4
    %v3072 = vadd.f32 %v3070, %v3071
    %v3073 = vrot.slane %v3072, 2
    %v3074 = vadd.f32 %v3072, %v3073
    %v3075 = vrot.slane %v3074, 1
    %v3076 = vadd.f32 %v3074, %v3075
    %v3077 = vsel %vm343, %v3045, 0.0
    %v3078 = vrot.slane %v3077, 4
    %v3079 = vadd.f32 %v3077, %v3078
    %v3080 = vrot.slane %v3079, 2
    %v3081 = vadd.f32 %v3079, %v3080
    %v3082 = vrot.slane %v3081, 1
    %v3083 = vadd.f32 %v3081, %v3082
    %v3084 = vsel %vm343, %v3046, 0.0
    %v3085 = vrot.slane %v3084, 4
    %v3086 = vadd.f32 %v3084, %v3085
    %v3087 = vrot.slane %v3086, 2
    %v3088 = vadd.f32 %v3086, %v3087
    %v3089 = vrot.slane %v3088, 1
    %v3090 = vadd.f32 %v3088, %v3089
    %v3091 = vsel %vm343, %v3047, 0.0
    %v3092 = vrot.slane %v3091, 4
    %v3093 = vadd.f32 %v3091, %v3092
    %v3094 = vrot.slane %v3093, 2
    %v3095 = vadd.f32 %v3093, %v3094
    %v3096 = vrot.slane %v3095, 1
    %v3097 = vadd.f32 %v3095, %v3096
    %v3098 = vsel %vm343, %v3048, 0.0
    %v3099 = vrot.slane %v3098, 4
    %v3100 = vadd.f32 %v3098, %v3099
    %v3101 = vrot.slane %v3100, 2
    %v3102 = vadd.f32 %v3100, %v3101
    %v3103 = vrot.slane %v3102, 1
    %v3104 = vadd.f32 %v3102, %v3103
    %v3105 = vmul.f32 %v3055, %v358
    %v3106 = vmul.f32 %v3062, %v358
    %v3107 = vmul.f32 %v3069, %v358
    %v3108 = vmul.f32 %v3076, %v358
    %v3109 = vmul.f32 %v3083, %v358
    %v3110 = vmul.f32 %v3090, %v358
    %v3111 = vmul.f32 %v3097, %v358
    %v3112 = vmul.f32 %v3104, %v358
    %v3113 = vadd.f32 %v3105, 0.8
    %v3114 = vadd.f32 %v3106, 0.8
    %v3115 = vadd.f32 %v3107, 0.8
    %v3116 = vadd.f32 %v3108, 0.8
    %v3117 = vadd.f32 %v3109, 0.8
    %v3118 = vadd.f32 %v3110, 0.8
    %v3119 = vadd.f32 %v3111, 0.8
    %v3120 = vadd.f32 %v3112, 0.8
    %v3121 = vrsqrt.pop %v3113
    %v3122 = vrsqrt.pop %v3114
    %v3123 = vrsqrt.pop %v3115
    %v3124 = vrsqrt.pop %v3116
    %v3125 = vrsqrt.pop %v3117
    %v3126 = vrsqrt.pop %v3118
    %v3127 = vrsqrt.pop %v3119
    %v3128 = vrsqrt.pop %v3120
    %v3129 = vmul.f32 %v3033, %v3121
    %v3130 = vmul.f32 %v3034, %v3122
    %v3131 = vmul.f32 %v3035, %v3123
    %v3132 = vmul.f32 %v3036, %v3124
    %v3133 = vmul.f32 %v3037, %v3125
    %v3134 = vmul.f32 %v3038, %v3126
    %v3135 = vmul.f32 %v3039, %v3127
    %v3136 = vmul.f32 %v3040, %v3128
    %v3138 = vlaneseq
    %v3139 = vshrl.u32 %v3138, 7
    %v3140 = vsub.s32 0, %v3139
    %v3141 = vrot.slane %v2967, %v3140
    %v3142 = vlaneseq
    %v3143 = vshrl.u32 %v3142, 7
    %v3144 = vsub.s32 1, %v3143
    %v3145 = vrot.slane %v2967, %v3144
    %v3146 = vlaneseq
    %v3147 = vshrl.u32 %v3146, 7
    %v3148 = vsub.s32 2, %v3147
    %v3149 = vrot.slane %v2967, %v3148
    %v3150 = vlaneseq
    %v3151 = vshrl.u32 %v3150, 7
    %v3152 = vsub.s32 3, %v3151
    %v3153 = vrot.slane %v2967, %v3152
    %v3154 = vlaneseq
    %v3155 = vshrl.u32 %v3154, 7
    %v3156 = vsub.s32 4, %v3155
    %v3157 = vrot.slane %v2967, %v3156
    %v3158 = vlaneseq
    %v3159 = vshrl.u32 %v3158, 7
    %v3160 = vsub.s32 5, %v3159
    %v3161 = vrot.slane %v2967, %v3160
    %v3162 = vlaneseq
    %v3163 = vshrl.u32 %v3162, 7
    %v3164 = vsub.s32 6, %v3163
    %v3165 = vrot.slane %v2967, %v3164
    %v3166 = vlaneseq
    %v3167 = vshrl.u32 %v3166, 7
    %v3168 = vsub.s32 7, %v3167
    %v3169 = vrot.slane %v2967, %v3168
    %v3178 = vmul.f32 %v3129, %v3141
    %v3179 = vmul.f32 %v3130, %v3145
    %v3180 = vmul.f32 %v3131, %v3149
    %v3181 = vmul.f32 %v3132, %v3153
    %v3182 = vmul.f32 %v3133, %v3157
    %v3183 = vmul.f32 %v3134, %v3161
    %v3184 = vmul.f32 %v3135, %v3165
    %v3185 = vmul.f32 %v3136, %v3169
    %v3187 = vlaneseq
    %v3188 = vshrl.u32 %v3187, 7
    %v3189 = vsub.s32 0, %v3188
    %v3190 = vrot.slane %v2968, %v3189
    %v3191 = vlaneseq
    %v3192 = vshrl.u32 %v3191, 7
    %v3193 = vsub.s32 1, %v3192
    %v3194 = vrot.slane %v2968, %v3193
    %v3195 = vlaneseq
    %v3196 = vshrl.u32 %v3195, 7
    %v3197 = vsub.s32 2, %v3196
    %v3198 = vrot.slane %v2968, %v3197
    %v3199 = vlaneseq
    %v3200 = vshrl.u32 %v3199, 7
    %v3201 = vsub.s32 3, %v3200
    %v3202 = vrot.slane %v2968, %v3201
    %v3203 = vlaneseq
    %v3204 = vshrl.u32 %v3203, 7
    %v3205 = vsub.s32 4, %v3204
    %v3206 = vrot.slane %v2968, %v3205
    %v3207 = vlaneseq
    %v3208 = vshrl.u32 %v3207, 7
    %v3209 = vsub.s32 5, %v3208
    %v3210 = vrot.slane %v2968, %v3209
    %v3211 = vlaneseq
    %v3212 = vshrl.u32 %v3211, 7
    %v3213 = vsub.s32 6, %v3212
    %v3214 = vrot.slane %v2968, %v3213
    %v3215 = vlaneseq
    %v3216 = vshrl.u32 %v3215, 7
    %v3217 = vsub.s32 7, %v3216
    %v3218 = vrot.slane %v2968, %v3217
    %v3227 = vadd.f32 %v3178, %v3190
    %v3228 = vadd.f32 %v3179, %v3194
    %v3229 = vadd.f32 %v3180, %v3198
    %v3230 = vadd.f32 %v3181, %v3202
    %v3231 = vadd.f32 %v3182, %v3206
    %v3232 = vadd.f32 %v3183, %v3210
    %v3233 = vadd.f32 %v3184, %v3214
    %v3234 = vadd.f32 %v3185, %v3218
    %vm3235 = vcmp.gt.f32.partialorder %v3227, 0.0
    %vm3236 = vcmp.gt.f32.partialorder %v3228, 0.0
    %vm3237 = vcmp.gt.f32.partialorder %v3229, 0.0
    %vm3238 = vcmp.gt.f32.partialorder %v3230, 0.0
    %vm3239 = vcmp.gt.f32.partialorder %v3231, 0.0
    %vm3240 = vcmp.gt.f32.partialorder %v3232, 0.0
    %vm3241 = vcmp.gt.f32.partialorder %v3233, 0.0
    %vm3242 = vcmp.gt.f32.partialorder %v3234, 0.0
    %v3243 = vmul.f32 %v3227, 0.2
    %v3244 = vmul.f32 %v3228, 0.2
    %v3245 = vmul.f32 %v3229, 0.2
    %v3246 = vmul.f32 %v3230, 0.2
    %v3247 = vmul.f32 %v3231, 0.2
    %v3248 = vmul.f32 %v3232, 0.2
    %v3249 = vmul.f32 %v3233, 0.2
    %v3250 = vmul.f32 %v3234, 0.2
    %v3251 = vsel %vm3235, %v3227, %v3243
    %v3252 = vsel %vm3236, %v3228, %v3244
    %v3253 = vsel %vm3237, %v3229, %v3245
    %v3254 = vsel %vm3238, %v3230, %v3246
    %v3255 = vsel %vm3239, %v3231, %v3247
    %v3256 = vsel %vm3240, %v3232, %v3248
    %v3257 = vsel %vm3241, %v3233, %v3249
    %v3258 = vsel %vm3242, %v3234, %v3250
    %v3259 = vpack.c.bf16 %v3251, %v3251
    %v3260 = vpack.c.bf16 %v3252, %v3252
    %v3261 = vpack.c.bf16 %v3253, %v3253
    %v3262 = vpack.c.bf16 %v3254, %v3254
    %v3263 = vpack.c.bf16 %v3255, %v3255
    %v3264 = vpack.c.bf16 %v3256, %v3256
    %v3265 = vpack.c.bf16 %v3257, %v3257
    %v3266 = vpack.c.bf16 %v3258, %v3258
    %v3267 = vld [vmem:[#allocation11] sm:$0xff]
    %v3268 = vld [vmem:[#allocation11 + $0x8] sm:$0xff]
    %v3269 = vld [vmem:[#allocation11 + $0x10] sm:$0xff]
    %v3270 = vld [vmem:[#allocation11 + $0x18] sm:$0xff]
    %v3271 = vld [vmem:[#allocation11 + $0x20] sm:$0xff]
    %v3272 = vld [vmem:[#allocation11 + $0x28] sm:$0xff]
    %v3273 = vld [vmem:[#allocation11 + $0x30] sm:$0xff]
    %v3274 = vld [vmem:[#allocation11 + $0x38] sm:$0xff]
    %v3275 = vld [vmem:[#allocation11 + $0x40] sm:$0xff]
    %v3276 = vld [vmem:[#allocation11 + $0x48] sm:$0xff]
    %v3277 = vld [vmem:[#allocation11 + $0x50] sm:$0xff]
    %v3278 = vld [vmem:[#allocation11 + $0x58] sm:$0xff]
    %v3279 = vld [vmem:[#allocation11 + $0x60] sm:$0xff]
    %v3280 = vld [vmem:[#allocation11 + $0x68] sm:$0xff]
    %v3281 = vld [vmem:[#allocation11 + $0x70] sm:$0xff]
    %v3282 = vld [vmem:[#allocation11 + $0x78] sm:$0xff]
    %v3283 = vld [vmem:[#allocation11 + $0x80] sm:$0xff]
    %v3284 = vld [vmem:[#allocation11 + $0x88] sm:$0xff]
    %v3285 = vld [vmem:[#allocation11 + $0x90] sm:$0xff]
    %v3286 = vld [vmem:[#allocation11 + $0x98] sm:$0xff]
    %v3287 = vld [vmem:[#allocation11 + $0xa0] sm:$0xff]
    %v3288 = vld [vmem:[#allocation11 + $0xa8] sm:$0xff]
    %v3289 = vld [vmem:[#allocation11 + $0xb0] sm:$0xff]
    %v3290 = vld [vmem:[#allocation11 + $0xb8] sm:$0xff]
    %v3291 = vld [vmem:[#allocation11 + $0xc0] sm:$0xff]
    %v3292 = vld [vmem:[#allocation11 + $0xc8] sm:$0xff]
    %v3293 = vld [vmem:[#allocation11 + $0xd0] sm:$0xff]
    %v3294 = vld [vmem:[#allocation11 + $0xd8] sm:$0xff]
    %v3295 = vld [vmem:[#allocation11 + $0xe0] sm:$0xff]
    %v3296 = vld [vmem:[#allocation11 + $0xe8] sm:$0xff]
    %v3297 = vld [vmem:[#allocation11 + $0xf0] sm:$0xff]
    %v3298 = vld [vmem:[#allocation11 + $0xf8] sm:$0xff]
    %v3299 = vld [vmem:[#allocation11 + $0x100] sm:$0xff]
    %v3300 = vld [vmem:[#allocation11 + $0x108] sm:$0xff]
    %v3301 = vld [vmem:[#allocation11 + $0x110] sm:$0xff]
    %v3302 = vld [vmem:[#allocation11 + $0x118] sm:$0xff]
    %v3303 = vld [vmem:[#allocation11 + $0x120] sm:$0xff]
    %v3304 = vld [vmem:[#allocation11 + $0x128] sm:$0xff]
    %v3305 = vld [vmem:[#allocation11 + $0x130] sm:$0xff]
    %v3306 = vld [vmem:[#allocation11 + $0x138] sm:$0xff]
    %v3307 = vld [vmem:[#allocation11 + $0x140] sm:$0xff]
    %v3308 = vld [vmem:[#allocation11 + $0x148] sm:$0xff]
    %v3309 = vld [vmem:[#allocation11 + $0x150] sm:$0xff]
    %v3310 = vld [vmem:[#allocation11 + $0x158] sm:$0xff]
    %v3311 = vld [vmem:[#allocation11 + $0x160] sm:$0xff]
    %v3312 = vld [vmem:[#allocation11 + $0x168] sm:$0xff]
    %v3313 = vld [vmem:[#allocation11 + $0x170] sm:$0xff]
    %v3314 = vld [vmem:[#allocation11 + $0x178] sm:$0xff]
    %v3315 = vld [vmem:[#allocation11 + $0x180] sm:$0xff]
    %v3316 = vld [vmem:[#allocation11 + $0x188] sm:$0xff]
    %v3317 = vld [vmem:[#allocation11 + $0x190] sm:$0xff]
    %v3318 = vld [vmem:[#allocation11 + $0x198] sm:$0xff]
    %v3319 = vld [vmem:[#allocation11 + $0x1a0] sm:$0xff]
    %v3320 = vld [vmem:[#allocation11 + $0x1a8] sm:$0xff]
    %v3321 = vld [vmem:[#allocation11 + $0x1b0] sm:$0xff]
    %v3322 = vld [vmem:[#allocation11 + $0x1b8] sm:$0xff]
    %v3323 = vld [vmem:[#allocation11 + $0x1c0] sm:$0xff]
    %v3324 = vld [vmem:[#allocation11 + $0x1c8] sm:$0xff]
    %v3325 = vld [vmem:[#allocation11 + $0x1d0] sm:$0xff]
    %v3326 = vld [vmem:[#allocation11 + $0x1d8] sm:$0xff]
    %v3327 = vld [vmem:[#allocation11 + $0x1e0] sm:$0xff]
    %v3328 = vld [vmem:[#allocation11 + $0x1e8] sm:$0xff]
    %v3329 = vld [vmem:[#allocation11 + $0x1f0] sm:$0xff]
    %v3330 = vld [vmem:[#allocation11 + $0x1f8] sm:$0xff]
    %v3331 = vld [vmem:[#allocation11 + $0x200] sm:$0xff]
    %v3332 = vld [vmem:[#allocation11 + $0x208] sm:$0xff]
    %v3333 = vld [vmem:[#allocation11 + $0x210] sm:$0xff]
    %v3334 = vld [vmem:[#allocation11 + $0x218] sm:$0xff]
    %v3335 = vld [vmem:[#allocation11 + $0x220] sm:$0xff]
    %v3336 = vld [vmem:[#allocation11 + $0x228] sm:$0xff]
    %v3337 = vld [vmem:[#allocation11 + $0x230] sm:$0xff]
    %v3338 = vld [vmem:[#allocation11 + $0x238] sm:$0xff]
    %v3339 = vld [vmem:[#allocation11 + $0x240] sm:$0xff]
    %v3340 = vld [vmem:[#allocation11 + $0x248] sm:$0xff]
    %v3341 = vld [vmem:[#allocation11 + $0x250] sm:$0xff]
    %v3342 = vld [vmem:[#allocation11 + $0x258] sm:$0xff]
    %v3343 = vld [vmem:[#allocation11 + $0x260] sm:$0xff]
    %v3344 = vld [vmem:[#allocation11 + $0x268] sm:$0xff]
    %v3345 = vld [vmem:[#allocation11 + $0x270] sm:$0xff]
    %v3346 = vld [vmem:[#allocation11 + $0x278] sm:$0xff]
    %v3347 = vld [vmem:[#allocation11 + $0x280] sm:$0xff]
    %v3348 = vld [vmem:[#allocation11 + $0x288] sm:$0xff]
    %v3349 = vld [vmem:[#allocation11 + $0x290] sm:$0xff]
    %v3350 = vld [vmem:[#allocation11 + $0x298] sm:$0xff]
    %v3351 = vld [vmem:[#allocation11 + $0x2a0] sm:$0xff]
    %v3352 = vld [vmem:[#allocation11 + $0x2a8] sm:$0xff]
    %v3353 = vld [vmem:[#allocation11 + $0x2b0] sm:$0xff]
    %v3354 = vld [vmem:[#allocation11 + $0x2b8] sm:$0xff]
    %v3355 = vld [vmem:[#allocation11 + $0x2c0] sm:$0xff]
    %v3356 = vld [vmem:[#allocation11 + $0x2c8] sm:$0xff]
    %v3357 = vld [vmem:[#allocation11 + $0x2d0] sm:$0xff]
    %v3358 = vld [vmem:[#allocation11 + $0x2d8] sm:$0xff]
    %v3359 = vld [vmem:[#allocation11 + $0x2e0] sm:$0xff]
    %v3360 = vld [vmem:[#allocation11 + $0x2e8] sm:$0xff]
    %v3361 = vld [vmem:[#allocation11 + $0x2f0] sm:$0xff]
    %v3362 = vld [vmem:[#allocation11 + $0x2f8] sm:$0xff]
    %v3363 = vld [vmem:[#allocation11 + $0x300] sm:$0xff]
    %v3364 = vld [vmem:[#allocation11 + $0x308] sm:$0xff]
    %v3365 = vld [vmem:[#allocation11 + $0x310] sm:$0xff]
    %v3366 = vld [vmem:[#allocation11 + $0x318] sm:$0xff]
    %v3367 = vld [vmem:[#allocation11 + $0x320] sm:$0xff]
    %v3368 = vld [vmem:[#allocation11 + $0x328] sm:$0xff]
    %v3369 = vld [vmem:[#allocation11 + $0x330] sm:$0xff]
    %v3370 = vld [vmem:[#allocation11 + $0x338] sm:$0xff]
    %v3371 = vld [vmem:[#allocation11 + $0x340] sm:$0xff]
    %v3372 = vld [vmem:[#allocation11 + $0x348] sm:$0xff]
    %v3373 = vld [vmem:[#allocation11 + $0x350] sm:$0xff]
    %v3374 = vld [vmem:[#allocation11 + $0x358] sm:$0xff]
    %v3375 = vld [vmem:[#allocation11 + $0x360] sm:$0xff]
    %v3376 = vld [vmem:[#allocation11 + $0x368] sm:$0xff]
    %v3377 = vld [vmem:[#allocation11 + $0x370] sm:$0xff]
    %v3378 = vld [vmem:[#allocation11 + $0x378] sm:$0xff]
    %v3379 = vld [vmem:[#allocation11 + $0x380] sm:$0xff]
    %v3380 = vld [vmem:[#allocation11 + $0x388] sm:$0xff]
    %v3381 = vld [vmem:[#allocation11 + $0x390] sm:$0xff]
    %v3382 = vld [vmem:[#allocation11 + $0x398] sm:$0xff]
    %v3383 = vld [vmem:[#allocation11 + $0x3a0] sm:$0xff]
    %v3384 = vld [vmem:[#allocation11 + $0x3a8] sm:$0xff]
    %v3385 = vld [vmem:[#allocation11 + $0x3b0] sm:$0xff]
    %v3386 = vld [vmem:[#allocation11 + $0x3b8] sm:$0xff]
    %v3387 = vld [vmem:[#allocation11 + $0x3c0] sm:$0xff]
    %v3388 = vld [vmem:[#allocation11 + $0x3c8] sm:$0xff]
    %v3389 = vld [vmem:[#allocation11 + $0x3d0] sm:$0xff]
    %v3390 = vld [vmem:[#allocation11 + $0x3d8] sm:$0xff]
    %v3391 = vld [vmem:[#allocation11 + $0x3e0] sm:$0xff]
    %v3392 = vld [vmem:[#allocation11 + $0x3e8] sm:$0xff]
    %v3393 = vld [vmem:[#allocation11 + $0x3f0] sm:$0xff]
    %v3394 = vld [vmem:[#allocation11 + $0x3f8] sm:$0xff]
    %v3395 = vld [vmem:[#allocation11 + $0x400] sm:$0xff]
    %v3396 = vld [vmem:[#allocation11 + $0x408] sm:$0xff]
    %v3397 = vld [vmem:[#allocation11 + $0x410] sm:$0xff]
    %v3398 = vld [vmem:[#allocation11 + $0x418] sm:$0xff]
    %v3399 = vld [vmem:[#allocation11 + $0x420] sm:$0xff]
    %v3400 = vld [vmem:[#allocation11 + $0x428] sm:$0xff]
    %v3401 = vld [vmem:[#allocation11 + $0x430] sm:$0xff]
    %v3402 = vld [vmem:[#allocation11 + $0x438] sm:$0xff]
    %v3403 = vld [vmem:[#allocation11 + $0x440] sm:$0xff]
    %v3404 = vld [vmem:[#allocation11 + $0x448] sm:$0xff]
    %v3405 = vld [vmem:[#allocation11 + $0x450] sm:$0xff]
    %v3406 = vld [vmem:[#allocation11 + $0x458] sm:$0xff]
    %v3407 = vld [vmem:[#allocation11 + $0x460] sm:$0xff]
    %v3408 = vld [vmem:[#allocation11 + $0x468] sm:$0xff]
    %v3409 = vld [vmem:[#allocation11 + $0x470] sm:$0xff]
    %v3410 = vld [vmem:[#allocation11 + $0x478] sm:$0xff]
    %v3411 = vld [vmem:[#allocation11 + $0x480] sm:$0xff]
    %v3412 = vld [vmem:[#allocation11 + $0x488] sm:$0xff]
    %v3413 = vld [vmem:[#allocation11 + $0x490] sm:$0xff]
    %v3414 = vld [vmem:[#allocation11 + $0x498] sm:$0xff]
    %v3415 = vld [vmem:[#allocation11 + $0x4a0] sm:$0xff]
    %v3416 = vld [vmem:[#allocation11 + $0x4a8] sm:$0xff]
    %v3417 = vld [vmem:[#allocation11 + $0x4b0] sm:$0xff]
    %v3418 = vld [vmem:[#allocation11 + $0x4b8] sm:$0xff]
    %v3419 = vld [vmem:[#allocation11 + $0x4c0] sm:$0xff]
    %v3420 = vld [vmem:[#allocation11 + $0x4c8] sm:$0xff]
    %v3421 = vld [vmem:[#allocation11 + $0x4d0] sm:$0xff]
    %v3422 = vld [vmem:[#allocation11 + $0x4d8] sm:$0xff]
    %v3423 = vld [vmem:[#allocation11 + $0x4e0] sm:$0xff]
    %v3424 = vld [vmem:[#allocation11 + $0x4e8] sm:$0xff]
    %v3425 = vld [vmem:[#allocation11 + $0x4f0] sm:$0xff]
    %v3426 = vld [vmem:[#allocation11 + $0x4f8] sm:$0xff]
    %v3427 = vld [vmem:[#allocation11 + $0x500] sm:$0xff]
    %v3428 = vld [vmem:[#allocation11 + $0x508] sm:$0xff]
    %v3429 = vld [vmem:[#allocation11 + $0x510] sm:$0xff]
    %v3430 = vld [vmem:[#allocation11 + $0x518] sm:$0xff]
    %v3431 = vld [vmem:[#allocation11 + $0x520] sm:$0xff]
    %v3432 = vld [vmem:[#allocation11 + $0x528] sm:$0xff]
    %v3433 = vld [vmem:[#allocation11 + $0x530] sm:$0xff]
    %v3434 = vld [vmem:[#allocation11 + $0x538] sm:$0xff]
    %v3435 = vld [vmem:[#allocation11 + $0x540] sm:$0xff]
    %v3436 = vld [vmem:[#allocation11 + $0x548] sm:$0xff]
    %v3437 = vld [vmem:[#allocation11 + $0x550] sm:$0xff]
    %v3438 = vld [vmem:[#allocation11 + $0x558] sm:$0xff]
    %v3439 = vld [vmem:[#allocation11 + $0x560] sm:$0xff]
    %v3440 = vld [vmem:[#allocation11 + $0x568] sm:$0xff]
    %v3441 = vld [vmem:[#allocation11 + $0x570] sm:$0xff]
    %v3442 = vld [vmem:[#allocation11 + $0x578] sm:$0xff]
    %v3443 = vld [vmem:[#allocation11 + $0x580] sm:$0xff]
    %v3444 = vld [vmem:[#allocation11 + $0x588] sm:$0xff]
    %v3445 = vld [vmem:[#allocation11 + $0x590] sm:$0xff]
    %v3446 = vld [vmem:[#allocation11 + $0x598] sm:$0xff]
    %v3447 = vld [vmem:[#allocation11 + $0x5a0] sm:$0xff]
    %v3448 = vld [vmem:[#allocation11 + $0x5a8] sm:$0xff]
    %v3449 = vld [vmem:[#allocation11 + $0x5b0] sm:$0xff]
    %v3450 = vld [vmem:[#allocation11 + $0x5b8] sm:$0xff]
    %v3451 = vld [vmem:[#allocation11 + $0x5c0] sm:$0xff]
    %v3452 = vld [vmem:[#allocation11 + $0x5c8] sm:$0xff]
    %v3453 = vld [vmem:[#allocation11 + $0x5d0] sm:$0xff]
    %v3454 = vld [vmem:[#allocation11 + $0x5d8] sm:$0xff]
    %v3455 = vld [vmem:[#allocation11 + $0x5e0] sm:$0xff]
    %v3456 = vld [vmem:[#allocation11 + $0x5e8] sm:$0xff]
    %v3457 = vld [vmem:[#allocation11 + $0x5f0] sm:$0xff]
    %v3458 = vld [vmem:[#allocation11 + $0x5f8] sm:$0xff]
    %v3459 = vld [vmem:[#allocation11 + $0x600] sm:$0xff]
    %v3460 = vld [vmem:[#allocation11 + $0x608] sm:$0xff]
    %v3461 = vld [vmem:[#allocation11 + $0x610] sm:$0xff]
    %v3462 = vld [vmem:[#allocation11 + $0x618] sm:$0xff]
    %v3463 = vld [vmem:[#allocation11 + $0x620] sm:$0xff]
    %v3464 = vld [vmem:[#allocation11 + $0x628] sm:$0xff]
    %v3465 = vld [vmem:[#allocation11 + $0x630] sm:$0xff]
    %v3466 = vld [vmem:[#allocation11 + $0x638] sm:$0xff]
    %v3467 = vld [vmem:[#allocation11 + $0x640] sm:$0xff]
    %v3468 = vld [vmem:[#allocation11 + $0x648] sm:$0xff]
    %v3469 = vld [vmem:[#allocation11 + $0x650] sm:$0xff]
    %v3470 = vld [vmem:[#allocation11 + $0x658] sm:$0xff]
    %v3471 = vld [vmem:[#allocation11 + $0x660] sm:$0xff]
    %v3472 = vld [vmem:[#allocation11 + $0x668] sm:$0xff]
    %v3473 = vld [vmem:[#allocation11 + $0x670] sm:$0xff]
    %v3474 = vld [vmem:[#allocation11 + $0x678] sm:$0xff]
    %v3475 = vld [vmem:[#allocation11 + $0x680] sm:$0xff]
    %v3476 = vld [vmem:[#allocation11 + $0x688] sm:$0xff]
    %v3477 = vld [vmem:[#allocation11 + $0x690] sm:$0xff]
    %v3478 = vld [vmem:[#allocation11 + $0x698] sm:$0xff]
    %v3479 = vld [vmem:[#allocation11 + $0x6a0] sm:$0xff]
    %v3480 = vld [vmem:[#allocation11 + $0x6a8] sm:$0xff]
    %v3481 = vld [vmem:[#allocation11 + $0x6b0] sm:$0xff]
    %v3482 = vld [vmem:[#allocation11 + $0x6b8] sm:$0xff]
    %v3483 = vld [vmem:[#allocation11 + $0x6c0] sm:$0xff]
    %v3484 = vld [vmem:[#allocation11 + $0x6c8] sm:$0xff]
    %v3485 = vld [vmem:[#allocation11 + $0x6d0] sm:$0xff]
    %v3486 = vld [vmem:[#allocation11 + $0x6d8] sm:$0xff]
    %v3487 = vld [vmem:[#allocation11 + $0x6e0] sm:$0xff]
    %v3488 = vld [vmem:[#allocation11 + $0x6e8] sm:$0xff]
    %v3489 = vld [vmem:[#allocation11 + $0x6f0] sm:$0xff]
    %v3490 = vld [vmem:[#allocation11 + $0x6f8] sm:$0xff]
    %v3491 = vld [vmem:[#allocation11 + $0x700] sm:$0xff]
    %v3492 = vld [vmem:[#allocation11 + $0x708] sm:$0xff]
    %v3493 = vld [vmem:[#allocation11 + $0x710] sm:$0xff]
    %v3494 = vld [vmem:[#allocation11 + $0x718] sm:$0xff]
    %v3495 = vld [vmem:[#allocation11 + $0x720] sm:$0xff]
    %v3496 = vld [vmem:[#allocation11 + $0x728] sm:$0xff]
    %v3497 = vld [vmem:[#allocation11 + $0x730] sm:$0xff]
    %v3498 = vld [vmem:[#allocation11 + $0x738] sm:$0xff]
    %v3499 = vld [vmem:[#allocation11 + $0x740] sm:$0xff]
    %v3500 = vld [vmem:[#allocation11 + $0x748] sm:$0xff]
    %v3501 = vld [vmem:[#allocation11 + $0x750] sm:$0xff]
    %v3502 = vld [vmem:[#allocation11 + $0x758] sm:$0xff]
    %v3503 = vld [vmem:[#allocation11 + $0x760] sm:$0xff]
    %v3504 = vld [vmem:[#allocation11 + $0x768] sm:$0xff]
    %v3505 = vld [vmem:[#allocation11 + $0x770] sm:$0xff]
    %v3506 = vld [vmem:[#allocation11 + $0x778] sm:$0xff]
    %v3507 = vld [vmem:[#allocation11 + $0x780] sm:$0xff]
    %v3508 = vld [vmem:[#allocation11 + $0x788] sm:$0xff]
    %v3509 = vld [vmem:[#allocation11 + $0x790] sm:$0xff]
    %v3510 = vld [vmem:[#allocation11 + $0x798] sm:$0xff]
    %v3511 = vld [vmem:[#allocation11 + $0x7a0] sm:$0xff]
    %v3512 = vld [vmem:[#allocation11 + $0x7a8] sm:$0xff]
    %v3513 = vld [vmem:[#allocation11 + $0x7b0] sm:$0xff]
    %v3514 = vld [vmem:[#allocation11 + $0x7b8] sm:$0xff]
    %v3515 = vld [vmem:[#allocation11 + $0x7c0] sm:$0xff]
    %v3516 = vld [vmem:[#allocation11 + $0x7c8] sm:$0xff]
    %v3517 = vld [vmem:[#allocation11 + $0x7d0] sm:$0xff]
    %v3518 = vld [vmem:[#allocation11 + $0x7d8] sm:$0xff]
    %v3519 = vld [vmem:[#allocation11 + $0x7e0] sm:$0xff]
    %v3520 = vld [vmem:[#allocation11 + $0x7e8] sm:$0xff]
    %v3521 = vld [vmem:[#allocation11 + $0x7f0] sm:$0xff]
    %v3522 = vld [vmem:[#allocation11 + $0x7f8] sm:$0xff]
    %v3523 = vld [vmem:[#allocation11 + $0x800] sm:$0xff]
    %v3524 = vld [vmem:[#allocation11 + $0x808] sm:$0xff]
    %v3525 = vld [vmem:[#allocation11 + $0x810] sm:$0xff]
    %v3526 = vld [vmem:[#allocation11 + $0x818] sm:$0xff]
    %v3527 = vld [vmem:[#allocation11 + $0x820] sm:$0xff]
    %v3528 = vld [vmem:[#allocation11 + $0x828] sm:$0xff]
    %v3529 = vld [vmem:[#allocation11 + $0x830] sm:$0xff]
    %v3530 = vld [vmem:[#allocation11 + $0x838] sm:$0xff]
    %v3531 = vld [vmem:[#allocation11 + $0x840] sm:$0xff]
    %v3532 = vld [vmem:[#allocation11 + $0x848] sm:$0xff]
    %v3533 = vld [vmem:[#allocation11 + $0x850] sm:$0xff]
    %v3534 = vld [vmem:[#allocation11 + $0x858] sm:$0xff]
    %v3535 = vld [vmem:[#allocation11 + $0x860] sm:$0xff]
    %v3536 = vld [vmem:[#allocation11 + $0x868] sm:$0xff]
    %v3537 = vld [vmem:[#allocation11 + $0x870] sm:$0xff]
    %v3538 = vld [vmem:[#allocation11 + $0x878] sm:$0xff]
    %v3539 = vld [vmem:[#allocation11 + $0x880] sm:$0xff]
    %v3540 = vld [vmem:[#allocation11 + $0x888] sm:$0xff]
    %v3541 = vld [vmem:[#allocation11 + $0x890] sm:$0xff]
    %v3542 = vld [vmem:[#allocation11 + $0x898] sm:$0xff]
    %v3543 = vld [vmem:[#allocation11 + $0x8a0] sm:$0xff]
    %v3544 = vld [vmem:[#allocation11 + $0x8a8] sm:$0xff]
    %v3545 = vld [vmem:[#allocation11 + $0x8b0] sm:$0xff]
    %v3546 = vld [vmem:[#allocation11 + $0x8b8] sm:$0xff]
    %v3547 = vld [vmem:[#allocation11 + $0x8c0] sm:$0xff]
    %v3548 = vld [vmem:[#allocation11 + $0x8c8] sm:$0xff]
    %v3549 = vld [vmem:[#allocation11 + $0x8d0] sm:$0xff]
    %v3550 = vld [vmem:[#allocation11 + $0x8d8] sm:$0xff]
    %v3551 = vld [vmem:[#allocation11 + $0x8e0] sm:$0xff]
    %v3552 = vld [vmem:[#allocation11 + $0x8e8] sm:$0xff]
    %v3553 = vld [vmem:[#allocation11 + $0x8f0] sm:$0xff]
    %v3554 = vld [vmem:[#allocation11 + $0x8f8] sm:$0xff]
    %v3555 = vld [vmem:[#allocation11 + $0x900] sm:$0xff]
    %v3556 = vld [vmem:[#allocation11 + $0x908] sm:$0xff]
    %v3557 = vld [vmem:[#allocation11 + $0x910] sm:$0xff]
    %v3558 = vld [vmem:[#allocation11 + $0x918] sm:$0xff]
    %v3559 = vld [vmem:[#allocation11 + $0x920] sm:$0xff]
    %v3560 = vld [vmem:[#allocation11 + $0x928] sm:$0xff]
    %v3561 = vld [vmem:[#allocation11 + $0x930] sm:$0xff]
    %v3562 = vld [vmem:[#allocation11 + $0x938] sm:$0xff]
    %v3563 = vld [vmem:[#allocation11 + $0x940] sm:$0xff]
    %v3564 = vld [vmem:[#allocation11 + $0x948] sm:$0xff]
    %v3565 = vld [vmem:[#allocation11 + $0x950] sm:$0xff]
    %v3566 = vld [vmem:[#allocation11 + $0x958] sm:$0xff]
    %v3567 = vld [vmem:[#allocation11 + $0x960] sm:$0xff]
    %v3568 = vld [vmem:[#allocation11 + $0x968] sm:$0xff]
    %v3569 = vld [vmem:[#allocation11 + $0x970] sm:$0xff]
    %v3570 = vld [vmem:[#allocation11 + $0x978] sm:$0xff]
    %v3571 = vld [vmem:[#allocation11 + $0x980] sm:$0xff]
    %v3572 = vld [vmem:[#allocation11 + $0x988] sm:$0xff]
    %v3573 = vld [vmem:[#allocation11 + $0x990] sm:$0xff]
    %v3574 = vld [vmem:[#allocation11 + $0x998] sm:$0xff]
    %v3575 = vld [vmem:[#allocation11 + $0x9a0] sm:$0xff]
    %v3576 = vld [vmem:[#allocation11 + $0x9a8] sm:$0xff]
    %v3577 = vld [vmem:[#allocation11 + $0x9b0] sm:$0xff]
    %v3578 = vld [vmem:[#allocation11 + $0x9b8] sm:$0xff]
    %v3579 = vld [vmem:[#allocation11 + $0x9c0] sm:$0xff]
    %v3580 = vld [vmem:[#allocation11 + $0x9c8] sm:$0xff]
    %v3581 = vld [vmem:[#allocation11 + $0x9d0] sm:$0xff]
    %v3582 = vld [vmem:[#allocation11 + $0x9d8] sm:$0xff]
    %v3583 = vld [vmem:[#allocation11 + $0x9e0] sm:$0xff]
    %v3584 = vld [vmem:[#allocation11 + $0x9e8] sm:$0xff]
    %v3585 = vld [vmem:[#allocation11 + $0x9f0] sm:$0xff]
    %v3586 = vld [vmem:[#allocation11 + $0x9f8] sm:$0xff]
    %v3587 = vld [vmem:[#allocation11 + $0xa00] sm:$0xff]
    %v3588 = vld [vmem:[#allocation11 + $0xa08] sm:$0xff]
    %v3589 = vld [vmem:[#allocation11 + $0xa10] sm:$0xff]
    %v3590 = vld [vmem:[#allocation11 + $0xa18] sm:$0xff]
    %v3591 = vld [vmem:[#allocation11 + $0xa20] sm:$0xff]
    %v3592 = vld [vmem:[#allocation11 + $0xa28] sm:$0xff]
    %v3593 = vld [vmem:[#allocation11 + $0xa30] sm:$0xff]
    %v3594 = vld [vmem:[#allocation11 + $0xa38] sm:$0xff]
    %v3595 = vld [vmem:[#allocation11 + $0xa40] sm:$0xff]
    %v3596 = vld [vmem:[#allocation11 + $0xa48] sm:$0xff]
    %v3597 = vld [vmem:[#allocation11 + $0xa50] sm:$0xff]
    %v3598 = vld [vmem:[#allocation11 + $0xa58] sm:$0xff]
    %v3599 = vld [vmem:[#allocation11 + $0xa60] sm:$0xff]
    %v3600 = vld [vmem:[#allocation11 + $0xa68] sm:$0xff]
    %v3601 = vld [vmem:[#allocation11 + $0xa70] sm:$0xff]
    %v3602 = vld [vmem:[#allocation11 + $0xa78] sm:$0xff]
    %v3603 = vld [vmem:[#allocation11 + $0xa80] sm:$0xff]
    %v3604 = vld [vmem:[#allocation11 + $0xa88] sm:$0xff]
    %v3605 = vld [vmem:[#allocation11 + $0xa90] sm:$0xff]
    %v3606 = vld [vmem:[#allocation11 + $0xa98] sm:$0xff]
    %v3607 = vld [vmem:[#allocation11 + $0xaa0] sm:$0xff]
    %v3608 = vld [vmem:[#allocation11 + $0xaa8] sm:$0xff]
    %v3609 = vld [vmem:[#allocation11 + $0xab0] sm:$0xff]
    %v3610 = vld [vmem:[#allocation11 + $0xab8] sm:$0xff]
    %v3611 = vld [vmem:[#allocation11 + $0xac0] sm:$0xff]
    %v3612 = vld [vmem:[#allocation11 + $0xac8] sm:$0xff]
    %v3613 = vld [vmem:[#allocation11 + $0xad0] sm:$0xff]
    %v3614 = vld [vmem:[#allocation11 + $0xad8] sm:$0xff]
    %v3615 = vld [vmem:[#allocation11 + $0xae0] sm:$0xff]
    %v3616 = vld [vmem:[#allocation11 + $0xae8] sm:$0xff]
    %v3617 = vld [vmem:[#allocation11 + $0xaf0] sm:$0xff]
    %v3618 = vld [vmem:[#allocation11 + $0xaf8] sm:$0xff]
    %v3619 = vld [vmem:[#allocation11 + $0xb00] sm:$0xff]
    %v3620 = vld [vmem:[#allocation11 + $0xb08] sm:$0xff]
    %v3621 = vld [vmem:[#allocation11 + $0xb10] sm:$0xff]
    %v3622 = vld [vmem:[#allocation11 + $0xb18] sm:$0xff]
    %v3623 = vld [vmem:[#allocation11 + $0xb20] sm:$0xff]
    %v3624 = vld [vmem:[#allocation11 + $0xb28] sm:$0xff]
    %v3625 = vld [vmem:[#allocation11 + $0xb30] sm:$0xff]
    %v3626 = vld [vmem:[#allocation11 + $0xb38] sm:$0xff]
    %v3627 = vld [vmem:[#allocation11 + $0xb40] sm:$0xff]
    %v3628 = vld [vmem:[#allocation11 + $0xb48] sm:$0xff]
    %v3629 = vld [vmem:[#allocation11 + $0xb50] sm:$0xff]
    %v3630 = vld [vmem:[#allocation11 + $0xb58] sm:$0xff]
    %v3631 = vld [vmem:[#allocation11 + $0xb60] sm:$0xff]
    %v3632 = vld [vmem:[#allocation11 + $0xb68] sm:$0xff]
    %v3633 = vld [vmem:[#allocation11 + $0xb70] sm:$0xff]
    %v3634 = vld [vmem:[#allocation11 + $0xb78] sm:$0xff]
    %v3635 = vld [vmem:[#allocation11 + $0xb80] sm:$0xff]
    %v3636 = vld [vmem:[#allocation11 + $0xb88] sm:$0xff]
    %v3637 = vld [vmem:[#allocation11 + $0xb90] sm:$0xff]
    %v3638 = vld [vmem:[#allocation11 + $0xb98] sm:$0xff]
    %v3639 = vld [vmem:[#allocation11 + $0xba0] sm:$0xff]
    %v3640 = vld [vmem:[#allocation11 + $0xba8] sm:$0xff]
    %v3641 = vld [vmem:[#allocation11 + $0xbb0] sm:$0xff]
    %v3642 = vld [vmem:[#allocation11 + $0xbb8] sm:$0xff]
    %v3643 = vld [vmem:[#allocation11 + $0xbc0] sm:$0xff]
    %v3644 = vld [vmem:[#allocation11 + $0xbc8] sm:$0xff]
    %v3645 = vld [vmem:[#allocation11 + $0xbd0] sm:$0xff]
    %v3646 = vld [vmem:[#allocation11 + $0xbd8] sm:$0xff]
    %v3647 = vld [vmem:[#allocation11 + $0xbe0] sm:$0xff]
    %v3648 = vld [vmem:[#allocation11 + $0xbe8] sm:$0xff]
    %v3649 = vld [vmem:[#allocation11 + $0xbf0] sm:$0xff]
    %v3650 = vld [vmem:[#allocation11 + $0xbf8] sm:$0xff]
    %v3651 = vld [vmem:[#allocation11 + $0xc00] sm:$0xff]
    %v3652 = vld [vmem:[#allocation11 + $0xc08] sm:$0xff]
    %v3653 = vld [vmem:[#allocation11 + $0xc10] sm:$0xff]
    %v3654 = vld [vmem:[#allocation11 + $0xc18] sm:$0xff]
    %v3655 = vld [vmem:[#allocation11 + $0xc20] sm:$0xff]
    %v3656 = vld [vmem:[#allocation11 + $0xc28] sm:$0xff]
    %v3657 = vld [vmem:[#allocation11 + $0xc30] sm:$0xff]
    %v3658 = vld [vmem:[#allocation11 + $0xc38] sm:$0xff]
    %v3659 = vld [vmem:[#allocation11 + $0xc40] sm:$0xff]
    %v3660 = vld [vmem:[#allocation11 + $0xc48] sm:$0xff]
    %v3661 = vld [vmem:[#allocation11 + $0xc50] sm:$0xff]
    %v3662 = vld [vmem:[#allocation11 + $0xc58] sm:$0xff]
    %v3663 = vld [vmem:[#allocation11 + $0xc60] sm:$0xff]
    %v3664 = vld [vmem:[#allocation11 + $0xc68] sm:$0xff]
    %v3665 = vld [vmem:[#allocation11 + $0xc70] sm:$0xff]
    %v3666 = vld [vmem:[#allocation11 + $0xc78] sm:$0xff]
    %v3667 = vld [vmem:[#allocation11 + $0xc80] sm:$0xff]
    %v3668 = vld [vmem:[#allocation11 + $0xc88] sm:$0xff]
    %v3669 = vld [vmem:[#allocation11 + $0xc90] sm:$0xff]
    %v3670 = vld [vmem:[#allocation11 + $0xc98] sm:$0xff]
    %v3671 = vld [vmem:[#allocation11 + $0xca0] sm:$0xff]
    %v3672 = vld [vmem:[#allocation11 + $0xca8] sm:$0xff]
    %v3673 = vld [vmem:[#allocation11 + $0xcb0] sm:$0xff]
    %v3674 = vld [vmem:[#allocation11 + $0xcb8] sm:$0xff]
    %v3675 = vld [vmem:[#allocation11 + $0xcc0] sm:$0xff]
    %v3676 = vld [vmem:[#allocation11 + $0xcc8] sm:$0xff]
    %v3677 = vld [vmem:[#allocation11 + $0xcd0] sm:$0xff]
    %v3678 = vld [vmem:[#allocation11 + $0xcd8] sm:$0xff]
    %v3679 = vld [vmem:[#allocation11 + $0xce0] sm:$0xff]
    %v3680 = vld [vmem:[#allocation11 + $0xce8] sm:$0xff]
    %v3681 = vld [vmem:[#allocation11 + $0xcf0] sm:$0xff]
    %v3682 = vld [vmem:[#allocation11 + $0xcf8] sm:$0xff]
    %v3683 = vld [vmem:[#allocation11 + $0xd00] sm:$0xff]
    %v3684 = vld [vmem:[#allocation11 + $0xd08] sm:$0xff]
    %v3685 = vld [vmem:[#allocation11 + $0xd10] sm:$0xff]
    %v3686 = vld [vmem:[#allocation11 + $0xd18] sm:$0xff]
    %v3687 = vld [vmem:[#allocation11 + $0xd20] sm:$0xff]
    %v3688 = vld [vmem:[#allocation11 + $0xd28] sm:$0xff]
    %v3689 = vld [vmem:[#allocation11 + $0xd30] sm:$0xff]
    %v3690 = vld [vmem:[#allocation11 + $0xd38] sm:$0xff]
    %v3691 = vld [vmem:[#allocation11 + $0xd40] sm:$0xff]
    %v3692 = vld [vmem:[#allocation11 + $0xd48] sm:$0xff]
    %v3693 = vld [vmem:[#allocation11 + $0xd50] sm:$0xff]
    %v3694 = vld [vmem:[#allocation11 + $0xd58] sm:$0xff]
    %v3695 = vld [vmem:[#allocation11 + $0xd60] sm:$0xff]
    %v3696 = vld [vmem:[#allocation11 + $0xd68] sm:$0xff]
    %v3697 = vld [vmem:[#allocation11 + $0xd70] sm:$0xff]
    %v3698 = vld [vmem:[#allocation11 + $0xd78] sm:$0xff]
    %v3699 = vld [vmem:[#allocation11 + $0xd80] sm:$0xff]
    %v3700 = vld [vmem:[#allocation11 + $0xd88] sm:$0xff]
    %v3701 = vld [vmem:[#allocation11 + $0xd90] sm:$0xff]
    %v3702 = vld [vmem:[#allocation11 + $0xd98] sm:$0xff]
    %v3703 = vld [vmem:[#allocation11 + $0xda0] sm:$0xff]
    %v3704 = vld [vmem:[#allocation11 + $0xda8] sm:$0xff]
    %v3705 = vld [vmem:[#allocation11 + $0xdb0] sm:$0xff]
    %v3706 = vld [vmem:[#allocation11 + $0xdb8] sm:$0xff]
    %v3707 = vld [vmem:[#allocation11 + $0xdc0] sm:$0xff]
    %v3708 = vld [vmem:[#allocation11 + $0xdc8] sm:$0xff]
    %v3709 = vld [vmem:[#allocation11 + $0xdd0] sm:$0xff]
    %v3710 = vld [vmem:[#allocation11 + $0xdd8] sm:$0xff]
    %v3711 = vld [vmem:[#allocation11 + $0xde0] sm:$0xff]
    %v3712 = vld [vmem:[#allocation11 + $0xde8] sm:$0xff]
    %v3713 = vld [vmem:[#allocation11 + $0xdf0] sm:$0xff]
    %v3714 = vld [vmem:[#allocation11 + $0xdf8] sm:$0xff]
    %v3715 = vld [vmem:[#allocation11 + $0xe00] sm:$0xff]
    %v3716 = vld [vmem:[#allocation11 + $0xe08] sm:$0xff]
    %v3717 = vld [vmem:[#allocation11 + $0xe10] sm:$0xff]
    %v3718 = vld [vmem:[#allocation11 + $0xe18] sm:$0xff]
    %v3719 = vld [vmem:[#allocation11 + $0xe20] sm:$0xff]
    %v3720 = vld [vmem:[#allocation11 + $0xe28] sm:$0xff]
    %v3721 = vld [vmem:[#allocation11 + $0xe30] sm:$0xff]
    %v3722 = vld [vmem:[#allocation11 + $0xe38] sm:$0xff]
    %v3723 = vld [vmem:[#allocation11 + $0xe40] sm:$0xff]
    %v3724 = vld [vmem:[#allocation11 + $0xe48] sm:$0xff]
    %v3725 = vld [vmem:[#allocation11 + $0xe50] sm:$0xff]
    %v3726 = vld [vmem:[#allocation11 + $0xe58] sm:$0xff]
    %v3727 = vld [vmem:[#allocation11 + $0xe60] sm:$0xff]
    %v3728 = vld [vmem:[#allocation11 + $0xe68] sm:$0xff]
    %v3729 = vld [vmem:[#allocation11 + $0xe70] sm:$0xff]
    %v3730 = vld [vmem:[#allocation11 + $0xe78] sm:$0xff]
    %v3731 = vld [vmem:[#allocation11 + $0xe80] sm:$0xff]
    %v3732 = vld [vmem:[#allocation11 + $0xe88] sm:$0xff]
    %v3733 = vld [vmem:[#allocation11 + $0xe90] sm:$0xff]
    %v3734 = vld [vmem:[#allocation11 + $0xe98] sm:$0xff]
    %v3735 = vld [vmem:[#allocation11 + $0xea0] sm:$0xff]
    %v3736 = vld [vmem:[#allocation11 + $0xea8] sm:$0xff]
    %v3737 = vld [vmem:[#allocation11 + $0xeb0] sm:$0xff]
    %v3738 = vld [vmem:[#allocation11 + $0xeb8] sm:$0xff]
    %v3739 = vld [vmem:[#allocation11 + $0xec0] sm:$0xff]
    %v3740 = vld [vmem:[#allocation11 + $0xec8] sm:$0xff]
    %v3741 = vld [vmem:[#allocation11 + $0xed0] sm:$0xff]
    %v3742 = vld [vmem:[#allocation11 + $0xed8] sm:$0xff]
    %v3743 = vld [vmem:[#allocation11 + $0xee0] sm:$0xff]
    %v3744 = vld [vmem:[#allocation11 + $0xee8] sm:$0xff]
    %v3745 = vld [vmem:[#allocation11 + $0xef0] sm:$0xff]
    %v3746 = vld [vmem:[#allocation11 + $0xef8] sm:$0xff]
    %v3747 = vld [vmem:[#allocation11 + $0xf00] sm:$0xff]
    %v3748 = vld [vmem:[#allocation11 + $0xf08] sm:$0xff]
    %v3749 = vld [vmem:[#allocation11 + $0xf10] sm:$0xff]
    %v3750 = vld [vmem:[#allocation11 + $0xf18] sm:$0xff]
    %v3751 = vld [vmem:[#allocation11 + $0xf20] sm:$0xff]
    %v3752 = vld [vmem:[#allocation11 + $0xf28] sm:$0xff]
    %v3753 = vld [vmem:[#allocation11 + $0xf30] sm:$0xff]
    %v3754 = vld [vmem:[#allocation11 + $0xf38] sm:$0xff]
    %v3755 = vld [vmem:[#allocation11 + $0xf40] sm:$0xff]
    %v3756 = vld [vmem:[#allocation11 + $0xf48] sm:$0xff]
    %v3757 = vld [vmem:[#allocation11 + $0xf50] sm:$0xff]
    %v3758 = vld [vmem:[#allocation11 + $0xf58] sm:$0xff]
    %v3759 = vld [vmem:[#allocation11 + $0xf60] sm:$0xff]
    %v3760 = vld [vmem:[#allocation11 + $0xf68] sm:$0xff]
    %v3761 = vld [vmem:[#allocation11 + $0xf70] sm:$0xff]
    %v3762 = vld [vmem:[#allocation11 + $0xf78] sm:$0xff]
    %v3763 = vld [vmem:[#allocation11 + $0xf80] sm:$0xff]
    %v3764 = vld [vmem:[#allocation11 + $0xf88] sm:$0xff]
    %v3765 = vld [vmem:[#allocation11 + $0xf90] sm:$0xff]
    %v3766 = vld [vmem:[#allocation11 + $0xf98] sm:$0xff]
    %v3767 = vld [vmem:[#allocation11 + $0xfa0] sm:$0xff]
    %v3768 = vld [vmem:[#allocation11 + $0xfa8] sm:$0xff]
    %v3769 = vld [vmem:[#allocation11 + $0xfb0] sm:$0xff]
    %v3770 = vld [vmem:[#allocation11 + $0xfb8] sm:$0xff]
    %v3771 = vld [vmem:[#allocation11 + $0xfc0] sm:$0xff]
    %v3772 = vld [vmem:[#allocation11 + $0xfc8] sm:$0xff]
    %v3773 = vld [vmem:[#allocation11 + $0xfd0] sm:$0xff]
    %v3774 = vld [vmem:[#allocation11 + $0xfd8] sm:$0xff]
    %v3775 = vld [vmem:[#allocation11 + $0xfe0] sm:$0xff]
    %v3776 = vld [vmem:[#allocation11 + $0xfe8] sm:$0xff]
    %v3777 = vld [vmem:[#allocation11 + $0xff0] sm:$0xff]
    %v3778 = vld [vmem:[#allocation11 + $0xff8] sm:$0xff]
    %v3779 = vld [vmem:[#allocation13 + $0x2b] sm:$0xff]
    %v3781 = vlaneseq
    %v3782 = vshrl.u32 %v3781, 7
    %v3783 = vsub.s32 0, %v3782
    %v3784 = vrot.slane %v3779, %v3783
    %v3785 = vlaneseq
    %v3786 = vshrl.u32 %v3785, 7
    %v3787 = vsub.s32 1, %v3786
    %v3788 = vrot.slane %v3779, %v3787
    %v3789 = vlaneseq
    %v3790 = vshrl.u32 %v3789, 7
    %v3791 = vsub.s32 2, %v3790
    %v3792 = vrot.slane %v3779, %v3791
    %v3793 = vlaneseq
    %v3794 = vshrl.u32 %v3793, 7
    %v3795 = vsub.s32 3, %v3794
    %v3796 = vrot.slane %v3779, %v3795
    %v3797 = vlaneseq
    %v3798 = vshrl.u32 %v3797, 7
    %v3799 = vsub.s32 4, %v3798
    %v3800 = vrot.slane %v3779, %v3799
    %v3801 = vlaneseq
    %v3802 = vshrl.u32 %v3801, 7
    %v3803 = vsub.s32 5, %v3802
    %v3804 = vrot.slane %v3779, %v3803
    %v3805 = vlaneseq
    %v3806 = vshrl.u32 %v3805, 7
    %v3807 = vsub.s32 6, %v3806
    %v3808 = vrot.slane %v3779, %v3807
    %v3809 = vlaneseq
    %v3810 = vshrl.u32 %v3809, 7
    %v3811 = vsub.s32 7, %v3810
    %v3812 = vrot.slane %v3779, %v3811
    %v4333 = vunpack.c.l.b16 %v3267
    %v4334 = vunpack.c.h.b16 %v3267
    %v4335 = vunpack.c.l.b16 %v3268
    %v4336 = vunpack.c.h.b16 %v3268
    %v4337 = vunpack.c.l.b16 %v3269
    %v4338 = vunpack.c.h.b16 %v3269
    %v4339 = vunpack.c.l.b16 %v3270
    %v4340 = vunpack.c.h.b16 %v3270
    %v4341 = vunpack.c.l.b16 %v3271
    %v4342 = vunpack.c.h.b16 %v3271
    %v4343 = vunpack.c.l.b16 %v3272
    %v4344 = vunpack.c.h.b16 %v3272
    %v4345 = vunpack.c.l.b16 %v3273
    %v4346 = vunpack.c.h.b16 %v3273
    %v4347 = vunpack.c.l.b16 %v3274
    %v4348 = vunpack.c.h.b16 %v3274
    %v4349 = vunpack.c.l.b16 %v3275
    %v4350 = vunpack.c.h.b16 %v3275
    %v4351 = vunpack.c.l.b16 %v3276
    %v4352 = vunpack.c.h.b16 %v3276
    %v4353 = vunpack.c.l.b16 %v3277
    %v4354 = vunpack.c.h.b16 %v3277
    %v4355 = vunpack.c.l.b16 %v3278
    %v4356 = vunpack.c.h.b16 %v3278
    %v4357 = vunpack.c.l.b16 %v3279
    %v4358 = vunpack.c.h.b16 %v3279
    %v4359 = vunpack.c.l.b16 %v3280
    %v4360 = vunpack.c.h.b16 %v3280
    %v4361 = vunpack.c.l.b16 %v3281
    %v4362 = vunpack.c.h.b16 %v3281
    %v4363 = vunpack.c.l.b16 %v3282
    %v4364 = vunpack.c.h.b16 %v3282
    %v4365 = vunpack.c.l.b16 %v3283
    %v4366 = vunpack.c.h.b16 %v3283
    %v4367 = vunpack.c.l.b16 %v3284
    %v4368 = vunpack.c.h.b16 %v3284
    %v4369 = vunpack.c.l.b16 %v3285
    %v4370 = vunpack.c.h.b16 %v3285
    %v4371 = vunpack.c.l.b16 %v3286
    %v4372 = vunpack.c.h.b16 %v3286
    %v4373 = vunpack.c.l.b16 %v3287
    %v4374 = vunpack.c.h.b16 %v3287
    %v4375 = vunpack.c.l.b16 %v3288
    %v4376 = vunpack.c.h.b16 %v3288
    %v4377 = vunpack.c.l.b16 %v3289
    %v4378 = vunpack.c.h.b16 %v3289
    %v4379 = vunpack.c.l.b16 %v3290
    %v4380 = vunpack.c.h.b16 %v3290
    %v4381 = vunpack.c.l.b16 %v3291
    %v4382 = vunpack.c.h.b16 %v3291
    %v4383 = vunpack.c.l.b16 %v3292
    %v4384 = vunpack.c.h.b16 %v3292
    %v4385 = vunpack.c.l.b16 %v3293
    %v4386 = vunpack.c.h.b16 %v3293
    %v4387 = vunpack.c.l.b16 %v3294
    %v4388 = vunpack.c.h.b16 %v3294
    %v4389 = vunpack.c.l.b16 %v3295
    %v4390 = vunpack.c.h.b16 %v3295
    %v4391 = vunpack.c.l.b16 %v3296
    %v4392 = vunpack.c.h.b16 %v3296
    %v4393 = vunpack.c.l.b16 %v3297
    %v4394 = vunpack.c.h.b16 %v3297
    %v4395 = vunpack.c.l.b16 %v3298
    %v4396 = vunpack.c.h.b16 %v3298
    %v4397 = vunpack.c.l.b16 %v3299
    %v4398 = vunpack.c.h.b16 %v3299
    %v4399 = vunpack.c.l.b16 %v3300
    %v4400 = vunpack.c.h.b16 %v3300
    %v4401 = vunpack.c.l.b16 %v3301
    %v4402 = vunpack.c.h.b16 %v3301
    %v4403 = vunpack.c.l.b16 %v3302
    %v4404 = vunpack.c.h.b16 %v3302
    %v4405 = vunpack.c.l.b16 %v3303
    %v4406 = vunpack.c.h.b16 %v3303
    %v4407 = vunpack.c.l.b16 %v3304
    %v4408 = vunpack.c.h.b16 %v3304
    %v4409 = vunpack.c.l.b16 %v3305
    %v4410 = vunpack.c.h.b16 %v3305
    %v4411 = vunpack.c.l.b16 %v3306
    %v4412 = vunpack.c.h.b16 %v3306
    %v4413 = vunpack.c.l.b16 %v3307
    %v4414 = vunpack.c.h.b16 %v3307
    %v4415 = vunpack.c.l.b16 %v3308
    %v4416 = vunpack.c.h.b16 %v3308
    %v4417 = vunpack.c.l.b16 %v3309
    %v4418 = vunpack.c.h.b16 %v3309
    %v4419 = vunpack.c.l.b16 %v3310
    %v4420 = vunpack.c.h.b16 %v3310
    %v4421 = vunpack.c.l.b16 %v3311
    %v4422 = vunpack.c.h.b16 %v3311
    %v4423 = vunpack.c.l.b16 %v3312
    %v4424 = vunpack.c.h.b16 %v3312
    %v4425 = vunpack.c.l.b16 %v3313
    %v4426 = vunpack.c.h.b16 %v3313
    %v4427 = vunpack.c.l.b16 %v3314
    %v4428 = vunpack.c.h.b16 %v3314
    %v4429 = vunpack.c.l.b16 %v3315
    %v4430 = vunpack.c.h.b16 %v3315
    %v4431 = vunpack.c.l.b16 %v3316
    %v4432 = vunpack.c.h.b16 %v3316
    %v4433 = vunpack.c.l.b16 %v3317
    %v4434 = vunpack.c.h.b16 %v3317
    %v4435 = vunpack.c.l.b16 %v3318
    %v4436 = vunpack.c.h.b16 %v3318
    %v4437 = vunpack.c.l.b16 %v3319
    %v4438 = vunpack.c.h.b16 %v3319
    %v4439 = vunpack.c.l.b16 %v3320
    %v4440 = vunpack.c.h.b16 %v3320
    %v4441 = vunpack.c.l.b16 %v3321
    %v4442 = vunpack.c.h.b16 %v3321
    %v4443 = vunpack.c.l.b16 %v3322
    %v4444 = vunpack.c.h.b16 %v3322
    %v4445 = vunpack.c.l.b16 %v3323
    %v4446 = vunpack.c.h.b16 %v3323
    %v4447 = vunpack.c.l.b16 %v3324
    %v4448 = vunpack.c.h.b16 %v3324
    %v4449 = vunpack.c.l.b16 %v3325
    %v4450 = vunpack.c.h.b16 %v3325
    %v4451 = vunpack.c.l.b16 %v3326
    %v4452 = vunpack.c.h.b16 %v3326
    %v4453 = vunpack.c.l.b16 %v3327
    %v4454 = vunpack.c.h.b16 %v3327
    %v4455 = vunpack.c.l.b16 %v3328
    %v4456 = vunpack.c.h.b16 %v3328
    %v4457 = vunpack.c.l.b16 %v3329
    %v4458 = vunpack.c.h.b16 %v3329
    %v4459 = vunpack.c.l.b16 %v3330
    %v4460 = vunpack.c.h.b16 %v3330
    %v4461 = vunpack.c.l.b16 %v3331
    %v4462 = vunpack.c.h.b16 %v3331
    %v4463 = vunpack.c.l.b16 %v3332
    %v4464 = vunpack.c.h.b16 %v3332
    %v4465 = vunpack.c.l.b16 %v3333
    %v4466 = vunpack.c.h.b16 %v3333
    %v4467 = vunpack.c.l.b16 %v3334
    %v4468 = vunpack.c.h.b16 %v3334
    %v4469 = vunpack.c.l.b16 %v3335
    %v4470 = vunpack.c.h.b16 %v3335
    %v4471 = vunpack.c.l.b16 %v3336
    %v4472 = vunpack.c.h.b16 %v3336
    %v4473 = vunpack.c.l.b16 %v3337
    %v4474 = vunpack.c.h.b16 %v3337
    %v4475 = vunpack.c.l.b16 %v3338
    %v4476 = vunpack.c.h.b16 %v3338
    %v4477 = vunpack.c.l.b16 %v3339
    %v4478 = vunpack.c.h.b16 %v3339
    %v4479 = vunpack.c.l.b16 %v3340
    %v4480 = vunpack.c.h.b16 %v3340
    %v4481 = vunpack.c.l.b16 %v3341
    %v4482 = vunpack.c.h.b16 %v3341
    %v4483 = vunpack.c.l.b16 %v3342
    %v4484 = vunpack.c.h.b16 %v3342
    %v4485 = vunpack.c.l.b16 %v3343
    %v4486 = vunpack.c.h.b16 %v3343
    %v4487 = vunpack.c.l.b16 %v3344
    %v4488 = vunpack.c.h.b16 %v3344
    %v4489 = vunpack.c.l.b16 %v3345
    %v4490 = vunpack.c.h.b16 %v3345
    %v4491 = vunpack.c.l.b16 %v3346
    %v4492 = vunpack.c.h.b16 %v3346
    %v4493 = vunpack.c.l.b16 %v3347
    %v4494 = vunpack.c.h.b16 %v3347
    %v4495 = vunpack.c.l.b16 %v3348
    %v4496 = vunpack.c.h.b16 %v3348
    %v4497 = vunpack.c.l.b16 %v3349
    %v4498 = vunpack.c.h.b16 %v3349
    %v4499 = vunpack.c.l.b16 %v3350
    %v4500 = vunpack.c.h.b16 %v3350
    %v4501 = vunpack.c.l.b16 %v3351
    %v4502 = vunpack.c.h.b16 %v3351
    %v4503 = vunpack.c.l.b16 %v3352
    %v4504 = vunpack.c.h.b16 %v3352
    %v4505 = vunpack.c.l.b16 %v3353
    %v4506 = vunpack.c.h.b16 %v3353
    %v4507 = vunpack.c.l.b16 %v3354
    %v4508 = vunpack.c.h.b16 %v3354
    %v4509 = vunpack.c.l.b16 %v3355
    %v4510 = vunpack.c.h.b16 %v3355
    %v4511 = vunpack.c.l.b16 %v3356
    %v4512 = vunpack.c.h.b16 %v3356
    %v4513 = vunpack.c.l.b16 %v3357
    %v4514 = vunpack.c.h.b16 %v3357
    %v4515 = vunpack.c.l.b16 %v3358
    %v4516 = vunpack.c.h.b16 %v3358
    %v4517 = vunpack.c.l.b16 %v3359
    %v4518 = vunpack.c.h.b16 %v3359
    %v4519 = vunpack.c.l.b16 %v3360
    %v4520 = vunpack.c.h.b16 %v3360
    %v4521 = vunpack.c.l.b16 %v3361
    %v4522 = vunpack.c.h.b16 %v3361
    %v4523 = vunpack.c.l.b16 %v3362
    %v4524 = vunpack.c.h.b16 %v3362
    %v4525 = vunpack.c.l.b16 %v3363
    %v4526 = vunpack.c.h.b16 %v3363
    %v4527 = vunpack.c.l.b16 %v3364
    %v4528 = vunpack.c.h.b16 %v3364
    %v4529 = vunpack.c.l.b16 %v3365
    %v4530 = vunpack.c.h.b16 %v3365
    %v4531 = vunpack.c.l.b16 %v3366
    %v4532 = vunpack.c.h.b16 %v3366
    %v4533 = vunpack.c.l.b16 %v3367
    %v4534 = vunpack.c.h.b16 %v3367
    %v4535 = vunpack.c.l.b16 %v3368
    %v4536 = vunpack.c.h.b16 %v3368
    %v4537 = vunpack.c.l.b16 %v3369
    %v4538 = vunpack.c.h.b16 %v3369
    %v4539 = vunpack.c.l.b16 %v3370
    %v4540 = vunpack.c.h.b16 %v3370
    %v4541 = vunpack.c.l.b16 %v3371
    %v4542 = vunpack.c.h.b16 %v3371
    %v4543 = vunpack.c.l.b16 %v3372
    %v4544 = vunpack.c.h.b16 %v3372
    %v4545 = vunpack.c.l.b16 %v3373
    %v4546 = vunpack.c.h.b16 %v3373
    %v4547 = vunpack.c.l.b16 %v3374
    %v4548 = vunpack.c.h.b16 %v3374
    %v4549 = vunpack.c.l.b16 %v3375
    %v4550 = vunpack.c.h.b16 %v3375
    %v4551 = vunpack.c.l.b16 %v3376
    %v4552 = vunpack.c.h.b16 %v3376
    %v4553 = vunpack.c.l.b16 %v3377
    %v4554 = vunpack.c.h.b16 %v3377
    %v4555 = vunpack.c.l.b16 %v3378
    %v4556 = vunpack.c.h.b16 %v3378
    %v4557 = vunpack.c.l.b16 %v3379
    %v4558 = vunpack.c.h.b16 %v3379
    %v4559 = vunpack.c.l.b16 %v3380
    %v4560 = vunpack.c.h.b16 %v3380
    %v4561 = vunpack.c.l.b16 %v3381
    %v4562 = vunpack.c.h.b16 %v3381
    %v4563 = vunpack.c.l.b16 %v3382
    %v4564 = vunpack.c.h.b16 %v3382
    %v4565 = vunpack.c.l.b16 %v3383
    %v4566 = vunpack.c.h.b16 %v3383
    %v4567 = vunpack.c.l.b16 %v3384
    %v4568 = vunpack.c.h.b16 %v3384
    %v4569 = vunpack.c.l.b16 %v3385
    %v4570 = vunpack.c.h.b16 %v3385
    %v4571 = vunpack.c.l.b16 %v3386
    %v4572 = vunpack.c.h.b16 %v3386
    %v4573 = vunpack.c.l.b16 %v3387
    %v4574 = vunpack.c.h.b16 %v3387
    %v4575 = vunpack.c.l.b16 %v3388
    %v4576 = vunpack.c.h.b16 %v3388
    %v4577 = vunpack.c.l.b16 %v3389
    %v4578 = vunpack.c.h.b16 %v3389
    %v4579 = vunpack.c.l.b16 %v3390
    %v4580 = vunpack.c.h.b16 %v3390
    %v4581 = vunpack.c.l.b16 %v3391
    %v4582 = vunpack.c.h.b16 %v3391
    %v4583 = vunpack.c.l.b16 %v3392
    %v4584 = vunpack.c.h.b16 %v3392
    %v4585 = vunpack.c.l.b16 %v3393
    %v4586 = vunpack.c.h.b16 %v3393
    %v4587 = vunpack.c.l.b16 %v3394
    %v4588 = vunpack.c.h.b16 %v3394
    %v4589 = vunpack.c.l.b16 %v3395
    %v4590 = vunpack.c.h.b16 %v3395
    %v4591 = vunpack.c.l.b16 %v3396
    %v4592 = vunpack.c.h.b16 %v3396
    %v4593 = vunpack.c.l.b16 %v3397
    %v4594 = vunpack.c.h.b16 %v3397
    %v4595 = vunpack.c.l.b16 %v3398
    %v4596 = vunpack.c.h.b16 %v3398
    %v4597 = vunpack.c.l.b16 %v3399
    %v4598 = vunpack.c.h.b16 %v3399
    %v4599 = vunpack.c.l.b16 %v3400
    %v4600 = vunpack.c.h.b16 %v3400
    %v4601 = vunpack.c.l.b16 %v3401
    %v4602 = vunpack.c.h.b16 %v3401
    %v4603 = vunpack.c.l.b16 %v3402
    %v4604 = vunpack.c.h.b16 %v3402
    %v4605 = vunpack.c.l.b16 %v3403
    %v4606 = vunpack.c.h.b16 %v3403
    %v4607 = vunpack.c.l.b16 %v3404
    %v4608 = vunpack.c.h.b16 %v3404
    %v4609 = vunpack.c.l.b16 %v3405
    %v4610 = vunpack.c.h.b16 %v3405
    %v4611 = vunpack.c.l.b16 %v3406
    %v4612 = vunpack.c.h.b16 %v3406
    %v4613 = vunpack.c.l.b16 %v3407
    %v4614 = vunpack.c.h.b16 %v3407
    %v4615 = vunpack.c.l.b16 %v3408
    %v4616 = vunpack.c.h.b16 %v3408
    %v4617 = vunpack.c.l.b16 %v3409
    %v4618 = vunpack.c.h.b16 %v3409
    %v4619 = vunpack.c.l.b16 %v3410
    %v4620 = vunpack.c.h.b16 %v3410
    %v4621 = vunpack.c.l.b16 %v3411
    %v4622 = vunpack.c.h.b16 %v3411
    %v4623 = vunpack.c.l.b16 %v3412
    %v4624 = vunpack.c.h.b16 %v3412
    %v4625 = vunpack.c.l.b16 %v3413
    %v4626 = vunpack.c.h.b16 %v3413
    %v4627 = vunpack.c.l.b16 %v3414
    %v4628 = vunpack.c.h.b16 %v3414
    %v4629 = vunpack.c.l.b16 %v3415
    %v4630 = vunpack.c.h.b16 %v3415
    %v4631 = vunpack.c.l.b16 %v3416
    %v4632 = vunpack.c.h.b16 %v3416
    %v4633 = vunpack.c.l.b16 %v3417
    %v4634 = vunpack.c.h.b16 %v3417
    %v4635 = vunpack.c.l.b16 %v3418
    %v4636 = vunpack.c.h.b16 %v3418
    %v4637 = vunpack.c.l.b16 %v3419
    %v4638 = vunpack.c.h.b16 %v3419
    %v4639 = vunpack.c.l.b16 %v3420
    %v4640 = vunpack.c.h.b16 %v3420
    %v4641 = vunpack.c.l.b16 %v3421
    %v4642 = vunpack.c.h.b16 %v3421
    %v4643 = vunpack.c.l.b16 %v3422
    %v4644 = vunpack.c.h.b16 %v3422
    %v4645 = vunpack.c.l.b16 %v3423
    %v4646 = vunpack.c.h.b16 %v3423
    %v4647 = vunpack.c.l.b16 %v3424
    %v4648 = vunpack.c.h.b16 %v3424
    %v4649 = vunpack.c.l.b16 %v3425
    %v4650 = vunpack.c.h.b16 %v3425
    %v4651 = vunpack.c.l.b16 %v3426
    %v4652 = vunpack.c.h.b16 %v3426
    %v4653 = vunpack.c.l.b16 %v3427
    %v4654 = vunpack.c.h.b16 %v3427
    %v4655 = vunpack.c.l.b16 %v3428
    %v4656 = vunpack.c.h.b16 %v3428
    %v4657 = vunpack.c.l.b16 %v3429
    %v4658 = vunpack.c.h.b16 %v3429
    %v4659 = vunpack.c.l.b16 %v3430
    %v4660 = vunpack.c.h.b16 %v3430
    %v4661 = vunpack.c.l.b16 %v3431
    %v4662 = vunpack.c.h.b16 %v3431
    %v4663 = vunpack.c.l.b16 %v3432
    %v4664 = vunpack.c.h.b16 %v3432
    %v4665 = vunpack.c.l.b16 %v3433
    %v4666 = vunpack.c.h.b16 %v3433
    %v4667 = vunpack.c.l.b16 %v3434
    %v4668 = vunpack.c.h.b16 %v3434
    %v4669 = vunpack.c.l.b16 %v3435
    %v4670 = vunpack.c.h.b16 %v3435
    %v4671 = vunpack.c.l.b16 %v3436
    %v4672 = vunpack.c.h.b16 %v3436
    %v4673 = vunpack.c.l.b16 %v3437
    %v4674 = vunpack.c.h.b16 %v3437
    %v4675 = vunpack.c.l.b16 %v3438
    %v4676 = vunpack.c.h.b16 %v3438
    %v4677 = vunpack.c.l.b16 %v3439
    %v4678 = vunpack.c.h.b16 %v3439
    %v4679 = vunpack.c.l.b16 %v3440
    %v4680 = vunpack.c.h.b16 %v3440
    %v4681 = vunpack.c.l.b16 %v3441
    %v4682 = vunpack.c.h.b16 %v3441
    %v4683 = vunpack.c.l.b16 %v3442
    %v4684 = vunpack.c.h.b16 %v3442
    %v4685 = vunpack.c.l.b16 %v3443
    %v4686 = vunpack.c.h.b16 %v3443
    %v4687 = vunpack.c.l.b16 %v3444
    %v4688 = vunpack.c.h.b16 %v3444
    %v4689 = vunpack.c.l.b16 %v3445
    %v4690 = vunpack.c.h.b16 %v3445
    %v4691 = vunpack.c.l.b16 %v3446
    %v4692 = vunpack.c.h.b16 %v3446
    %v4693 = vunpack.c.l.b16 %v3447
    %v4694 = vunpack.c.h.b16 %v3447
    %v4695 = vunpack.c.l.b16 %v3448
    %v4696 = vunpack.c.h.b16 %v3448
    %v4697 = vunpack.c.l.b16 %v3449
    %v4698 = vunpack.c.h.b16 %v3449
    %v4699 = vunpack.c.l.b16 %v3450
    %v4700 = vunpack.c.h.b16 %v3450
    %v4701 = vunpack.c.l.b16 %v3451
    %v4702 = vunpack.c.h.b16 %v3451
    %v4703 = vunpack.c.l.b16 %v3452
    %v4704 = vunpack.c.h.b16 %v3452
    %v4705 = vunpack.c.l.b16 %v3453
    %v4706 = vunpack.c.h.b16 %v3453
    %v4707 = vunpack.c.l.b16 %v3454
    %v4708 = vunpack.c.h.b16 %v3454
    %v4709 = vunpack.c.l.b16 %v3455
    %v4710 = vunpack.c.h.b16 %v3455
    %v4711 = vunpack.c.l.b16 %v3456
    %v4712 = vunpack.c.h.b16 %v3456
    %v4713 = vunpack.c.l.b16 %v3457
    %v4714 = vunpack.c.h.b16 %v3457
    %v4715 = vunpack.c.l.b16 %v3458
    %v4716 = vunpack.c.h.b16 %v3458
    %v4717 = vunpack.c.l.b16 %v3459
    %v4718 = vunpack.c.h.b16 %v3459
    %v4719 = vunpack.c.l.b16 %v3460
    %v4720 = vunpack.c.h.b16 %v3460
    %v4721 = vunpack.c.l.b16 %v3461
    %v4722 = vunpack.c.h.b16 %v3461
    %v4723 = vunpack.c.l.b16 %v3462
    %v4724 = vunpack.c.h.b16 %v3462
    %v4725 = vunpack.c.l.b16 %v3463
    %v4726 = vunpack.c.h.b16 %v3463
    %v4727 = vunpack.c.l.b16 %v3464
    %v4728 = vunpack.c.h.b16 %v3464
    %v4729 = vunpack.c.l.b16 %v3465
    %v4730 = vunpack.c.h.b16 %v3465
    %v4731 = vunpack.c.l.b16 %v3466
    %v4732 = vunpack.c.h.b16 %v3466
    %v4733 = vunpack.c.l.b16 %v3467
    %v4734 = vunpack.c.h.b16 %v3467
    %v4735 = vunpack.c.l.b16 %v3468
    %v4736 = vunpack.c.h.b16 %v3468
    %v4737 = vunpack.c.l.b16 %v3469
    %v4738 = vunpack.c.h.b16 %v3469
    %v4739 = vunpack.c.l.b16 %v3470
    %v4740 = vunpack.c.h.b16 %v3470
    %v4741 = vunpack.c.l.b16 %v3471
    %v4742 = vunpack.c.h.b16 %v3471
    %v4743 = vunpack.c.l.b16 %v3472
    %v4744 = vunpack.c.h.b16 %v3472
    %v4745 = vunpack.c.l.b16 %v3473
    %v4746 = vunpack.c.h.b16 %v3473
    %v4747 = vunpack.c.l.b16 %v3474
    %v4748 = vunpack.c.h.b16 %v3474
    %v4749 = vunpack.c.l.b16 %v3475
    %v4750 = vunpack.c.h.b16 %v3475
    %v4751 = vunpack.c.l.b16 %v3476
    %v4752 = vunpack.c.h.b16 %v3476
    %v4753 = vunpack.c.l.b16 %v3477
    %v4754 = vunpack.c.h.b16 %v3477
    %v4755 = vunpack.c.l.b16 %v3478
    %v4756 = vunpack.c.h.b16 %v3478
    %v4757 = vunpack.c.l.b16 %v3479
    %v4758 = vunpack.c.h.b16 %v3479
    %v4759 = vunpack.c.l.b16 %v3480
    %v4760 = vunpack.c.h.b16 %v3480
    %v4761 = vunpack.c.l.b16 %v3481
    %v4762 = vunpack.c.h.b16 %v3481
    %v4763 = vunpack.c.l.b16 %v3482
    %v4764 = vunpack.c.h.b16 %v3482
    %v4765 = vunpack.c.l.b16 %v3483
    %v4766 = vunpack.c.h.b16 %v3483
    %v4767 = vunpack.c.l.b16 %v3484
    %v4768 = vunpack.c.h.b16 %v3484
    %v4769 = vunpack.c.l.b16 %v3485
    %v4770 = vunpack.c.h.b16 %v3485
    %v4771 = vunpack.c.l.b16 %v3486
    %v4772 = vunpack.c.h.b16 %v3486
    %v4773 = vunpack.c.l.b16 %v3487
    %v4774 = vunpack.c.h.b16 %v3487
    %v4775 = vunpack.c.l.b16 %v3488
    %v4776 = vunpack.c.h.b16 %v3488
    %v4777 = vunpack.c.l.b16 %v3489
    %v4778 = vunpack.c.h.b16 %v3489
    %v4779 = vunpack.c.l.b16 %v3490
    %v4780 = vunpack.c.h.b16 %v3490
    %v4781 = vunpack.c.l.b16 %v3491
    %v4782 = vunpack.c.h.b16 %v3491
    %v4783 = vunpack.c.l.b16 %v3492
    %v4784 = vunpack.c.h.b16 %v3492
    %v4785 = vunpack.c.l.b16 %v3493
    %v4786 = vunpack.c.h.b16 %v3493
    %v4787 = vunpack.c.l.b16 %v3494
    %v4788 = vunpack.c.h.b16 %v3494
    %v4789 = vunpack.c.l.b16 %v3495
    %v4790 = vunpack.c.h.b16 %v3495
    %v4791 = vunpack.c.l.b16 %v3496
    %v4792 = vunpack.c.h.b16 %v3496
    %v4793 = vunpack.c.l.b16 %v3497
    %v4794 = vunpack.c.h.b16 %v3497
    %v4795 = vunpack.c.l.b16 %v3498
    %v4796 = vunpack.c.h.b16 %v3498
    %v4797 = vunpack.c.l.b16 %v3499
    %v4798 = vunpack.c.h.b16 %v3499
    %v4799 = vunpack.c.l.b16 %v3500
    %v4800 = vunpack.c.h.b16 %v3500
    %v4801 = vunpack.c.l.b16 %v3501
    %v4802 = vunpack.c.h.b16 %v3501
    %v4803 = vunpack.c.l.b16 %v3502
    %v4804 = vunpack.c.h.b16 %v3502
    %v4805 = vunpack.c.l.b16 %v3503
    %v4806 = vunpack.c.h.b16 %v3503
    %v4807 = vunpack.c.l.b16 %v3504
    %v4808 = vunpack.c.h.b16 %v3504
    %v4809 = vunpack.c.l.b16 %v3505
    %v4810 = vunpack.c.h.b16 %v3505
    %v4811 = vunpack.c.l.b16 %v3506
    %v4812 = vunpack.c.h.b16 %v3506
    %v4813 = vunpack.c.l.b16 %v3507
    %v4814 = vunpack.c.h.b16 %v3507
    %v4815 = vunpack.c.l.b16 %v3508
    %v4816 = vunpack.c.h.b16 %v3508
    %v4817 = vunpack.c.l.b16 %v3509
    %v4818 = vunpack.c.h.b16 %v3509
    %v4819 = vunpack.c.l.b16 %v3510
    %v4820 = vunpack.c.h.b16 %v3510
    %v4821 = vunpack.c.l.b16 %v3511
    %v4822 = vunpack.c.h.b16 %v3511
    %v4823 = vunpack.c.l.b16 %v3512
    %v4824 = vunpack.c.h.b16 %v3512
    %v4825 = vunpack.c.l.b16 %v3513
    %v4826 = vunpack.c.h.b16 %v3513
    %v4827 = vunpack.c.l.b16 %v3514
    %v4828 = vunpack.c.h.b16 %v3514
    %v4829 = vunpack.c.l.b16 %v3515
    %v4830 = vunpack.c.h.b16 %v3515
    %v4831 = vunpack.c.l.b16 %v3516
    %v4832 = vunpack.c.h.b16 %v3516
    %v4833 = vunpack.c.l.b16 %v3517
    %v4834 = vunpack.c.h.b16 %v3517
    %v4835 = vunpack.c.l.b16 %v3518
    %v4836 = vunpack.c.h.b16 %v3518
    %v4837 = vunpack.c.l.b16 %v3519
    %v4838 = vunpack.c.h.b16 %v3519
    %v4839 = vunpack.c.l.b16 %v3520
    %v4840 = vunpack.c.h.b16 %v3520
    %v4841 = vunpack.c.l.b16 %v3521
    %v4842 = vunpack.c.h.b16 %v3521
    %v4843 = vunpack.c.l.b16 %v3522
    %v4844 = vunpack.c.h.b16 %v3522
    %v4845 = vunpack.c.l.b16 %v3523
    %v4846 = vunpack.c.h.b16 %v3523
    %v4847 = vunpack.c.l.b16 %v3524
    %v4848 = vunpack.c.h.b16 %v3524
    %v4849 = vunpack.c.l.b16 %v3525
    %v4850 = vunpack.c.h.b16 %v3525
    %v4851 = vunpack.c.l.b16 %v3526
    %v4852 = vunpack.c.h.b16 %v3526
    %v4853 = vunpack.c.l.b16 %v3527
    %v4854 = vunpack.c.h.b16 %v3527
    %v4855 = vunpack.c.l.b16 %v3528
    %v4856 = vunpack.c.h.b16 %v3528
    %v4857 = vunpack.c.l.b16 %v3529
    %v4858 = vunpack.c.h.b16 %v3529
    %v4859 = vunpack.c.l.b16 %v3530
    %v4860 = vunpack.c.h.b16 %v3530
    %v4861 = vunpack.c.l.b16 %v3531
    %v4862 = vunpack.c.h.b16 %v3531
    %v4863 = vunpack.c.l.b16 %v3532
    %v4864 = vunpack.c.h.b16 %v3532
    %v4865 = vunpack.c.l.b16 %v3533
    %v4866 = vunpack.c.h.b16 %v3533
    %v4867 = vunpack.c.l.b16 %v3534
    %v4868 = vunpack.c.h.b16 %v3534
    %v4869 = vunpack.c.l.b16 %v3535
    %v4870 = vunpack.c.h.b16 %v3535
    %v4871 = vunpack.c.l.b16 %v3536
    %v4872 = vunpack.c.h.b16 %v3536
    %v4873 = vunpack.c.l.b16 %v3537
    %v4874 = vunpack.c.h.b16 %v3537
    %v4875 = vunpack.c.l.b16 %v3538
    %v4876 = vunpack.c.h.b16 %v3538
    %v4877 = vunpack.c.l.b16 %v3539
    %v4878 = vunpack.c.h.b16 %v3539
    %v4879 = vunpack.c.l.b16 %v3540
    %v4880 = vunpack.c.h.b16 %v3540
    %v4881 = vunpack.c.l.b16 %v3541
    %v4882 = vunpack.c.h.b16 %v3541
    %v4883 = vunpack.c.l.b16 %v3542
    %v4884 = vunpack.c.h.b16 %v3542
    %v4885 = vunpack.c.l.b16 %v3543
    %v4886 = vunpack.c.h.b16 %v3543
    %v4887 = vunpack.c.l.b16 %v3544
    %v4888 = vunpack.c.h.b16 %v3544
    %v4889 = vunpack.c.l.b16 %v3545
    %v4890 = vunpack.c.h.b16 %v3545
    %v4891 = vunpack.c.l.b16 %v3546
    %v4892 = vunpack.c.h.b16 %v3546
    %v4893 = vunpack.c.l.b16 %v3547
    %v4894 = vunpack.c.h.b16 %v3547
    %v4895 = vunpack.c.l.b16 %v3548
    %v4896 = vunpack.c.h.b16 %v3548
    %v4897 = vunpack.c.l.b16 %v3549
    %v4898 = vunpack.c.h.b16 %v3549
    %v4899 = vunpack.c.l.b16 %v3550
    %v4900 = vunpack.c.h.b16 %v3550
    %v4901 = vunpack.c.l.b16 %v3551
    %v4902 = vunpack.c.h.b16 %v3551
    %v4903 = vunpack.c.l.b16 %v3552
    %v4904 = vunpack.c.h.b16 %v3552
    %v4905 = vunpack.c.l.b16 %v3553
    %v4906 = vunpack.c.h.b16 %v3553
    %v4907 = vunpack.c.l.b16 %v3554
    %v4908 = vunpack.c.h.b16 %v3554
    %v4909 = vunpack.c.l.b16 %v3555
    %v4910 = vunpack.c.h.b16 %v3555
    %v4911 = vunpack.c.l.b16 %v3556
    %v4912 = vunpack.c.h.b16 %v3556
    %v4913 = vunpack.c.l.b16 %v3557
    %v4914 = vunpack.c.h.b16 %v3557
    %v4915 = vunpack.c.l.b16 %v3558
    %v4916 = vunpack.c.h.b16 %v3558
    %v4917 = vunpack.c.l.b16 %v3559
    %v4918 = vunpack.c.h.b16 %v3559
    %v4919 = vunpack.c.l.b16 %v3560
    %v4920 = vunpack.c.h.b16 %v3560
    %v4921 = vunpack.c.l.b16 %v3561
    %v4922 = vunpack.c.h.b16 %v3561
    %v4923 = vunpack.c.l.b16 %v3562
    %v4924 = vunpack.c.h.b16 %v3562
    %v4925 = vunpack.c.l.b16 %v3563
    %v4926 = vunpack.c.h.b16 %v3563
    %v4927 = vunpack.c.l.b16 %v3564
    %v4928 = vunpack.c.h.b16 %v3564
    %v4929 = vunpack.c.l.b16 %v3565
    %v4930 = vunpack.c.h.b16 %v3565
    %v4931 = vunpack.c.l.b16 %v3566
    %v4932 = vunpack.c.h.b16 %v3566
    %v4933 = vunpack.c.l.b16 %v3567
    %v4934 = vunpack.c.h.b16 %v3567
    %v4935 = vunpack.c.l.b16 %v3568
    %v4936 = vunpack.c.h.b16 %v3568
    %v4937 = vunpack.c.l.b16 %v3569
    %v4938 = vunpack.c.h.b16 %v3569
    %v4939 = vunpack.c.l.b16 %v3570
    %v4940 = vunpack.c.h.b16 %v3570
    %v4941 = vunpack.c.l.b16 %v3571
    %v4942 = vunpack.c.h.b16 %v3571
    %v4943 = vunpack.c.l.b16 %v3572
    %v4944 = vunpack.c.h.b16 %v3572
    %v4945 = vunpack.c.l.b16 %v3573
    %v4946 = vunpack.c.h.b16 %v3573
    %v4947 = vunpack.c.l.b16 %v3574
    %v4948 = vunpack.c.h.b16 %v3574
    %v4949 = vunpack.c.l.b16 %v3575
    %v4950 = vunpack.c.h.b16 %v3575
    %v4951 = vunpack.c.l.b16 %v3576
    %v4952 = vunpack.c.h.b16 %v3576
    %v4953 = vunpack.c.l.b16 %v3577
    %v4954 = vunpack.c.h.b16 %v3577
    %v4955 = vunpack.c.l.b16 %v3578
    %v4956 = vunpack.c.h.b16 %v3578
    %v4957 = vunpack.c.l.b16 %v3579
    %v4958 = vunpack.c.h.b16 %v3579
    %v4959 = vunpack.c.l.b16 %v3580
    %v4960 = vunpack.c.h.b16 %v3580
    %v4961 = vunpack.c.l.b16 %v3581
    %v4962 = vunpack.c.h.b16 %v3581
    %v4963 = vunpack.c.l.b16 %v3582
    %v4964 = vunpack.c.h.b16 %v3582
    %v4965 = vunpack.c.l.b16 %v3583
    %v4966 = vunpack.c.h.b16 %v3583
    %v4967 = vunpack.c.l.b16 %v3584
    %v4968 = vunpack.c.h.b16 %v3584
    %v4969 = vunpack.c.l.b16 %v3585
    %v4970 = vunpack.c.h.b16 %v3585
    %v4971 = vunpack.c.l.b16 %v3586
    %v4972 = vunpack.c.h.b16 %v3586
    %v4973 = vunpack.c.l.b16 %v3587
    %v4974 = vunpack.c.h.b16 %v3587
    %v4975 = vunpack.c.l.b16 %v3588
    %v4976 = vunpack.c.h.b16 %v3588
    %v4977 = vunpack.c.l.b16 %v3589
    %v4978 = vunpack.c.h.b16 %v3589
    %v4979 = vunpack.c.l.b16 %v3590
    %v4980 = vunpack.c.h.b16 %v3590
    %v4981 = vunpack.c.l.b16 %v3591
    %v4982 = vunpack.c.h.b16 %v3591
    %v4983 = vunpack.c.l.b16 %v3592
    %v4984 = vunpack.c.h.b16 %v3592
    %v4985 = vunpack.c.l.b16 %v3593
    %v4986 = vunpack.c.h.b16 %v3593
    %v4987 = vunpack.c.l.b16 %v3594
    %v4988 = vunpack.c.h.b16 %v3594
    %v4989 = vunpack.c.l.b16 %v3595
    %v4990 = vunpack.c.h.b16 %v3595
    %v4991 = vunpack.c.l.b16 %v3596
    %v4992 = vunpack.c.h.b16 %v3596
    %v4993 = vunpack.c.l.b16 %v3597
    %v4994 = vunpack.c.h.b16 %v3597
    %v4995 = vunpack.c.l.b16 %v3598
    %v4996 = vunpack.c.h.b16 %v3598
    %v4997 = vunpack.c.l.b16 %v3599
    %v4998 = vunpack.c.h.b16 %v3599
    %v4999 = vunpack.c.l.b16 %v3600
    %v5000 = vunpack.c.h.b16 %v3600
    %v5001 = vunpack.c.l.b16 %v3601
    %v5002 = vunpack.c.h.b16 %v3601
    %v5003 = vunpack.c.l.b16 %v3602
    %v5004 = vunpack.c.h.b16 %v3602
    %v5005 = vunpack.c.l.b16 %v3603
    %v5006 = vunpack.c.h.b16 %v3603
    %v5007 = vunpack.c.l.b16 %v3604
    %v5008 = vunpack.c.h.b16 %v3604
    %v5009 = vunpack.c.l.b16 %v3605
    %v5010 = vunpack.c.h.b16 %v3605
    %v5011 = vunpack.c.l.b16 %v3606
    %v5012 = vunpack.c.h.b16 %v3606
    %v5013 = vunpack.c.l.b16 %v3607
    %v5014 = vunpack.c.h.b16 %v3607
    %v5015 = vunpack.c.l.b16 %v3608
    %v5016 = vunpack.c.h.b16 %v3608
    %v5017 = vunpack.c.l.b16 %v3609
    %v5018 = vunpack.c.h.b16 %v3609
    %v5019 = vunpack.c.l.b16 %v3610
    %v5020 = vunpack.c.h.b16 %v3610
    %v5021 = vunpack.c.l.b16 %v3611
    %v5022 = vunpack.c.h.b16 %v3611
    %v5023 = vunpack.c.l.b16 %v3612
    %v5024 = vunpack.c.h.b16 %v3612
    %v5025 = vunpack.c.l.b16 %v3613
    %v5026 = vunpack.c.h.b16 %v3613
    %v5027 = vunpack.c.l.b16 %v3614
    %v5028 = vunpack.c.h.b16 %v3614
    %v5029 = vunpack.c.l.b16 %v3615
    %v5030 = vunpack.c.h.b16 %v3615
    %v5031 = vunpack.c.l.b16 %v3616
    %v5032 = vunpack.c.h.b16 %v3616
    %v5033 = vunpack.c.l.b16 %v3617
    %v5034 = vunpack.c.h.b16 %v3617
    %v5035 = vunpack.c.l.b16 %v3618
    %v5036 = vunpack.c.h.b16 %v3618
    %v5037 = vunpack.c.l.b16 %v3619
    %v5038 = vunpack.c.h.b16 %v3619
    %v5039 = vunpack.c.l.b16 %v3620
    %v5040 = vunpack.c.h.b16 %v3620
    %v5041 = vunpack.c.l.b16 %v3621
    %v5042 = vunpack.c.h.b16 %v3621
    %v5043 = vunpack.c.l.b16 %v3622
    %v5044 = vunpack.c.h.b16 %v3622
    %v5045 = vunpack.c.l.b16 %v3623
    %v5046 = vunpack.c.h.b16 %v3623
    %v5047 = vunpack.c.l.b16 %v3624
    %v5048 = vunpack.c.h.b16 %v3624
    %v5049 = vunpack.c.l.b16 %v3625
    %v5050 = vunpack.c.h.b16 %v3625
    %v5051 = vunpack.c.l.b16 %v3626
    %v5052 = vunpack.c.h.b16 %v3626
    %v5053 = vunpack.c.l.b16 %v3627
    %v5054 = vunpack.c.h.b16 %v3627
    %v5055 = vunpack.c.l.b16 %v3628
    %v5056 = vunpack.c.h.b16 %v3628
    %v5057 = vunpack.c.l.b16 %v3629
    %v5058 = vunpack.c.h.b16 %v3629
    %v5059 = vunpack.c.l.b16 %v3630
    %v5060 = vunpack.c.h.b16 %v3630
    %v5061 = vunpack.c.l.b16 %v3631
    %v5062 = vunpack.c.h.b16 %v3631
    %v5063 = vunpack.c.l.b16 %v3632
    %v5064 = vunpack.c.h.b16 %v3632
    %v5065 = vunpack.c.l.b16 %v3633
    %v5066 = vunpack.c.h.b16 %v3633
    %v5067 = vunpack.c.l.b16 %v3634
    %v5068 = vunpack.c.h.b16 %v3634
    %v5069 = vunpack.c.l.b16 %v3635
    %v5070 = vunpack.c.h.b16 %v3635
    %v5071 = vunpack.c.l.b16 %v3636
    %v5072 = vunpack.c.h.b16 %v3636
    %v5073 = vunpack.c.l.b16 %v3637
    %v5074 = vunpack.c.h.b16 %v3637
    %v5075 = vunpack.c.l.b16 %v3638
    %v5076 = vunpack.c.h.b16 %v3638
    %v5077 = vunpack.c.l.b16 %v3639
    %v5078 = vunpack.c.h.b16 %v3639
    %v5079 = vunpack.c.l.b16 %v3640
    %v5080 = vunpack.c.h.b16 %v3640
    %v5081 = vunpack.c.l.b16 %v3641
    %v5082 = vunpack.c.h.b16 %v3641
    %v5083 = vunpack.c.l.b16 %v3642
    %v5084 = vunpack.c.h.b16 %v3642
    %v5085 = vunpack.c.l.b16 %v3643
    %v5086 = vunpack.c.h.b16 %v3643
    %v5087 = vunpack.c.l.b16 %v3644
    %v5088 = vunpack.c.h.b16 %v3644
    %v5089 = vunpack.c.l.b16 %v3645
    %v5090 = vunpack.c.h.b16 %v3645
    %v5091 = vunpack.c.l.b16 %v3646
    %v5092 = vunpack.c.h.b16 %v3646
    %v5093 = vunpack.c.l.b16 %v3647
    %v5094 = vunpack.c.h.b16 %v3647
    %v5095 = vunpack.c.l.b16 %v3648
    %v5096 = vunpack.c.h.b16 %v3648
    %v5097 = vunpack.c.l.b16 %v3649
    %v5098 = vunpack.c.h.b16 %v3649
    %v5099 = vunpack.c.l.b16 %v3650
    %v5100 = vunpack.c.h.b16 %v3650
    %v5101 = vunpack.c.l.b16 %v3651
    %v5102 = vunpack.c.h.b16 %v3651
    %v5103 = vunpack.c.l.b16 %v3652
    %v5104 = vunpack.c.h.b16 %v3652
    %v5105 = vunpack.c.l.b16 %v3653
    %v5106 = vunpack.c.h.b16 %v3653
    %v5107 = vunpack.c.l.b16 %v3654
    %v5108 = vunpack.c.h.b16 %v3654
    %v5109 = vunpack.c.l.b16 %v3655
    %v5110 = vunpack.c.h.b16 %v3655
    %v5111 = vunpack.c.l.b16 %v3656
    %v5112 = vunpack.c.h.b16 %v3656
    %v5113 = vunpack.c.l.b16 %v3657
    %v5114 = vunpack.c.h.b16 %v3657
    %v5115 = vunpack.c.l.b16 %v3658
    %v5116 = vunpack.c.h.b16 %v3658
    %v5117 = vunpack.c.l.b16 %v3659
    %v5118 = vunpack.c.h.b16 %v3659
    %v5119 = vunpack.c.l.b16 %v3660
    %v5120 = vunpack.c.h.b16 %v3660
    %v5121 = vunpack.c.l.b16 %v3661
    %v5122 = vunpack.c.h.b16 %v3661
    %v5123 = vunpack.c.l.b16 %v3662
    %v5124 = vunpack.c.h.b16 %v3662
    %v5125 = vunpack.c.l.b16 %v3663
    %v5126 = vunpack.c.h.b16 %v3663
    %v5127 = vunpack.c.l.b16 %v3664
    %v5128 = vunpack.c.h.b16 %v3664
    %v5129 = vunpack.c.l.b16 %v3665
    %v5130 = vunpack.c.h.b16 %v3665
    %v5131 = vunpack.c.l.b16 %v3666
    %v5132 = vunpack.c.h.b16 %v3666
    %v5133 = vunpack.c.l.b16 %v3667
    %v5134 = vunpack.c.h.b16 %v3667
    %v5135 = vunpack.c.l.b16 %v3668
    %v5136 = vunpack.c.h.b16 %v3668
    %v5137 = vunpack.c.l.b16 %v3669
    %v5138 = vunpack.c.h.b16 %v3669
    %v5139 = vunpack.c.l.b16 %v3670
    %v5140 = vunpack.c.h.b16 %v3670
    %v5141 = vunpack.c.l.b16 %v3671
    %v5142 = vunpack.c.h.b16 %v3671
    %v5143 = vunpack.c.l.b16 %v3672
    %v5144 = vunpack.c.h.b16 %v3672
    %v5145 = vunpack.c.l.b16 %v3673
    %v5146 = vunpack.c.h.b16 %v3673
    %v5147 = vunpack.c.l.b16 %v3674
    %v5148 = vunpack.c.h.b16 %v3674
    %v5149 = vunpack.c.l.b16 %v3675
    %v5150 = vunpack.c.h.b16 %v3675
    %v5151 = vunpack.c.l.b16 %v3676
    %v5152 = vunpack.c.h.b16 %v3676
    %v5153 = vunpack.c.l.b16 %v3677
    %v5154 = vunpack.c.h.b16 %v3677
    %v5155 = vunpack.c.l.b16 %v3678
    %v5156 = vunpack.c.h.b16 %v3678
    %v5157 = vunpack.c.l.b16 %v3679
    %v5158 = vunpack.c.h.b16 %v3679
    %v5159 = vunpack.c.l.b16 %v3680
    %v5160 = vunpack.c.h.b16 %v3680
    %v5161 = vunpack.c.l.b16 %v3681
    %v5162 = vunpack.c.h.b16 %v3681
    %v5163 = vunpack.c.l.b16 %v3682
    %v5164 = vunpack.c.h.b16 %v3682
    %v5165 = vunpack.c.l.b16 %v3683
    %v5166 = vunpack.c.h.b16 %v3683
    %v5167 = vunpack.c.l.b16 %v3684
    %v5168 = vunpack.c.h.b16 %v3684
    %v5169 = vunpack.c.l.b16 %v3685
    %v5170 = vunpack.c.h.b16 %v3685
    %v5171 = vunpack.c.l.b16 %v3686
    %v5172 = vunpack.c.h.b16 %v3686
    %v5173 = vunpack.c.l.b16 %v3687
    %v5174 = vunpack.c.h.b16 %v3687
    %v5175 = vunpack.c.l.b16 %v3688
    %v5176 = vunpack.c.h.b16 %v3688
    %v5177 = vunpack.c.l.b16 %v3689
    %v5178 = vunpack.c.h.b16 %v3689
    %v5179 = vunpack.c.l.b16 %v3690
    %v5180 = vunpack.c.h.b16 %v3690
    %v5181 = vunpack.c.l.b16 %v3691
    %v5182 = vunpack.c.h.b16 %v3691
    %v5183 = vunpack.c.l.b16 %v3692
    %v5184 = vunpack.c.h.b16 %v3692
    %v5185 = vunpack.c.l.b16 %v3693
    %v5186 = vunpack.c.h.b16 %v3693
    %v5187 = vunpack.c.l.b16 %v3694
    %v5188 = vunpack.c.h.b16 %v3694
    %v5189 = vunpack.c.l.b16 %v3695
    %v5190 = vunpack.c.h.b16 %v3695
    %v5191 = vunpack.c.l.b16 %v3696
    %v5192 = vunpack.c.h.b16 %v3696
    %v5193 = vunpack.c.l.b16 %v3697
    %v5194 = vunpack.c.h.b16 %v3697
    %v5195 = vunpack.c.l.b16 %v3698
    %v5196 = vunpack.c.h.b16 %v3698
    %v5197 = vunpack.c.l.b16 %v3699
    %v5198 = vunpack.c.h.b16 %v3699
    %v5199 = vunpack.c.l.b16 %v3700
    %v5200 = vunpack.c.h.b16 %v3700
    %v5201 = vunpack.c.l.b16 %v3701
    %v5202 = vunpack.c.h.b16 %v3701
    %v5203 = vunpack.c.l.b16 %v3702
    %v5204 = vunpack.c.h.b16 %v3702
    %v5205 = vunpack.c.l.b16 %v3703
    %v5206 = vunpack.c.h.b16 %v3703
    %v5207 = vunpack.c.l.b16 %v3704
    %v5208 = vunpack.c.h.b16 %v3704
    %v5209 = vunpack.c.l.b16 %v3705
    %v5210 = vunpack.c.h.b16 %v3705
    %v5211 = vunpack.c.l.b16 %v3706
    %v5212 = vunpack.c.h.b16 %v3706
    %v5213 = vunpack.c.l.b16 %v3707
    %v5214 = vunpack.c.h.b16 %v3707
    %v5215 = vunpack.c.l.b16 %v3708
    %v5216 = vunpack.c.h.b16 %v3708
    %v5217 = vunpack.c.l.b16 %v3709
    %v5218 = vunpack.c.h.b16 %v3709
    %v5219 = vunpack.c.l.b16 %v3710
    %v5220 = vunpack.c.h.b16 %v3710
    %v5221 = vunpack.c.l.b16 %v3711
    %v5222 = vunpack.c.h.b16 %v3711
    %v5223 = vunpack.c.l.b16 %v3712
    %v5224 = vunpack.c.h.b16 %v3712
    %v5225 = vunpack.c.l.b16 %v3713
    %v5226 = vunpack.c.h.b16 %v3713
    %v5227 = vunpack.c.l.b16 %v3714
    %v5228 = vunpack.c.h.b16 %v3714
    %v5229 = vunpack.c.l.b16 %v3715
    %v5230 = vunpack.c.h.b16 %v3715
    %v5231 = vunpack.c.l.b16 %v3716
    %v5232 = vunpack.c.h.b16 %v3716
    %v5233 = vunpack.c.l.b16 %v3717
    %v5234 = vunpack.c.h.b16 %v3717
    %v5235 = vunpack.c.l.b16 %v3718
    %v5236 = vunpack.c.h.b16 %v3718
    %v5237 = vunpack.c.l.b16 %v3719
    %v5238 = vunpack.c.h.b16 %v3719
    %v5239 = vunpack.c.l.b16 %v3720
    %v5240 = vunpack.c.h.b16 %v3720
    %v5241 = vunpack.c.l.b16 %v3721
    %v5242 = vunpack.c.h.b16 %v3721
    %v5243 = vunpack.c.l.b16 %v3722
    %v5244 = vunpack.c.h.b16 %v3722
    %v5245 = vunpack.c.l.b16 %v3723
    %v5246 = vunpack.c.h.b16 %v3723
    %v5247 = vunpack.c.l.b16 %v3724
    %v5248 = vunpack.c.h.b16 %v3724
    %v5249 = vunpack.c.l.b16 %v3725
    %v5250 = vunpack.c.h.b16 %v3725
    %v5251 = vunpack.c.l.b16 %v3726
    %v5252 = vunpack.c.h.b16 %v3726
    %v5253 = vunpack.c.l.b16 %v3727
    %v5254 = vunpack.c.h.b16 %v3727
    %v5255 = vunpack.c.l.b16 %v3728
    %v5256 = vunpack.c.h.b16 %v3728
    %v5257 = vunpack.c.l.b16 %v3729
    %v5258 = vunpack.c.h.b16 %v3729
    %v5259 = vunpack.c.l.b16 %v3730
    %v5260 = vunpack.c.h.b16 %v3730
    %v5261 = vunpack.c.l.b16 %v3731
    %v5262 = vunpack.c.h.b16 %v3731
    %v5263 = vunpack.c.l.b16 %v3732
    %v5264 = vunpack.c.h.b16 %v3732
    %v5265 = vunpack.c.l.b16 %v3733
    %v5266 = vunpack.c.h.b16 %v3733
    %v5267 = vunpack.c.l.b16 %v3734
    %v5268 = vunpack.c.h.b16 %v3734
    %v5269 = vunpack.c.l.b16 %v3735
    %v5270 = vunpack.c.h.b16 %v3735
    %v5271 = vunpack.c.l.b16 %v3736
    %v5272 = vunpack.c.h.b16 %v3736
    %v5273 = vunpack.c.l.b16 %v3737
    %v5274 = vunpack.c.h.b16 %v3737
    %v5275 = vunpack.c.l.b16 %v3738
    %v5276 = vunpack.c.h.b16 %v3738
    %v5277 = vunpack.c.l.b16 %v3739
    %v5278 = vunpack.c.h.b16 %v3739
    %v5279 = vunpack.c.l.b16 %v3740
    %v5280 = vunpack.c.h.b16 %v3740
    %v5281 = vunpack.c.l.b16 %v3741
    %v5282 = vunpack.c.h.b16 %v3741
    %v5283 = vunpack.c.l.b16 %v3742
    %v5284 = vunpack.c.h.b16 %v3742
    %v5285 = vunpack.c.l.b16 %v3743
    %v5286 = vunpack.c.h.b16 %v3743
    %v5287 = vunpack.c.l.b16 %v3744
    %v5288 = vunpack.c.h.b16 %v3744
    %v5289 = vunpack.c.l.b16 %v3745
    %v5290 = vunpack.c.h.b16 %v3745
    %v5291 = vunpack.c.l.b16 %v3746
    %v5292 = vunpack.c.h.b16 %v3746
    %v5293 = vunpack.c.l.b16 %v3747
    %v5294 = vunpack.c.h.b16 %v3747
    %v5295 = vunpack.c.l.b16 %v3748
    %v5296 = vunpack.c.h.b16 %v3748
    %v5297 = vunpack.c.l.b16 %v3749
    %v5298 = vunpack.c.h.b16 %v3749
    %v5299 = vunpack.c.l.b16 %v3750
    %v5300 = vunpack.c.h.b16 %v3750
    %v5301 = vunpack.c.l.b16 %v3751
    %v5302 = vunpack.c.h.b16 %v3751
    %v5303 = vunpack.c.l.b16 %v3752
    %v5304 = vunpack.c.h.b16 %v3752
    %v5305 = vunpack.c.l.b16 %v3753
    %v5306 = vunpack.c.h.b16 %v3753
    %v5307 = vunpack.c.l.b16 %v3754
    %v5308 = vunpack.c.h.b16 %v3754
    %v5309 = vunpack.c.l.b16 %v3755
    %v5310 = vunpack.c.h.b16 %v3755
    %v5311 = vunpack.c.l.b16 %v3756
    %v5312 = vunpack.c.h.b16 %v3756
    %v5313 = vunpack.c.l.b16 %v3757
    %v5314 = vunpack.c.h.b16 %v3757
    %v5315 = vunpack.c.l.b16 %v3758
    %v5316 = vunpack.c.h.b16 %v3758
    %v5317 = vunpack.c.l.b16 %v3759
    %v5318 = vunpack.c.h.b16 %v3759
    %v5319 = vunpack.c.l.b16 %v3760
    %v5320 = vunpack.c.h.b16 %v3760
    %v5321 = vunpack.c.l.b16 %v3761
    %v5322 = vunpack.c.h.b16 %v3761
    %v5323 = vunpack.c.l.b16 %v3762
    %v5324 = vunpack.c.h.b16 %v3762
    %v5325 = vunpack.c.l.b16 %v3763
    %v5326 = vunpack.c.h.b16 %v3763
    %v5327 = vunpack.c.l.b16 %v3764
    %v5328 = vunpack.c.h.b16 %v3764
    %v5329 = vunpack.c.l.b16 %v3765
    %v5330 = vunpack.c.h.b16 %v3765
    %v5331 = vunpack.c.l.b16 %v3766
    %v5332 = vunpack.c.h.b16 %v3766
    %v5333 = vunpack.c.l.b16 %v3767
    %v5334 = vunpack.c.h.b16 %v3767
    %v5335 = vunpack.c.l.b16 %v3768
    %v5336 = vunpack.c.h.b16 %v3768
    %v5337 = vunpack.c.l.b16 %v3769
    %v5338 = vunpack.c.h.b16 %v3769
    %v5339 = vunpack.c.l.b16 %v3770
    %v5340 = vunpack.c.h.b16 %v3770
    %v5341 = vunpack.c.l.b16 %v3771
    %v5342 = vunpack.c.h.b16 %v3771
    %v5343 = vunpack.c.l.b16 %v3772
    %v5344 = vunpack.c.h.b16 %v3772
    %v5345 = vunpack.c.l.b16 %v3773
    %v5346 = vunpack.c.h.b16 %v3773
    %v5347 = vunpack.c.l.b16 %v3774
    %v5348 = vunpack.c.h.b16 %v3774
    %v5349 = vunpack.c.l.b16 %v3775
    %v5350 = vunpack.c.h.b16 %v3775
    %v5351 = vunpack.c.l.b16 %v3776
    %v5352 = vunpack.c.h.b16 %v3776
    %v5353 = vunpack.c.l.b16 %v3777
    %v5354 = vunpack.c.h.b16 %v3777
    %v5355 = vunpack.c.l.b16 %v3778
    %v5356 = vunpack.c.h.b16 %v3778
    %v5357 = vpack.c.b16 %v4341, %v4333
    %v5358 = vpack.c.b16 %v4342, %v4334
    %v5359 = vpack.c.b16 %v4343, %v4335
    %v5360 = vpack.c.b16 %v4344, %v4336
    %v5361 = vpack.c.b16 %v4345, %v4337
    %v5362 = vpack.c.b16 %v4346, %v4338
    %v5363 = vpack.c.b16 %v4347, %v4339
    %v5364 = vpack.c.b16 %v4348, %v4340
    %v5365 = vpack.c.b16 %v4357, %v4349
    %v5366 = vpack.c.b16 %v4358, %v4350
    %v5367 = vpack.c.b16 %v4359, %v4351
    %v5368 = vpack.c.b16 %v4360, %v4352
    %v5369 = vpack.c.b16 %v4361, %v4353
    %v5370 = vpack.c.b16 %v4362, %v4354
    %v5371 = vpack.c.b16 %v4363, %v4355
    %v5372 = vpack.c.b16 %v4364, %v4356
    %v5373 = vpack.c.b16 %v4373, %v4365
    %v5374 = vpack.c.b16 %v4374, %v4366
    %v5375 = vpack.c.b16 %v4375, %v4367
    %v5376 = vpack.c.b16 %v4376, %v4368
    %v5377 = vpack.c.b16 %v4377, %v4369
    %v5378 = vpack.c.b16 %v4378, %v4370
    %v5379 = vpack.c.b16 %v4379, %v4371
    %v5380 = vpack.c.b16 %v4380, %v4372
    %v5381 = vpack.c.b16 %v4389, %v4381
    %v5382 = vpack.c.b16 %v4390, %v4382
    %v5383 = vpack.c.b16 %v4391, %v4383
    %v5384 = vpack.c.b16 %v4392, %v4384
    %v5385 = vpack.c.b16 %v4393, %v4385
    %v5386 = vpack.c.b16 %v4394, %v4386
    %v5387 = vpack.c.b16 %v4395, %v4387
    %v5388 = vpack.c.b16 %v4396, %v4388
    %v5389 = vpack.c.b16 %v4405, %v4397
    %v5390 = vpack.c.b16 %v4406, %v4398
    %v5391 = vpack.c.b16 %v4407, %v4399
    %v5392 = vpack.c.b16 %v4408, %v4400
    %v5393 = vpack.c.b16 %v4409, %v4401
    %v5394 = vpack.c.b16 %v4410, %v4402
    %v5395 = vpack.c.b16 %v4411, %v4403
    %v5396 = vpack.c.b16 %v4412, %v4404
    %v5397 = vpack.c.b16 %v4421, %v4413
    %v5398 = vpack.c.b16 %v4422, %v4414
    %v5399 = vpack.c.b16 %v4423, %v4415
    %v5400 = vpack.c.b16 %v4424, %v4416
    %v5401 = vpack.c.b16 %v4425, %v4417
    %v5402 = vpack.c.b16 %v4426, %v4418
    %v5403 = vpack.c.b16 %v4427, %v4419
    %v5404 = vpack.c.b16 %v4428, %v4420
    %v5405 = vpack.c.b16 %v4437, %v4429
    %v5406 = vpack.c.b16 %v4438, %v4430
    %v5407 = vpack.c.b16 %v4439, %v4431
    %v5408 = vpack.c.b16 %v4440, %v4432
    %v5409 = vpack.c.b16 %v4441, %v4433
    %v5410 = vpack.c.b16 %v4442, %v4434
    %v5411 = vpack.c.b16 %v4443, %v4435
    %v5412 = vpack.c.b16 %v4444, %v4436
    %v5413 = vpack.c.b16 %v4453, %v4445
    %v5414 = vpack.c.b16 %v4454, %v4446
    %v5415 = vpack.c.b16 %v4455, %v4447
    %v5416 = vpack.c.b16 %v4456, %v4448
    %v5417 = vpack.c.b16 %v4457, %v4449
    %v5418 = vpack.c.b16 %v4458, %v4450
    %v5419 = vpack.c.b16 %v4459, %v4451
    %v5420 = vpack.c.b16 %v4460, %v4452
    %v5421 = vpack.c.b16 %v4469, %v4461
    %v5422 = vpack.c.b16 %v4470, %v4462
    %v5423 = vpack.c.b16 %v4471, %v4463
    %v5424 = vpack.c.b16 %v4472, %v4464
    %v5425 = vpack.c.b16 %v4473, %v4465
    %v5426 = vpack.c.b16 %v4474, %v4466
    %v5427 = vpack.c.b16 %v4475, %v4467
    %v5428 = vpack.c.b16 %v4476, %v4468
    %v5429 = vpack.c.b16 %v4485, %v4477
    %v5430 = vpack.c.b16 %v4486, %v4478
    %v5431 = vpack.c.b16 %v4487, %v4479
    %v5432 = vpack.c.b16 %v4488, %v4480
    %v5433 = vpack.c.b16 %v4489, %v4481
    %v5434 = vpack.c.b16 %v4490, %v4482
    %v5435 = vpack.c.b16 %v4491, %v4483
    %v5436 = vpack.c.b16 %v4492, %v4484
    %v5437 = vpack.c.b16 %v4501, %v4493
    %v5438 = vpack.c.b16 %v4502, %v4494
    %v5439 = vpack.c.b16 %v4503, %v4495
    %v5440 = vpack.c.b16 %v4504, %v4496
    %v5441 = vpack.c.b16 %v4505, %v4497
    %v5442 = vpack.c.b16 %v4506, %v4498
    %v5443 = vpack.c.b16 %v4507, %v4499
    %v5444 = vpack.c.b16 %v4508, %v4500
    %v5445 = vpack.c.b16 %v4517, %v4509
    %v5446 = vpack.c.b16 %v4518, %v4510
    %v5447 = vpack.c.b16 %v4519, %v4511
    %v5448 = vpack.c.b16 %v4520, %v4512
    %v5449 = vpack.c.b16 %v4521, %v4513
    %v5450 = vpack.c.b16 %v4522, %v4514
    %v5451 = vpack.c.b16 %v4523, %v4515
    %v5452 = vpack.c.b16 %v4524, %v4516
    %v5453 = vpack.c.b16 %v4533, %v4525
    %v5454 = vpack.c.b16 %v4534, %v4526
    %v5455 = vpack.c.b16 %v4535, %v4527
    %v5456 = vpack.c.b16 %v4536, %v4528
    %v5457 = vpack.c.b16 %v4537, %v4529
    %v5458 = vpack.c.b16 %v4538, %v4530
    %v5459 = vpack.c.b16 %v4539, %v4531
    %v5460 = vpack.c.b16 %v4540, %v4532
    %v5461 = vpack.c.b16 %v4549, %v4541
    %v5462 = vpack.c.b16 %v4550, %v4542
    %v5463 = vpack.c.b16 %v4551, %v4543
    %v5464 = vpack.c.b16 %v4552, %v4544
    %v5465 = vpack.c.b16 %v4553, %v4545
    %v5466 = vpack.c.b16 %v4554, %v4546
    %v5467 = vpack.c.b16 %v4555, %v4547
    %v5468 = vpack.c.b16 %v4556, %v4548
    %v5469 = vpack.c.b16 %v4565, %v4557
    %v5470 = vpack.c.b16 %v4566, %v4558
    %v5471 = vpack.c.b16 %v4567, %v4559
    %v5472 = vpack.c.b16 %v4568, %v4560
    %v5473 = vpack.c.b16 %v4569, %v4561
    %v5474 = vpack.c.b16 %v4570, %v4562
    %v5475 = vpack.c.b16 %v4571, %v4563
    %v5476 = vpack.c.b16 %v4572, %v4564
    %v5477 = vpack.c.b16 %v4581, %v4573
    %v5478 = vpack.c.b16 %v4582, %v4574
    %v5479 = vpack.c.b16 %v4583, %v4575
    %v5480 = vpack.c.b16 %v4584, %v4576
    %v5481 = vpack.c.b16 %v4585, %v4577
    %v5482 = vpack.c.b16 %v4586, %v4578
    %v5483 = vpack.c.b16 %v4587, %v4579
    %v5484 = vpack.c.b16 %v4588, %v4580
    %v5485 = vpack.c.b16 %v4597, %v4589
    %v5486 = vpack.c.b16 %v4598, %v4590
    %v5487 = vpack.c.b16 %v4599, %v4591
    %v5488 = vpack.c.b16 %v4600, %v4592
    %v5489 = vpack.c.b16 %v4601, %v4593
    %v5490 = vpack.c.b16 %v4602, %v4594
    %v5491 = vpack.c.b16 %v4603, %v4595
    %v5492 = vpack.c.b16 %v4604, %v4596
    %v5493 = vpack.c.b16 %v4613, %v4605
    %v5494 = vpack.c.b16 %v4614, %v4606
    %v5495 = vpack.c.b16 %v4615, %v4607
    %v5496 = vpack.c.b16 %v4616, %v4608
    %v5497 = vpack.c.b16 %v4617, %v4609
    %v5498 = vpack.c.b16 %v4618, %v4610
    %v5499 = vpack.c.b16 %v4619, %v4611
    %v5500 = vpack.c.b16 %v4620, %v4612
    %v5501 = vpack.c.b16 %v4629, %v4621
    %v5502 = vpack.c.b16 %v4630, %v4622
    %v5503 = vpack.c.b16 %v4631, %v4623
    %v5504 = vpack.c.b16 %v4632, %v4624
    %v5505 = vpack.c.b16 %v4633, %v4625
    %v5506 = vpack.c.b16 %v4634, %v4626
    %v5507 = vpack.c.b16 %v4635, %v4627
    %v5508 = vpack.c.b16 %v4636, %v4628
    %v5509 = vpack.c.b16 %v4645, %v4637
    %v5510 = vpack.c.b16 %v4646, %v4638
    %v5511 = vpack.c.b16 %v4647, %v4639
    %v5512 = vpack.c.b16 %v4648, %v4640
    %v5513 = vpack.c.b16 %v4649, %v4641
    %v5514 = vpack.c.b16 %v4650, %v4642
    %v5515 = vpack.c.b16 %v4651, %v4643
    %v5516 = vpack.c.b16 %v4652, %v4644
    %v5517 = vpack.c.b16 %v4661, %v4653
    %v5518 = vpack.c.b16 %v4662, %v4654
    %v5519 = vpack.c.b16 %v4663, %v4655
    %v5520 = vpack.c.b16 %v4664, %v4656
    %v5521 = vpack.c.b16 %v4665, %v4657
    %v5522 = vpack.c.b16 %v4666, %v4658
    %v5523 = vpack.c.b16 %v4667, %v4659
    %v5524 = vpack.c.b16 %v4668, %v4660
    %v5525 = vpack.c.b16 %v4677, %v4669
    %v5526 = vpack.c.b16 %v4678, %v4670
    %v5527 = vpack.c.b16 %v4679, %v4671
    %v5528 = vpack.c.b16 %v4680, %v4672
    %v5529 = vpack.c.b16 %v4681, %v4673
    %v5530 = vpack.c.b16 %v4682, %v4674
    %v5531 = vpack.c.b16 %v4683, %v4675
    %v5532 = vpack.c.b16 %v4684, %v4676
    %v5533 = vpack.c.b16 %v4693, %v4685
    %v5534 = vpack.c.b16 %v4694, %v4686
    %v5535 = vpack.c.b16 %v4695, %v4687
    %v5536 = vpack.c.b16 %v4696, %v4688
    %v5537 = vpack.c.b16 %v4697, %v4689
    %v5538 = vpack.c.b16 %v4698, %v4690
    %v5539 = vpack.c.b16 %v4699, %v4691
    %v5540 = vpack.c.b16 %v4700, %v4692
    %v5541 = vpack.c.b16 %v4709, %v4701
    %v5542 = vpack.c.b16 %v4710, %v4702
    %v5543 = vpack.c.b16 %v4711, %v4703
    %v5544 = vpack.c.b16 %v4712, %v4704
    %v5545 = vpack.c.b16 %v4713, %v4705
    %v5546 = vpack.c.b16 %v4714, %v4706
    %v5547 = vpack.c.b16 %v4715, %v4707
    %v5548 = vpack.c.b16 %v4716, %v4708
    %v5549 = vpack.c.b16 %v4725, %v4717
    %v5550 = vpack.c.b16 %v4726, %v4718
    %v5551 = vpack.c.b16 %v4727, %v4719
    %v5552 = vpack.c.b16 %v4728, %v4720
    %v5553 = vpack.c.b16 %v4729, %v4721
    %v5554 = vpack.c.b16 %v4730, %v4722
    %v5555 = vpack.c.b16 %v4731, %v4723
    %v5556 = vpack.c.b16 %v4732, %v4724
    %v5557 = vpack.c.b16 %v4741, %v4733
    %v5558 = vpack.c.b16 %v4742, %v4734
    %v5559 = vpack.c.b16 %v4743, %v4735
    %v5560 = vpack.c.b16 %v4744, %v4736
    %v5561 = vpack.c.b16 %v4745, %v4737
    %v5562 = vpack.c.b16 %v4746, %v4738
    %v5563 = vpack.c.b16 %v4747, %v4739
    %v5564 = vpack.c.b16 %v4748, %v4740
    %v5565 = vpack.c.b16 %v4757, %v4749
    %v5566 = vpack.c.b16 %v4758, %v4750
    %v5567 = vpack.c.b16 %v4759, %v4751
    %v5568 = vpack.c.b16 %v4760, %v4752
    %v5569 = vpack.c.b16 %v4761, %v4753
    %v5570 = vpack.c.b16 %v4762, %v4754
    %v5571 = vpack.c.b16 %v4763, %v4755
    %v5572 = vpack.c.b16 %v4764, %v4756
    %v5573 = vpack.c.b16 %v4773, %v4765
    %v5574 = vpack.c.b16 %v4774, %v4766
    %v5575 = vpack.c.b16 %v4775, %v4767
    %v5576 = vpack.c.b16 %v4776, %v4768
    %v5577 = vpack.c.b16 %v4777, %v4769
    %v5578 = vpack.c.b16 %v4778, %v4770
    %v5579 = vpack.c.b16 %v4779, %v4771
    %v5580 = vpack.c.b16 %v4780, %v4772
    %v5581 = vpack.c.b16 %v4789, %v4781
    %v5582 = vpack.c.b16 %v4790, %v4782
    %v5583 = vpack.c.b16 %v4791, %v4783
    %v5584 = vpack.c.b16 %v4792, %v4784
    %v5585 = vpack.c.b16 %v4793, %v4785
    %v5586 = vpack.c.b16 %v4794, %v4786
    %v5587 = vpack.c.b16 %v4795, %v4787
    %v5588 = vpack.c.b16 %v4796, %v4788
    %v5589 = vpack.c.b16 %v4805, %v4797
    %v5590 = vpack.c.b16 %v4806, %v4798
    %v5591 = vpack.c.b16 %v4807, %v4799
    %v5592 = vpack.c.b16 %v4808, %v4800
    %v5593 = vpack.c.b16 %v4809, %v4801
    %v5594 = vpack.c.b16 %v4810, %v4802
    %v5595 = vpack.c.b16 %v4811, %v4803
    %v5596 = vpack.c.b16 %v4812, %v4804
    %v5597 = vpack.c.b16 %v4821, %v4813
    %v5598 = vpack.c.b16 %v4822, %v4814
    %v5599 = vpack.c.b16 %v4823, %v4815
    %v5600 = vpack.c.b16 %v4824, %v4816
    %v5601 = vpack.c.b16 %v4825, %v4817
    %v5602 = vpack.c.b16 %v4826, %v4818
    %v5603 = vpack.c.b16 %v4827, %v4819
    %v5604 = vpack.c.b16 %v4828, %v4820
    %v5605 = vpack.c.b16 %v4837, %v4829
    %v5606 = vpack.c.b16 %v4838, %v4830
    %v5607 = vpack.c.b16 %v4839, %v4831
    %v5608 = vpack.c.b16 %v4840, %v4832
    %v5609 = vpack.c.b16 %v4841, %v4833
    %v5610 = vpack.c.b16 %v4842, %v4834
    %v5611 = vpack.c.b16 %v4843, %v4835
    %v5612 = vpack.c.b16 %v4844, %v4836
    %v5613 = vpack.c.b16 %v4853, %v4845
    %v5614 = vpack.c.b16 %v4854, %v4846
    %v5615 = vpack.c.b16 %v4855, %v4847
    %v5616 = vpack.c.b16 %v4856, %v4848
    %v5617 = vpack.c.b16 %v4857, %v4849
    %v5618 = vpack.c.b16 %v4858, %v4850
    %v5619 = vpack.c.b16 %v4859, %v4851
    %v5620 = vpack.c.b16 %v4860, %v4852
    %v5621 = vpack.c.b16 %v4869, %v4861
    %v5622 = vpack.c.b16 %v4870, %v4862
    %v5623 = vpack.c.b16 %v4871, %v4863
    %v5624 = vpack.c.b16 %v4872, %v4864
    %v5625 = vpack.c.b16 %v4873, %v4865
    %v5626 = vpack.c.b16 %v4874, %v4866
    %v5627 = vpack.c.b16 %v4875, %v4867
    %v5628 = vpack.c.b16 %v4876, %v4868
    %v5629 = vpack.c.b16 %v4885, %v4877
    %v5630 = vpack.c.b16 %v4886, %v4878
    %v5631 = vpack.c.b16 %v4887, %v4879
    %v5632 = vpack.c.b16 %v4888, %v4880
    %v5633 = vpack.c.b16 %v4889, %v4881
    %v5634 = vpack.c.b16 %v4890, %v4882
    %v5635 = vpack.c.b16 %v4891, %v4883
    %v5636 = vpack.c.b16 %v4892, %v4884
    %v5637 = vpack.c.b16 %v4901, %v4893
    %v5638 = vpack.c.b16 %v4902, %v4894
    %v5639 = vpack.c.b16 %v4903, %v4895
    %v5640 = vpack.c.b16 %v4904, %v4896
    %v5641 = vpack.c.b16 %v4905, %v4897
    %v5642 = vpack.c.b16 %v4906, %v4898
    %v5643 = vpack.c.b16 %v4907, %v4899
    %v5644 = vpack.c.b16 %v4908, %v4900
    %v5645 = vpack.c.b16 %v4917, %v4909
    %v5646 = vpack.c.b16 %v4918, %v4910
    %v5647 = vpack.c.b16 %v4919, %v4911
    %v5648 = vpack.c.b16 %v4920, %v4912
    %v5649 = vpack.c.b16 %v4921, %v4913
    %v5650 = vpack.c.b16 %v4922, %v4914
    %v5651 = vpack.c.b16 %v4923, %v4915
    %v5652 = vpack.c.b16 %v4924, %v4916
    %v5653 = vpack.c.b16 %v4933, %v4925
    %v5654 = vpack.c.b16 %v4934, %v4926
    %v5655 = vpack.c.b16 %v4935, %v4927
    %v5656 = vpack.c.b16 %v4936, %v4928
    %v5657 = vpack.c.b16 %v4937, %v4929
    %v5658 = vpack.c.b16 %v4938, %v4930
    %v5659 = vpack.c.b16 %v4939, %v4931
    %v5660 = vpack.c.b16 %v4940, %v4932
    %v5661 = vpack.c.b16 %v4949, %v4941
    %v5662 = vpack.c.b16 %v4950, %v4942
    %v5663 = vpack.c.b16 %v4951, %v4943
    %v5664 = vpack.c.b16 %v4952, %v4944
    %v5665 = vpack.c.b16 %v4953, %v4945
    %v5666 = vpack.c.b16 %v4954, %v4946
    %v5667 = vpack.c.b16 %v4955, %v4947
    %v5668 = vpack.c.b16 %v4956, %v4948
    %v5669 = vpack.c.b16 %v4965, %v4957
    %v5670 = vpack.c.b16 %v4966, %v4958
    %v5671 = vpack.c.b16 %v4967, %v4959
    %v5672 = vpack.c.b16 %v4968, %v4960
    %v5673 = vpack.c.b16 %v4969, %v4961
    %v5674 = vpack.c.b16 %v4970, %v4962
    %v5675 = vpack.c.b16 %v4971, %v4963
    %v5676 = vpack.c.b16 %v4972, %v4964
    %v5677 = vpack.c.b16 %v4981, %v4973
    %v5678 = vpack.c.b16 %v4982, %v4974
    %v5679 = vpack.c.b16 %v4983, %v4975
    %v5680 = vpack.c.b16 %v4984, %v4976
    %v5681 = vpack.c.b16 %v4985, %v4977
    %v5682 = vpack.c.b16 %v4986, %v4978
    %v5683 = vpack.c.b16 %v4987, %v4979
    %v5684 = vpack.c.b16 %v4988, %v4980
    %v5685 = vpack.c.b16 %v4997, %v4989
    %v5686 = vpack.c.b16 %v4998, %v4990
    %v5687 = vpack.c.b16 %v4999, %v4991
    %v5688 = vpack.c.b16 %v5000, %v4992
    %v5689 = vpack.c.b16 %v5001, %v4993
    %v5690 = vpack.c.b16 %v5002, %v4994
    %v5691 = vpack.c.b16 %v5003, %v4995
    %v5692 = vpack.c.b16 %v5004, %v4996
    %v5693 = vpack.c.b16 %v5013, %v5005
    %v5694 = vpack.c.b16 %v5014, %v5006
    %v5695 = vpack.c.b16 %v5015, %v5007
    %v5696 = vpack.c.b16 %v5016, %v5008
    %v5697 = vpack.c.b16 %v5017, %v5009
    %v5698 = vpack.c.b16 %v5018, %v5010
    %v5699 = vpack.c.b16 %v5019, %v5011
    %v5700 = vpack.c.b16 %v5020, %v5012
    %v5701 = vpack.c.b16 %v5029, %v5021
    %v5702 = vpack.c.b16 %v5030, %v5022
    %v5703 = vpack.c.b16 %v5031, %v5023
    %v5704 = vpack.c.b16 %v5032, %v5024
    %v5705 = vpack.c.b16 %v5033, %v5025
    %v5706 = vpack.c.b16 %v5034, %v5026
    %v5707 = vpack.c.b16 %v5035, %v5027
    %v5708 = vpack.c.b16 %v5036, %v5028
    %v5709 = vpack.c.b16 %v5045, %v5037
    %v5710 = vpack.c.b16 %v5046, %v5038
    %v5711 = vpack.c.b16 %v5047, %v5039
    %v5712 = vpack.c.b16 %v5048, %v5040
    %v5713 = vpack.c.b16 %v5049, %v5041
    %v5714 = vpack.c.b16 %v5050, %v5042
    %v5715 = vpack.c.b16 %v5051, %v5043
    %v5716 = vpack.c.b16 %v5052, %v5044
    %v5717 = vpack.c.b16 %v5061, %v5053
    %v5718 = vpack.c.b16 %v5062, %v5054
    %v5719 = vpack.c.b16 %v5063, %v5055
    %v5720 = vpack.c.b16 %v5064, %v5056
    %v5721 = vpack.c.b16 %v5065, %v5057
    %v5722 = vpack.c.b16 %v5066, %v5058
    %v5723 = vpack.c.b16 %v5067, %v5059
    %v5724 = vpack.c.b16 %v5068, %v5060
    %v5725 = vpack.c.b16 %v5077, %v5069
    %v5726 = vpack.c.b16 %v5078, %v5070
    %v5727 = vpack.c.b16 %v5079, %v5071
    %v5728 = vpack.c.b16 %v5080, %v5072
    %v5729 = vpack.c.b16 %v5081, %v5073
    %v5730 = vpack.c.b16 %v5082, %v5074
    %v5731 = vpack.c.b16 %v5083, %v5075
    %v5732 = vpack.c.b16 %v5084, %v5076
    %v5733 = vpack.c.b16 %v5093, %v5085
    %v5734 = vpack.c.b16 %v5094, %v5086
    %v5735 = vpack.c.b16 %v5095, %v5087
    %v5736 = vpack.c.b16 %v5096, %v5088
    %v5737 = vpack.c.b16 %v5097, %v5089
    %v5738 = vpack.c.b16 %v5098, %v5090
    %v5739 = vpack.c.b16 %v5099, %v5091
    %v5740 = vpack.c.b16 %v5100, %v5092
    %v5741 = vpack.c.b16 %v5109, %v5101
    %v5742 = vpack.c.b16 %v5110, %v5102
    %v5743 = vpack.c.b16 %v5111, %v5103
    %v5744 = vpack.c.b16 %v5112, %v5104
    %v5745 = vpack.c.b16 %v5113, %v5105
    %v5746 = vpack.c.b16 %v5114, %v5106
    %v5747 = vpack.c.b16 %v5115, %v5107
    %v5748 = vpack.c.b16 %v5116, %v5108
    %v5749 = vpack.c.b16 %v5125, %v5117
    %v5750 = vpack.c.b16 %v5126, %v5118
    %v5751 = vpack.c.b16 %v5127, %v5119
    %v5752 = vpack.c.b16 %v5128, %v5120
    %v5753 = vpack.c.b16 %v5129, %v5121
    %v5754 = vpack.c.b16 %v5130, %v5122
    %v5755 = vpack.c.b16 %v5131, %v5123
    %v5756 = vpack.c.b16 %v5132, %v5124
    %v5757 = vpack.c.b16 %v5141, %v5133
    %v5758 = vpack.c.b16 %v5142, %v5134
    %v5759 = vpack.c.b16 %v5143, %v5135
    %v5760 = vpack.c.b16 %v5144, %v5136
    %v5761 = vpack.c.b16 %v5145, %v5137
    %v5762 = vpack.c.b16 %v5146, %v5138
    %v5763 = vpack.c.b16 %v5147, %v5139
    %v5764 = vpack.c.b16 %v5148, %v5140
    %v5765 = vpack.c.b16 %v5157, %v5149
    %v5766 = vpack.c.b16 %v5158, %v5150
    %v5767 = vpack.c.b16 %v5159, %v5151
    %v5768 = vpack.c.b16 %v5160, %v5152
    %v5769 = vpack.c.b16 %v5161, %v5153
    %v5770 = vpack.c.b16 %v5162, %v5154
    %v5771 = vpack.c.b16 %v5163, %v5155
    %v5772 = vpack.c.b16 %v5164, %v5156
    %v5773 = vpack.c.b16 %v5173, %v5165
    %v5774 = vpack.c.b16 %v5174, %v5166
    %v5775 = vpack.c.b16 %v5175, %v5167
    %v5776 = vpack.c.b16 %v5176, %v5168
    %v5777 = vpack.c.b16 %v5177, %v5169
    %v5778 = vpack.c.b16 %v5178, %v5170
    %v5779 = vpack.c.b16 %v5179, %v5171
    %v5780 = vpack.c.b16 %v5180, %v5172
    %v5781 = vpack.c.b16 %v5189, %v5181
    %v5782 = vpack.c.b16 %v5190, %v5182
    %v5783 = vpack.c.b16 %v5191, %v5183
    %v5784 = vpack.c.b16 %v5192, %v5184
    %v5785 = vpack.c.b16 %v5193, %v5185
    %v5786 = vpack.c.b16 %v5194, %v5186
    %v5787 = vpack.c.b16 %v5195, %v5187
    %v5788 = vpack.c.b16 %v5196, %v5188
    %v5789 = vpack.c.b16 %v5205, %v5197
    %v5790 = vpack.c.b16 %v5206, %v5198
    %v5791 = vpack.c.b16 %v5207, %v5199
    %v5792 = vpack.c.b16 %v5208, %v5200
    %v5793 = vpack.c.b16 %v5209, %v5201
    %v5794 = vpack.c.b16 %v5210, %v5202
    %v5795 = vpack.c.b16 %v5211, %v5203
    %v5796 = vpack.c.b16 %v5212, %v5204
    %v5797 = vpack.c.b16 %v5221, %v5213
    %v5798 = vpack.c.b16 %v5222, %v5214
    %v5799 = vpack.c.b16 %v5223, %v5215
    %v5800 = vpack.c.b16 %v5224, %v5216
    %v5801 = vpack.c.b16 %v5225, %v5217
    %v5802 = vpack.c.b16 %v5226, %v5218
    %v5803 = vpack.c.b16 %v5227, %v5219
    %v5804 = vpack.c.b16 %v5228, %v5220
    %v5805 = vpack.c.b16 %v5237, %v5229
    %v5806 = vpack.c.b16 %v5238, %v5230
    %v5807 = vpack.c.b16 %v5239, %v5231
    %v5808 = vpack.c.b16 %v5240, %v5232
    %v5809 = vpack.c.b16 %v5241, %v5233
    %v5810 = vpack.c.b16 %v5242, %v5234
    %v5811 = vpack.c.b16 %v5243, %v5235
    %v5812 = vpack.c.b16 %v5244, %v5236
    %v5813 = vpack.c.b16 %v5253, %v5245
    %v5814 = vpack.c.b16 %v5254, %v5246
    %v5815 = vpack.c.b16 %v5255, %v5247
    %v5816 = vpack.c.b16 %v5256, %v5248
    %v5817 = vpack.c.b16 %v5257, %v5249
    %v5818 = vpack.c.b16 %v5258, %v5250
    %v5819 = vpack.c.b16 %v5259, %v5251
    %v5820 = vpack.c.b16 %v5260, %v5252
    %v5821 = vpack.c.b16 %v5269, %v5261
    %v5822 = vpack.c.b16 %v5270, %v5262
    %v5823 = vpack.c.b16 %v5271, %v5263
    %v5824 = vpack.c.b16 %v5272, %v5264
    %v5825 = vpack.c.b16 %v5273, %v5265
    %v5826 = vpack.c.b16 %v5274, %v5266
    %v5827 = vpack.c.b16 %v5275, %v5267
    %v5828 = vpack.c.b16 %v5276, %v5268
    %v5829 = vpack.c.b16 %v5285, %v5277
    %v5830 = vpack.c.b16 %v5286, %v5278
    %v5831 = vpack.c.b16 %v5287, %v5279
    %v5832 = vpack.c.b16 %v5288, %v5280
    %v5833 = vpack.c.b16 %v5289, %v5281
    %v5834 = vpack.c.b16 %v5290, %v5282
    %v5835 = vpack.c.b16 %v5291, %v5283
    %v5836 = vpack.c.b16 %v5292, %v5284
    %v5837 = vpack.c.b16 %v5301, %v5293
    %v5838 = vpack.c.b16 %v5302, %v5294
    %v5839 = vpack.c.b16 %v5303, %v5295
    %v5840 = vpack.c.b16 %v5304, %v5296
    %v5841 = vpack.c.b16 %v5305, %v5297
    %v5842 = vpack.c.b16 %v5306, %v5298
    %v5843 = vpack.c.b16 %v5307, %v5299
    %v5844 = vpack.c.b16 %v5308, %v5300
    %v5845 = vpack.c.b16 %v5317, %v5309
    %v5846 = vpack.c.b16 %v5318, %v5310
    %v5847 = vpack.c.b16 %v5319, %v5311
    %v5848 = vpack.c.b16 %v5320, %v5312
    %v5849 = vpack.c.b16 %v5321, %v5313
    %v5850 = vpack.c.b16 %v5322, %v5314
    %v5851 = vpack.c.b16 %v5323, %v5315
    %v5852 = vpack.c.b16 %v5324, %v5316
    %v5853 = vpack.c.b16 %v5333, %v5325
    %v5854 = vpack.c.b16 %v5334, %v5326
    %v5855 = vpack.c.b16 %v5335, %v5327
    %v5856 = vpack.c.b16 %v5336, %v5328
    %v5857 = vpack.c.b16 %v5337, %v5329
    %v5858 = vpack.c.b16 %v5338, %v5330
    %v5859 = vpack.c.b16 %v5339, %v5331
    %v5860 = vpack.c.b16 %v5340, %v5332
    %v5861 = vpack.c.b16 %v5349, %v5341
    %v5862 = vpack.c.b16 %v5350, %v5342
    %v5863 = vpack.c.b16 %v5351, %v5343
    %v5864 = vpack.c.b16 %v5352, %v5344
    %v5865 = vpack.c.b16 %v5353, %v5345
    %v5866 = vpack.c.b16 %v5354, %v5346
    %v5867 = vpack.c.b16 %v5355, %v5347
    %v5868 = vpack.c.b16 %v5356, %v5348
    %6381 = vmatprep.subr.bf16.mxu0 %v5414
    %6382 = vmatpush1.bf16.msra.mxu0 %v5413
    %6383 = vmatprep.subr.bf16.mxu0 %v5406
    %6384 = vmatpush1.bf16.msra.mxu0 %v5405
    %6385 = vmatprep.subr.bf16.mxu0 %v5398
    %6386 = vmatpush1.bf16.msra.mxu0 %v5397
    %6387 = vmatprep.subr.bf16.mxu0 %v5390
    %6388 = vmatpush1.bf16.msra.mxu0 %v5389
    %6389 = vmatprep.subr.bf16.mxu0 %v5382
    %6390 = vmatpush1.bf16.msra.mxu0 %v5381
    %6391 = vmatprep.subr.bf16.mxu0 %v5374
    %6392 = vmatpush1.bf16.msra.mxu0 %v5373
    %6393 = vmatprep.subr.bf16.mxu0 %v5366
    %6394 = vmatpush1.bf16.msra.mxu0 %v5365
    %6395 = vmatprep.subr.bf16.mxu0 %v5358
    %6396 = vmatpush1.bf16.msra.mxu0 %v5357
    %6397 = vmatprep.subr.bf16.mxu0 %v5478
    %6398 = vmatpush2.bf16.msra.mxu0 %v5477
    %6399 = vmatprep.subr.bf16.mxu0 %v5470
    %6400 = vmatpush2.bf16.msra.mxu0 %v5469
    %6401 = vmatprep.subr.bf16.mxu0 %v5462
    %6402 = vmatpush2.bf16.msra.mxu0 %v5461
    %6403 = vmatprep.subr.bf16.mxu0 %v5454
    %6404 = vmatpush2.bf16.msra.mxu0 %v5453
    %6405 = vmatprep.subr.bf16.mxu0 %v5446
    %6406 = vmatpush2.bf16.msra.mxu0 %v5445
    %6407 = vmatprep.subr.bf16.mxu0 %v5438
    %6408 = vmatpush2.bf16.msra.mxu0 %v5437
    %6409 = vmatprep.subr.bf16.mxu0 %v5430
    %6410 = vmatpush2.bf16.msra.mxu0 %v5429
    %6411 = vmatprep.subr.bf16.mxu0 %v5422
    %6412 = vmatpush2.bf16.msra.mxu0 %v5421
    %6413 = vmatprep.mubr.bf16.mxu0 %v3260
    %6414 = vmatmul.mubr.bf16.gmra.mxu0 %v3259
    %v6415 = vpop.f32.mrf.mxu0
    %v6416 = vadd.f32 %v3784, %v6415
    %v6417 = vpop.f32.mrf.mxu0
    %v6418 = vadd.f32 %v3788, %v6417
    %v6419 = vpop.f32.mrf.mxu0
    %v6420 = vpop.f32.mrf.mxu0
    %6421 = vdwg.mxu0
    %6422 = vmatprep.subr.bf16.mxu0 %v5542
    %6423 = vmatpush1.bf16.msra.mxu0 %v5541
    %6424 = vmatprep.subr.bf16.mxu0 %v5534
    %6425 = vmatpush1.bf16.msra.mxu0 %v5533
    %6426 = vmatprep.subr.bf16.mxu0 %v5526
    %6427 = vmatpush1.bf16.msra.mxu0 %v5525
    %6428 = vmatprep.subr.bf16.mxu0 %v5518
    %6429 = vmatpush1.bf16.msra.mxu0 %v5517
    %6430 = vmatprep.subr.bf16.mxu0 %v5510
    %6431 = vmatpush1.bf16.msra.mxu0 %v5509
    %6432 = vmatprep.subr.bf16.mxu0 %v5502
    %6433 = vmatpush1.bf16.msra.mxu0 %v5501
    %6434 = vmatprep.subr.bf16.mxu0 %v5494
    %6435 = vmatpush1.bf16.msra.mxu0 %v5493
    %6436 = vmatprep.subr.bf16.mxu0 %v5486
    %6437 = vmatpush1.bf16.msra.mxu0 %v5485
    %6438 = vmatprep.subr.bf16.mxu0 %v5606
    %6439 = vmatpush2.bf16.msra.mxu0 %v5605
    %6440 = vmatprep.subr.bf16.mxu0 %v5598
    %6441 = vmatpush2.bf16.msra.mxu0 %v5597
    %6442 = vmatprep.subr.bf16.mxu0 %v5590
    %6443 = vmatpush2.bf16.msra.mxu0 %v5589
    %6444 = vmatprep.subr.bf16.mxu0 %v5582
    %6445 = vmatpush2.bf16.msra.mxu0 %v5581
    %6446 = vmatprep.subr.bf16.mxu0 %v5574
    %6447 = vmatpush2.bf16.msra.mxu0 %v5573
    %6448 = vmatprep.subr.bf16.mxu0 %v5566
    %6449 = vmatpush2.bf16.msra.mxu0 %v5565
    %6450 = vmatprep.subr.bf16.mxu0 %v5558
    %6451 = vmatpush2.bf16.msra.mxu0 %v5557
    %6452 = vmatprep.subr.bf16.mxu0 %v5550
    %6453 = vmatpush2.bf16.msra.mxu0 %v5549
    %6454 = vmatprep.mubr.bf16.mxu0 %v3262
    %6455 = vmatmul.mubr.bf16.gmra.mxu0 %v3261
    %v6456 = vpop.f32.mrf.mxu0
    %v6457 = vadd.f32 %v6416, %v6456
    %v6458 = vpop.f32.mrf.mxu0
    %v6459 = vadd.f32 %v6418, %v6458
    %v6460 = vpop.f32.mrf.mxu0
    %v6461 = vpop.f32.mrf.mxu0
    %6462 = vdwg.mxu0
    %6463 = vmatprep.subr.bf16.mxu0 %v5670
    %6464 = vmatpush1.bf16.msra.mxu0 %v5669
    %6465 = vmatprep.subr.bf16.mxu0 %v5662
    %6466 = vmatpush1.bf16.msra.mxu0 %v5661
    %6467 = vmatprep.subr.bf16.mxu0 %v5654
    %6468 = vmatpush1.bf16.msra.mxu0 %v5653
    %6469 = vmatprep.subr.bf16.mxu0 %v5646
    %6470 = vmatpush1.bf16.msra.mxu0 %v5645
    %6471 = vmatprep.subr.bf16.mxu0 %v5638
    %6472 = vmatpush1.bf16.msra.mxu0 %v5637
    %6473 = vmatprep.subr.bf16.mxu0 %v5630
    %6474 = vmatpush1.bf16.msra.mxu0 %v5629
    %6475 = vmatprep.subr.bf16.mxu0 %v5622
    %6476 = vmatpush1.bf16.msra.mxu0 %v5621
    %6477 = vmatprep.subr.bf16.mxu0 %v5614
    %6478 = vmatpush1.bf16.msra.mxu0 %v5613
    %6479 = vmatprep.subr.bf16.mxu0 %v5734
    %6480 = vmatpush2.bf16.msra.mxu0 %v5733
    %6481 = vmatprep.subr.bf16.mxu0 %v5726
    %6482 = vmatpush2.bf16.msra.mxu0 %v5725
    %6483 = vmatprep.subr.bf16.mxu0 %v5718
    %6484 = vmatpush2.bf16.msra.mxu0 %v5717
    %6485 = vmatprep.subr.bf16.mxu0 %v5710
    %6486 = vmatpush2.bf16.msra.mxu0 %v5709
    %6487 = vmatprep.subr.bf16.mxu0 %v5702
    %6488 = vmatpush2.bf16.msra.mxu0 %v5701
    %6489 = vmatprep.subr.bf16.mxu0 %v5694
    %6490 = vmatpush2.bf16.msra.mxu0 %v5693
    %6491 = vmatprep.subr.bf16.mxu0 %v5686
    %6492 = vmatpush2.bf16.msra.mxu0 %v5685
    %6493 = vmatprep.subr.bf16.mxu0 %v5678
    %6494 = vmatpush2.bf16.msra.mxu0 %v5677
    %6495 = vmatprep.mubr.bf16.mxu0 %v3264
    %6496 = vmatmul.mubr.bf16.gmra.mxu0 %v3263
    %v6497 = vpop.f32.mrf.mxu0
    %v6498 = vadd.f32 %v6457, %v6497
    %v6499 = vpop.f32.mrf.mxu0
    %v6500 = vadd.f32 %v6459, %v6499
    %v6501 = vpop.f32.mrf.mxu0
    %v6502 = vpop.f32.mrf.mxu0
    %6503 = vdwg.mxu0
    %6504 = vmatprep.subr.bf16.mxu0 %v5798
    %6505 = vmatpush1.bf16.msra.mxu0 %v5797
    %6506 = vmatprep.subr.bf16.mxu0 %v5790
    %6507 = vmatpush1.bf16.msra.mxu0 %v5789
    %6508 = vmatprep.subr.bf16.mxu0 %v5782
    %6509 = vmatpush1.bf16.msra.mxu0 %v5781
    %6510 = vmatprep.subr.bf16.mxu0 %v5774
    %6511 = vmatpush1.bf16.msra.mxu0 %v5773
    %6512 = vmatprep.subr.bf16.mxu0 %v5766
    %6513 = vmatpush1.bf16.msra.mxu0 %v5765
    %6514 = vmatprep.subr.bf16.mxu0 %v5758
    %6515 = vmatpush1.bf16.msra.mxu0 %v5757
    %6516 = vmatprep.subr.bf16.mxu0 %v5750
    %6517 = vmatpush1.bf16.msra.mxu0 %v5749
    %6518 = vmatprep.subr.bf16.mxu0 %v5742
    %6519 = vmatpush1.bf16.msra.mxu0 %v5741
    %6520 = vmatprep.subr.bf16.mxu0 %v5862
    %6521 = vmatpush2.bf16.msra.mxu0 %v5861
    %6522 = vmatprep.subr.bf16.mxu0 %v5854
    %6523 = vmatpush2.bf16.msra.mxu0 %v5853
    %6524 = vmatprep.subr.bf16.mxu0 %v5846
    %6525 = vmatpush2.bf16.msra.mxu0 %v5845
    %6526 = vmatprep.subr.bf16.mxu0 %v5838
    %6527 = vmatpush2.bf16.msra.mxu0 %v5837
    %6528 = vmatprep.subr.bf16.mxu0 %v5830
    %6529 = vmatpush2.bf16.msra.mxu0 %v5829
    %6530 = vmatprep.subr.bf16.mxu0 %v5822
    %6531 = vmatpush2.bf16.msra.mxu0 %v5821
    %6532 = vmatprep.subr.bf16.mxu0 %v5814
    %6533 = vmatpush2.bf16.msra.mxu0 %v5813
    %6534 = vmatprep.subr.bf16.mxu0 %v5806
    %6535 = vmatpush2.bf16.msra.mxu0 %v5805
    %6536 = vmatprep.mubr.bf16.mxu0 %v3266
    %6537 = vmatmul.mubr.bf16.gmra.mxu0 %v3265
    %v6538 = vpop.f32.mrf.mxu0
    %v6539 = vadd.f32 %v6498, %v6538
    %v6540 = vpop.f32.mrf.mxu0
    %v6541 = vadd.f32 %v6500, %v6540
    %v6542 = vpop.f32.mrf.mxu0
    %v6543 = vpop.f32.mrf.mxu0
    %6544 = vdwg.mxu0
    %6545 = vmatprep.subr.bf16.mxu0 %v5416
    %6546 = vmatpush1.bf16.msra.mxu0 %v5415
    %6547 = vmatprep.subr.bf16.mxu0 %v5408
    %6548 = vmatpush1.bf16.msra.mxu0 %v5407
    %6549 = vmatprep.subr.bf16.mxu0 %v5400
    %6550 = vmatpush1.bf16.msra.mxu0 %v5399
    %6551 = vmatprep.subr.bf16.mxu0 %v5392
    %6552 = vmatpush1.bf16.msra.mxu0 %v5391
    %6553 = vmatprep.subr.bf16.mxu0 %v5384
    %6554 = vmatpush1.bf16.msra.mxu0 %v5383
    %6555 = vmatprep.subr.bf16.mxu0 %v5376
    %6556 = vmatpush1.bf16.msra.mxu0 %v5375
    %6557 = vmatprep.subr.bf16.mxu0 %v5368
    %6558 = vmatpush1.bf16.msra.mxu0 %v5367
    %6559 = vmatprep.subr.bf16.mxu0 %v5360
    %6560 = vmatpush1.bf16.msra.mxu0 %v5359
    %6561 = vmatprep.subr.bf16.mxu0 %v5480
    %6562 = vmatpush2.bf16.msra.mxu0 %v5479
    %6563 = vmatprep.subr.bf16.mxu0 %v5472
    %6564 = vmatpush2.bf16.msra.mxu0 %v5471
    %6565 = vmatprep.subr.bf16.mxu0 %v5464
    %6566 = vmatpush2.bf16.msra.mxu0 %v5463
    %6567 = vmatprep.subr.bf16.mxu0 %v5456
    %6568 = vmatpush2.bf16.msra.mxu0 %v5455
    %6569 = vmatprep.subr.bf16.mxu0 %v5448
    %6570 = vmatpush2.bf16.msra.mxu0 %v5447
    %6571 = vmatprep.subr.bf16.mxu0 %v5440
    %6572 = vmatpush2.bf16.msra.mxu0 %v5439
    %6573 = vmatprep.subr.bf16.mxu0 %v5432
    %6574 = vmatpush2.bf16.msra.mxu0 %v5431
    %6575 = vmatprep.subr.bf16.mxu0 %v5424
    %6576 = vmatpush2.bf16.msra.mxu0 %v5423
    %6577 = vmatprep.mubr.bf16.mxu0 %v3260
    %6578 = vmatmul.mubr.bf16.gmra.mxu0 %v3259
    %v6579 = vpop.f32.mrf.mxu0
    %v6580 = vadd.f32 %v3792, %v6579
    %v6581 = vpop.f32.mrf.mxu0
    %v6582 = vadd.f32 %v3796, %v6581
    %v6583 = vpop.f32.mrf.mxu0
    %v6584 = vpop.f32.mrf.mxu0
    %6585 = vdwg.mxu0
    %6586 = vmatprep.subr.bf16.mxu0 %v5544
    %6587 = vmatpush1.bf16.msra.mxu0 %v5543
    %6588 = vmatprep.subr.bf16.mxu0 %v5536
    %6589 = vmatpush1.bf16.msra.mxu0 %v5535
    %6590 = vmatprep.subr.bf16.mxu0 %v5528
    %6591 = vmatpush1.bf16.msra.mxu0 %v5527
    %6592 = vmatprep.subr.bf16.mxu0 %v5520
    %6593 = vmatpush1.bf16.msra.mxu0 %v5519
    %6594 = vmatprep.subr.bf16.mxu0 %v5512
    %6595 = vmatpush1.bf16.msra.mxu0 %v5511
    %6596 = vmatprep.subr.bf16.mxu0 %v5504
    %6597 = vmatpush1.bf16.msra.mxu0 %v5503
    %6598 = vmatprep.subr.bf16.mxu0 %v5496
    %6599 = vmatpush1.bf16.msra.mxu0 %v5495
    %6600 = vmatprep.subr.bf16.mxu0 %v5488
    %6601 = vmatpush1.bf16.msra.mxu0 %v5487
    %6602 = vmatprep.subr.bf16.mxu0 %v5608
    %6603 = vmatpush2.bf16.msra.mxu0 %v5607
    %6604 = vmatprep.subr.bf16.mxu0 %v5600
    %6605 = vmatpush2.bf16.msra.mxu0 %v5599
    %6606 = vmatprep.subr.bf16.mxu0 %v5592
    %6607 = vmatpush2.bf16.msra.mxu0 %v5591
    %6608 = vmatprep.subr.bf16.mxu0 %v5584
    %6609 = vmatpush2.bf16.msra.mxu0 %v5583
    %6610 = vmatprep.subr.bf16.mxu0 %v5576
    %6611 = vmatpush2.bf16.msra.mxu0 %v5575
    %6612 = vmatprep.subr.bf16.mxu0 %v5568
    %6613 = vmatpush2.bf16.msra.mxu0 %v5567
    %6614 = vmatprep.subr.bf16.mxu0 %v5560
    %6615 = vmatpush2.bf16.msra.mxu0 %v5559
    %6616 = vmatprep.subr.bf16.mxu0 %v5552
    %6617 = vmatpush2.bf16.msra.mxu0 %v5551
    %6618 = vmatprep.mubr.bf16.mxu0 %v3262
    %6619 = vmatmul.mubr.bf16.gmra.mxu0 %v3261
    %v6620 = vpop.f32.mrf.mxu0
    %v6621 = vadd.f32 %v6580, %v6620
    %v6622 = vpop.f32.mrf.mxu0
    %v6623 = vadd.f32 %v6582, %v6622
    %v6624 = vpop.f32.mrf.mxu0
    %v6625 = vpop.f32.mrf.mxu0
    %6626 = vdwg.mxu0
    %6627 = vmatprep.subr.bf16.mxu0 %v5672
    %6628 = vmatpush1.bf16.msra.mxu0 %v5671
    %6629 = vmatprep.subr.bf16.mxu0 %v5664
    %6630 = vmatpush1.bf16.msra.mxu0 %v5663
    %6631 = vmatprep.subr.bf16.mxu0 %v5656
    %6632 = vmatpush1.bf16.msra.mxu0 %v5655
    %6633 = vmatprep.subr.bf16.mxu0 %v5648
    %6634 = vmatpush1.bf16.msra.mxu0 %v5647
    %6635 = vmatprep.subr.bf16.mxu0 %v5640
    %6636 = vmatpush1.bf16.msra.mxu0 %v5639
    %6637 = vmatprep.subr.bf16.mxu0 %v5632
    %6638 = vmatpush1.bf16.msra.mxu0 %v5631
    %6639 = vmatprep.subr.bf16.mxu0 %v5624
    %6640 = vmatpush1.bf16.msra.mxu0 %v5623
    %6641 = vmatprep.subr.bf16.mxu0 %v5616
    %6642 = vmatpush1.bf16.msra.mxu0 %v5615
    %6643 = vmatprep.subr.bf16.mxu0 %v5736
    %6644 = vmatpush2.bf16.msra.mxu0 %v5735
    %6645 = vmatprep.subr.bf16.mxu0 %v5728
    %6646 = vmatpush2.bf16.msra.mxu0 %v5727
    %6647 = vmatprep.subr.bf16.mxu0 %v5720
    %6648 = vmatpush2.bf16.msra.mxu0 %v5719
    %6649 = vmatprep.subr.bf16.mxu0 %v5712
    %6650 = vmatpush2.bf16.msra.mxu0 %v5711
    %6651 = vmatprep.subr.bf16.mxu0 %v5704
    %6652 = vmatpush2.bf16.msra.mxu0 %v5703
    %6653 = vmatprep.subr.bf16.mxu0 %v5696
    %6654 = vmatpush2.bf16.msra.mxu0 %v5695
    %6655 = vmatprep.subr.bf16.mxu0 %v5688
    %6656 = vmatpush2.bf16.msra.mxu0 %v5687
    %6657 = vmatprep.subr.bf16.mxu0 %v5680
    %6658 = vmatpush2.bf16.msra.mxu0 %v5679
    %6659 = vmatprep.mubr.bf16.mxu0 %v3264
    %6660 = vmatmul.mubr.bf16.gmra.mxu0 %v3263
    %v6661 = vpop.f32.mrf.mxu0
    %v6662 = vadd.f32 %v6621, %v6661
    %v6663 = vpop.f32.mrf.mxu0
    %v6664 = vadd.f32 %v6623, %v6663
    %v6665 = vpop.f32.mrf.mxu0
    %v6666 = vpop.f32.mrf.mxu0
    %6667 = vdwg.mxu0
    %6668 = vmatprep.subr.bf16.mxu0 %v5800
    %6669 = vmatpush1.bf16.msra.mxu0 %v5799
    %6670 = vmatprep.subr.bf16.mxu0 %v5792
    %6671 = vmatpush1.bf16.msra.mxu0 %v5791
    %6672 = vmatprep.subr.bf16.mxu0 %v5784
    %6673 = vmatpush1.bf16.msra.mxu0 %v5783
    %6674 = vmatprep.subr.bf16.mxu0 %v5776
    %6675 = vmatpush1.bf16.msra.mxu0 %v5775
    %6676 = vmatprep.subr.bf16.mxu0 %v5768
    %6677 = vmatpush1.bf16.msra.mxu0 %v5767
    %6678 = vmatprep.subr.bf16.mxu0 %v5760
    %6679 = vmatpush1.bf16.msra.mxu0 %v5759
    %6680 = vmatprep.subr.bf16.mxu0 %v5752
    %6681 = vmatpush1.bf16.msra.mxu0 %v5751
    %6682 = vmatprep.subr.bf16.mxu0 %v5744
    %6683 = vmatpush1.bf16.msra.mxu0 %v5743
    %6684 = vmatprep.subr.bf16.mxu0 %v5864
    %6685 = vmatpush2.bf16.msra.mxu0 %v5863
    %6686 = vmatprep.subr.bf16.mxu0 %v5856
    %6687 = vmatpush2.bf16.msra.mxu0 %v5855
    %6688 = vmatprep.subr.bf16.mxu0 %v5848
    %6689 = vmatpush2.bf16.msra.mxu0 %v5847
    %6690 = vmatprep.subr.bf16.mxu0 %v5840
    %6691 = vmatpush2.bf16.msra.mxu0 %v5839
    %6692 = vmatprep.subr.bf16.mxu0 %v5832
    %6693 = vmatpush2.bf16.msra.mxu0 %v5831
    %6694 = vmatprep.subr.bf16.mxu0 %v5824
    %6695 = vmatpush2.bf16.msra.mxu0 %v5823
    %6696 = vmatprep.subr.bf16.mxu0 %v5816
    %6697 = vmatpush2.bf16.msra.mxu0 %v5815
    %6698 = vmatprep.subr.bf16.mxu0 %v5808
    %6699 = vmatpush2.bf16.msra.mxu0 %v5807
    %6700 = vmatprep.mubr.bf16.mxu0 %v3266
    %6701 = vmatmul.mubr.bf16.gmra.mxu0 %v3265
    %v6702 = vpop.f32.mrf.mxu0
    %v6703 = vadd.f32 %v6662, %v6702
    %v6704 = vpop.f32.mrf.mxu0
    %v6705 = vadd.f32 %v6664, %v6704
    %v6706 = vpop.f32.mrf.mxu0
    %v6707 = vpop.f32.mrf.mxu0
    %6708 = vdwg.mxu0
    %6709 = vmatprep.subr.bf16.mxu0 %v5418
    %6710 = vmatpush1.bf16.msra.mxu0 %v5417
    %6711 = vmatprep.subr.bf16.mxu0 %v5410
    %6712 = vmatpush1.bf16.msra.mxu0 %v5409
    %6713 = vmatprep.subr.bf16.mxu0 %v5402
    %6714 = vmatpush1.bf16.msra.mxu0 %v5401
    %6715 = vmatprep.subr.bf16.mxu0 %v5394
    %6716 = vmatpush1.bf16.msra.mxu0 %v5393
    %6717 = vmatprep.subr.bf16.mxu0 %v5386
    %6718 = vmatpush1.bf16.msra.mxu0 %v5385
    %6719 = vmatprep.subr.bf16.mxu0 %v5378
    %6720 = vmatpush1.bf16.msra.mxu0 %v5377
    %6721 = vmatprep.subr.bf16.mxu0 %v5370
    %6722 = vmatpush1.bf16.msra.mxu0 %v5369
    %6723 = vmatprep.subr.bf16.mxu0 %v5362
    %6724 = vmatpush1.bf16.msra.mxu0 %v5361
    %6725 = vmatprep.subr.bf16.mxu0 %v5482
    %6726 = vmatpush2.bf16.msra.mxu0 %v5481
    %6727 = vmatprep.subr.bf16.mxu0 %v5474
    %6728 = vmatpush2.bf16.msra.mxu0 %v5473
    %6729 = vmatprep.subr.bf16.mxu0 %v5466
    %6730 = vmatpush2.bf16.msra.mxu0 %v5465
    %6731 = vmatprep.subr.bf16.mxu0 %v5458
    %6732 = vmatpush2.bf16.msra.mxu0 %v5457
    %6733 = vmatprep.subr.bf16.mxu0 %v5450
    %6734 = vmatpush2.bf16.msra.mxu0 %v5449
    %6735 = vmatprep.subr.bf16.mxu0 %v5442
    %6736 = vmatpush2.bf16.msra.mxu0 %v5441
    %6737 = vmatprep.subr.bf16.mxu0 %v5434
    %6738 = vmatpush2.bf16.msra.mxu0 %v5433
    %6739 = vmatprep.subr.bf16.mxu0 %v5426
    %6740 = vmatpush2.bf16.msra.mxu0 %v5425
    %6741 = vmatprep.mubr.bf16.mxu0 %v3260
    %6742 = vmatmul.mubr.bf16.gmra.mxu0 %v3259
    %v6743 = vpop.f32.mrf.mxu0
    %v6744 = vadd.f32 %v3800, %v6743
    %v6745 = vpop.f32.mrf.mxu0
    %v6746 = vadd.f32 %v3804, %v6745
    %v6747 = vpop.f32.mrf.mxu0
    %v6748 = vpop.f32.mrf.mxu0
    %6749 = vdwg.mxu0
    %6750 = vmatprep.subr.bf16.mxu0 %v5546
    %6751 = vmatpush1.bf16.msra.mxu0 %v5545
    %6752 = vmatprep.subr.bf16.mxu0 %v5538
    %6753 = vmatpush1.bf16.msra.mxu0 %v5537
    %6754 = vmatprep.subr.bf16.mxu0 %v5530
    %6755 = vmatpush1.bf16.msra.mxu0 %v5529
    %6756 = vmatprep.subr.bf16.mxu0 %v5522
    %6757 = vmatpush1.bf16.msra.mxu0 %v5521
    %6758 = vmatprep.subr.bf16.mxu0 %v5514
    %6759 = vmatpush1.bf16.msra.mxu0 %v5513
    %6760 = vmatprep.subr.bf16.mxu0 %v5506
    %6761 = vmatpush1.bf16.msra.mxu0 %v5505
    %6762 = vmatprep.subr.bf16.mxu0 %v5498
    %6763 = vmatpush1.bf16.msra.mxu0 %v5497
    %6764 = vmatprep.subr.bf16.mxu0 %v5490
    %6765 = vmatpush1.bf16.msra.mxu0 %v5489
    %6766 = vmatprep.subr.bf16.mxu0 %v5610
    %6767 = vmatpush2.bf16.msra.mxu0 %v5609
    %6768 = vmatprep.subr.bf16.mxu0 %v5602
    %6769 = vmatpush2.bf16.msra.mxu0 %v5601
    %6770 = vmatprep.subr.bf16.mxu0 %v5594
    %6771 = vmatpush2.bf16.msra.mxu0 %v5593
    %6772 = vmatprep.subr.bf16.mxu0 %v5586
    %6773 = vmatpush2.bf16.msra.mxu0 %v5585
    %6774 = vmatprep.subr.bf16.mxu0 %v5578
    %6775 = vmatpush2.bf16.msra.mxu0 %v5577
    %6776 = vmatprep.subr.bf16.mxu0 %v5570
    %6777 = vmatpush2.bf16.msra.mxu0 %v5569
    %6778 = vmatprep.subr.bf16.mxu0 %v5562
    %6779 = vmatpush2.bf16.msra.mxu0 %v5561
    %6780 = vmatprep.subr.bf16.mxu0 %v5554
    %6781 = vmatpush2.bf16.msra.mxu0 %v5553
    %6782 = vmatprep.mubr.bf16.mxu0 %v3262
    %6783 = vmatmul.mubr.bf16.gmra.mxu0 %v3261
    %v6784 = vpop.f32.mrf.mxu0
    %v6785 = vadd.f32 %v6744, %v6784
    %v6786 = vpop.f32.mrf.mxu0
    %v6787 = vadd.f32 %v6746, %v6786
    %v6788 = vpop.f32.mrf.mxu0
    %v6789 = vpop.f32.mrf.mxu0
    %6790 = vdwg.mxu0
    %6791 = vmatprep.subr.bf16.mxu0 %v5674
    %6792 = vmatpush1.bf16.msra.mxu0 %v5673
    %6793 = vmatprep.subr.bf16.mxu0 %v5666
    %6794 = vmatpush1.bf16.msra.mxu0 %v5665
    %6795 = vmatprep.subr.bf16.mxu0 %v5658
    %6796 = vmatpush1.bf16.msra.mxu0 %v5657
    %6797 = vmatprep.subr.bf16.mxu0 %v5650
    %6798 = vmatpush1.bf16.msra.mxu0 %v5649
    %6799 = vmatprep.subr.bf16.mxu0 %v5642
    %6800 = vmatpush1.bf16.msra.mxu0 %v5641
    %6801 = vmatprep.subr.bf16.mxu0 %v5634
    %6802 = vmatpush1.bf16.msra.mxu0 %v5633
    %6803 = vmatprep.subr.bf16.mxu0 %v5626
    %6804 = vmatpush1.bf16.msra.mxu0 %v5625
    %6805 = vmatprep.subr.bf16.mxu0 %v5618
    %6806 = vmatpush1.bf16.msra.mxu0 %v5617
    %6807 = vmatprep.subr.bf16.mxu0 %v5738
    %6808 = vmatpush2.bf16.msra.mxu0 %v5737
    %6809 = vmatprep.subr.bf16.mxu0 %v5730
    %6810 = vmatpush2.bf16.msra.mxu0 %v5729
    %6811 = vmatprep.subr.bf16.mxu0 %v5722
    %6812 = vmatpush2.bf16.msra.mxu0 %v5721
    %6813 = vmatprep.subr.bf16.mxu0 %v5714
    %6814 = vmatpush2.bf16.msra.mxu0 %v5713
    %6815 = vmatprep.subr.bf16.mxu0 %v5706
    %6816 = vmatpush2.bf16.msra.mxu0 %v5705
    %6817 = vmatprep.subr.bf16.mxu0 %v5698
    %6818 = vmatpush2.bf16.msra.mxu0 %v5697
    %6819 = vmatprep.subr.bf16.mxu0 %v5690
    %6820 = vmatpush2.bf16.msra.mxu0 %v5689
    %6821 = vmatprep.subr.bf16.mxu0 %v5682
    %6822 = vmatpush2.bf16.msra.mxu0 %v5681
    %6823 = vmatprep.mubr.bf16.mxu0 %v3264
    %6824 = vmatmul.mubr.bf16.gmra.mxu0 %v3263
    %v6825 = vpop.f32.mrf.mxu0
    %v6826 = vadd.f32 %v6785, %v6825
    %v6827 = vpop.f32.mrf.mxu0
    %v6828 = vadd.f32 %v6787, %v6827
    %v6829 = vpop.f32.mrf.mxu0
    %v6830 = vpop.f32.mrf.mxu0
    %6831 = vdwg.mxu0
    %6832 = vmatprep.subr.bf16.mxu0 %v5802
    %6833 = vmatpush1.bf16.msra.mxu0 %v5801
    %6834 = vmatprep.subr.bf16.mxu0 %v5794
    %6835 = vmatpush1.bf16.msra.mxu0 %v5793
    %6836 = vmatprep.subr.bf16.mxu0 %v5786
    %6837 = vmatpush1.bf16.msra.mxu0 %v5785
    %6838 = vmatprep.subr.bf16.mxu0 %v5778
    %6839 = vmatpush1.bf16.msra.mxu0 %v5777
    %6840 = vmatprep.subr.bf16.mxu0 %v5770
    %6841 = vmatpush1.bf16.msra.mxu0 %v5769
    %6842 = vmatprep.subr.bf16.mxu0 %v5762
    %6843 = vmatpush1.bf16.msra.mxu0 %v5761
    %6844 = vmatprep.subr.bf16.mxu0 %v5754
    %6845 = vmatpush1.bf16.msra.mxu0 %v5753
    %6846 = vmatprep.subr.bf16.mxu0 %v5746
    %6847 = vmatpush1.bf16.msra.mxu0 %v5745
    %6848 = vmatprep.subr.bf16.mxu0 %v5866
    %6849 = vmatpush2.bf16.msra.mxu0 %v5865
    %6850 = vmatprep.subr.bf16.mxu0 %v5858
    %6851 = vmatpush2.bf16.msra.mxu0 %v5857
    %6852 = vmatprep.subr.bf16.mxu0 %v5850
    %6853 = vmatpush2.bf16.msra.mxu0 %v5849
    %6854 = vmatprep.subr.bf16.mxu0 %v5842
    %6855 = vmatpush2.bf16.msra.mxu0 %v5841
    %6856 = vmatprep.subr.bf16.mxu0 %v5834
    %6857 = vmatpush2.bf16.msra.mxu0 %v5833
    %6858 = vmatprep.subr.bf16.mxu0 %v5826
    %6859 = vmatpush2.bf16.msra.mxu0 %v5825
    %6860 = vmatprep.subr.bf16.mxu0 %v5818
    %6861 = vmatpush2.bf16.msra.mxu0 %v5817
    %6862 = vmatprep.subr.bf16.mxu0 %v5810
    %6863 = vmatpush2.bf16.msra.mxu0 %v5809
    %6864 = vmatprep.mubr.bf16.mxu0 %v3266
    %6865 = vmatmul.mubr.bf16.gmra.mxu0 %v3265
    %v6866 = vpop.f32.mrf.mxu0
    %v6867 = vadd.f32 %v6826, %v6866
    %v6868 = vpop.f32.mrf.mxu0
    %v6869 = vadd.f32 %v6828, %v6868
    %v6870 = vpop.f32.mrf.mxu0
    %v6871 = vpop.f32.mrf.mxu0
    %6872 = vdwg.mxu0
    %6873 = vmatprep.subr.bf16.mxu0 %v5420
    %6874 = vmatpush1.bf16.msra.mxu0 %v5419
    %6875 = vmatprep.subr.bf16.mxu0 %v5412
    %6876 = vmatpush1.bf16.msra.mxu0 %v5411
    %6877 = vmatprep.subr.bf16.mxu0 %v5404
    %6878 = vmatpush1.bf16.msra.mxu0 %v5403
    %6879 = vmatprep.subr.bf16.mxu0 %v5396
    %6880 = vmatpush1.bf16.msra.mxu0 %v5395
    %6881 = vmatprep.subr.bf16.mxu0 %v5388
    %6882 = vmatpush1.bf16.msra.mxu0 %v5387
    %6883 = vmatprep.subr.bf16.mxu0 %v5380
    %6884 = vmatpush1.bf16.msra.mxu0 %v5379
    %6885 = vmatprep.subr.bf16.mxu0 %v5372
    %6886 = vmatpush1.bf16.msra.mxu0 %v5371
    %6887 = vmatprep.subr.bf16.mxu0 %v5364
    %6888 = vmatpush1.bf16.msra.mxu0 %v5363
    %6889 = vmatprep.subr.bf16.mxu0 %v5484
    %6890 = vmatpush2.bf16.msra.mxu0 %v5483
    %6891 = vmatprep.subr.bf16.mxu0 %v5476
    %6892 = vmatpush2.bf16.msra.mxu0 %v5475
    %6893 = vmatprep.subr.bf16.mxu0 %v5468
    %6894 = vmatpush2.bf16.msra.mxu0 %v5467
    %6895 = vmatprep.subr.bf16.mxu0 %v5460
    %6896 = vmatpush2.bf16.msra.mxu0 %v5459
    %6897 = vmatprep.subr.bf16.mxu0 %v5452
    %6898 = vmatpush2.bf16.msra.mxu0 %v5451
    %6899 = vmatprep.subr.bf16.mxu0 %v5444
    %6900 = vmatpush2.bf16.msra.mxu0 %v5443
    %6901 = vmatprep.subr.bf16.mxu0 %v5436
    %6902 = vmatpush2.bf16.msra.mxu0 %v5435
    %6903 = vmatprep.subr.bf16.mxu0 %v5428
    %6904 = vmatpush2.bf16.msra.mxu0 %v5427
    %6905 = vmatprep.mubr.bf16.mxu0 %v3260
    %6906 = vmatmul.mubr.bf16.gmra.mxu0 %v3259
    %v6907 = vpop.f32.mrf.mxu0
    %v6908 = vadd.f32 %v3808, %v6907
    %v6909 = vpop.f32.mrf.mxu0
    %v6910 = vadd.f32 %v3812, %v6909
    %v6911 = vpop.f32.mrf.mxu0
    %v6912 = vpop.f32.mrf.mxu0
    %6913 = vdwg.mxu0
    %6914 = vmatprep.subr.bf16.mxu0 %v5548
    %6915 = vmatpush1.bf16.msra.mxu0 %v5547
    %6916 = vmatprep.subr.bf16.mxu0 %v5540
    %6917 = vmatpush1.bf16.msra.mxu0 %v5539
    %6918 = vmatprep.subr.bf16.mxu0 %v5532
    %6919 = vmatpush1.bf16.msra.mxu0 %v5531
    %6920 = vmatprep.subr.bf16.mxu0 %v5524
    %6921 = vmatpush1.bf16.msra.mxu0 %v5523
    %6922 = vmatprep.subr.bf16.mxu0 %v5516
    %6923 = vmatpush1.bf16.msra.mxu0 %v5515
    %6924 = vmatprep.subr.bf16.mxu0 %v5508
    %6925 = vmatpush1.bf16.msra.mxu0 %v5507
    %6926 = vmatprep.subr.bf16.mxu0 %v5500
    %6927 = vmatpush1.bf16.msra.mxu0 %v5499
    %6928 = vmatprep.subr.bf16.mxu0 %v5492
    %6929 = vmatpush1.bf16.msra.mxu0 %v5491
    %6930 = vmatprep.subr.bf16.mxu0 %v5612
    %6931 = vmatpush2.bf16.msra.mxu0 %v5611
    %6932 = vmatprep.subr.bf16.mxu0 %v5604
    %6933 = vmatpush2.bf16.msra.mxu0 %v5603
    %6934 = vmatprep.subr.bf16.mxu0 %v5596
    %6935 = vmatpush2.bf16.msra.mxu0 %v5595
    %6936 = vmatprep.subr.bf16.mxu0 %v5588
    %6937 = vmatpush2.bf16.msra.mxu0 %v5587
    %6938 = vmatprep.subr.bf16.mxu0 %v5580
    %6939 = vmatpush2.bf16.msra.mxu0 %v5579
    %6940 = vmatprep.subr.bf16.mxu0 %v5572
    %6941 = vmatpush2.bf16.msra.mxu0 %v5571
    %6942 = vmatprep.subr.bf16.mxu0 %v5564
    %6943 = vmatpush2.bf16.msra.mxu0 %v5563
    %6944 = vmatprep.subr.bf16.mxu0 %v5556
    %6945 = vmatpush2.bf16.msra.mxu0 %v5555
    %6946 = vmatprep.mubr.bf16.mxu0 %v3262
    %6947 = vmatmul.mubr.bf16.gmra.mxu0 %v3261
    %v6948 = vpop.f32.mrf.mxu0
    %v6949 = vadd.f32 %v6908, %v6948
    %v6950 = vpop.f32.mrf.mxu0
    %v6951 = vadd.f32 %v6910, %v6950
    %v6952 = vpop.f32.mrf.mxu0
    %v6953 = vpop.f32.mrf.mxu0
    %6954 = vdwg.mxu0
    %6955 = vmatprep.subr.bf16.mxu0 %v5676
    %6956 = vmatpush1.bf16.msra.mxu0 %v5675
    %6957 = vmatprep.subr.bf16.mxu0 %v5668
    %6958 = vmatpush1.bf16.msra.mxu0 %v5667
    %6959 = vmatprep.subr.bf16.mxu0 %v5660
    %6960 = vmatpush1.bf16.msra.mxu0 %v5659
    %6961 = vmatprep.subr.bf16.mxu0 %v5652
    %6962 = vmatpush1.bf16.msra.mxu0 %v5651
    %6963 = vmatprep.subr.bf16.mxu0 %v5644
    %6964 = vmatpush1.bf16.msra.mxu0 %v5643
    %6965 = vmatprep.subr.bf16.mxu0 %v5636
    %6966 = vmatpush1.bf16.msra.mxu0 %v5635
    %6967 = vmatprep.subr.bf16.mxu0 %v5628
    %6968 = vmatpush1.bf16.msra.mxu0 %v5627
    %6969 = vmatprep.subr.bf16.mxu0 %v5620
    %6970 = vmatpush1.bf16.msra.mxu0 %v5619
    %6971 = vmatprep.subr.bf16.mxu0 %v5740
    %6972 = vmatpush2.bf16.msra.mxu0 %v5739
    %6973 = vmatprep.subr.bf16.mxu0 %v5732
    %6974 = vmatpush2.bf16.msra.mxu0 %v5731
    %6975 = vmatprep.subr.bf16.mxu0 %v5724
    %6976 = vmatpush2.bf16.msra.mxu0 %v5723
    %6977 = vmatprep.subr.bf16.mxu0 %v5716
    %6978 = vmatpush2.bf16.msra.mxu0 %v5715
    %6979 = vmatprep.subr.bf16.mxu0 %v5708
    %6980 = vmatpush2.bf16.msra.mxu0 %v5707
    %6981 = vmatprep.subr.bf16.mxu0 %v5700
    %6982 = vmatpush2.bf16.msra.mxu0 %v5699
    %6983 = vmatprep.subr.bf16.mxu0 %v5692
    %6984 = vmatpush2.bf16.msra.mxu0 %v5691
    %6985 = vmatprep.subr.bf16.mxu0 %v5684
    %6986 = vmatpush2.bf16.msra.mxu0 %v5683
    %6987 = vmatprep.mubr.bf16.mxu0 %v3264
    %6988 = vmatmul.mubr.bf16.gmra.mxu0 %v3263
    %v6989 = vpop.f32.mrf.mxu0
    %v6990 = vadd.f32 %v6949, %v6989
    %v6991 = vpop.f32.mrf.mxu0
    %v6992 = vadd.f32 %v6951, %v6991
    %v6993 = vpop.f32.mrf.mxu0
    %v6994 = vpop.f32.mrf.mxu0
    %6995 = vdwg.mxu0
    %6996 = vmatprep.subr.bf16.mxu0 %v5804
    %6997 = vmatpush1.bf16.msra.mxu0 %v5803
    %6998 = vmatprep.subr.bf16.mxu0 %v5796
    %6999 = vmatpush1.bf16.msra.mxu0 %v5795
    %7000 = vmatprep.subr.bf16.mxu0 %v5788
    %7001 = vmatpush1.bf16.msra.mxu0 %v5787
    %7002 = vmatprep.subr.bf16.mxu0 %v5780
    %7003 = vmatpush1.bf16.msra.mxu0 %v5779
    %7004 = vmatprep.subr.bf16.mxu0 %v5772
    %7005 = vmatpush1.bf16.msra.mxu0 %v5771
    %7006 = vmatprep.subr.bf16.mxu0 %v5764
    %7007 = vmatpush1.bf16.msra.mxu0 %v5763
    %7008 = vmatprep.subr.bf16.mxu0 %v5756
    %7009 = vmatpush1.bf16.msra.mxu0 %v5755
    %7010 = vmatprep.subr.bf16.mxu0 %v5748
    %7011 = vmatpush1.bf16.msra.mxu0 %v5747
    %7012 = vmatprep.subr.bf16.mxu0 %v5868
    %7013 = vmatpush2.bf16.msra.mxu0 %v5867
    %7014 = vmatprep.subr.bf16.mxu0 %v5860
    %7015 = vmatpush2.bf16.msra.mxu0 %v5859
    %7016 = vmatprep.subr.bf16.mxu0 %v5852
    %7017 = vmatpush2.bf16.msra.mxu0 %v5851
    %7018 = vmatprep.subr.bf16.mxu0 %v5844
    %7019 = vmatpush2.bf16.msra.mxu0 %v5843
    %7020 = vmatprep.subr.bf16.mxu0 %v5836
    %7021 = vmatpush2.bf16.msra.mxu0 %v5835
    %7022 = vmatprep.subr.bf16.mxu0 %v5828
    %7023 = vmatpush2.bf16.msra.mxu0 %v5827
    %7024 = vmatprep.subr.bf16.mxu0 %v5820
    %7025 = vmatpush2.bf16.msra.mxu0 %v5819
    %7026 = vmatprep.subr.bf16.mxu0 %v5812
    %7027 = vmatpush2.bf16.msra.mxu0 %v5811
    %7028 = vmatprep.mubr.bf16.mxu0 %v3266
    %7029 = vmatmul.mubr.bf16.gmra.mxu0 %v3265
    %v7030 = vpop.f32.mrf.mxu0
    %v7031 = vadd.f32 %v6990, %v7030
    %v7032 = vpop.f32.mrf.mxu0
    %v7033 = vadd.f32 %v6992, %v7032
    %v7034 = vpop.f32.mrf.mxu0
    %v7035 = vpop.f32.mrf.mxu0
    %7036 = vdwg.mxu0
    %v7037 = vtanh.pop %v6539
    %v7038 = vtanh.pop %v6541
    %v7039 = vtanh.pop %v6703
    %v7040 = vtanh.pop %v6705
    %v7041 = vtanh.pop %v6867
    %v7042 = vtanh.pop %v6869
    %v7043 = vtanh.pop %v7031
    %v7044 = vtanh.pop %v7033
    %v7053 = vcombine.low %v7037, %v7038
    %v7054 = vcombine.low %v7039, %v7040
    %v7056 = vunpack.c.l.s4 1983009808
    %v7057 = vunpack.c.0.s8 %v7056
    %v7058 = vlaneseq
    %v7059 = vshrl.u32 %v7058, 7
    %v7060 = vsub.s32 %v7057, %v7059
    %v7061 = vrot.slane %v7053, %v7060
    %v7063 = vunpack.c.l.s4 1983009808
    %v7064 = vunpack.c.0.s8 %v7063
    %v7065 = vlaneseq
    %v7066 = vshrl.u32 %v7065, 7
    %v7067 = vsub.s32 %v7064, %v7066
    %v7068 = vrot.slane %v7054, %v7067
    %v7069 = vcombine.low %v7061, %v7068
    %v7070 = vcombine.low %v7041, %v7042
    %v7071 = vcombine.low %v7043, %v7044
    %v7073 = vunpack.c.l.s4 1983009808
    %v7074 = vunpack.c.0.s8 %v7073
    %v7075 = vlaneseq
    %v7076 = vshrl.u32 %v7075, 7
    %v7077 = vsub.s32 %v7074, %v7076
    %v7078 = vrot.slane %v7070, %v7077
    %v7080 = vunpack.c.l.s4 1983009808
    %v7081 = vunpack.c.0.s8 %v7080
    %v7082 = vlaneseq
    %v7083 = vshrl.u32 %v7082, 7
    %v7084 = vsub.s32 %v7081, %v7083
    %v7085 = vrot.slane %v7071, %v7084
    %v7086 = vcombine.low %v7078, %v7085
    %7089 = vst [vmem:[#allocation14] sm:$0xff] %v7069
    %7090 = vst [vmem:[#allocation14 + $0x8] sm:$0xff] %v7086
    // Predicated region
    $region58: #{tpu_custom_call.1} parent=1 // pred_check
      _
    $region59: #{tpu_custom_call.1} parent=1 // pred_check_branch
      %7092 = sbr.rel (0) target = $region61
    $region60: #{tpu_custom_call.1} parent=1 // pred_region
      %s7094 = ssub.s32 256, 256
      %7095 = vsyncadd [#allocation4], %s7094
      %s7097 = sshll.u32 [#allocation14], 4
      %s7098 = int_to_ptr.vmem [resolvable:$true] %s7097
      %7100 = dma.vmem_to_hbm [thread:$0]  %s7098, 256, %s7, [#allocation4]
    $region61: #{tpu_custom_call.1} parent=1 // pred_fallthru
      _
    // Predicated region
    $region62: #{tpu_custom_call.1} parent=1 // pred_check
      _
    $region63: #{tpu_custom_call.1} parent=1 // pred_check_branch
      %7102 = sbr.rel (0) target = $region65
    $region64: #{tpu_custom_call.1} parent=1 // pred_region
      %7103 = dma.done [#allocation4], 256
    $region65: #{tpu_custom_call.1} parent=1 // pred_fallthru
      _
    %7104 = vsyncpa [#allocation3], 1
    %7105 = vsyncpa [#allocation6], 1
    %7106 = vsyncpa [#allocation9], 1
    %7107 = vsyncpa [#allocation12], 1
    %7108 = vsyncpa [#allocation4], 1

</llo_original>
